<compile_context>
chip_gen: v6e
topology: v6e:2x2x1
jax: 0.10.0
libtpu: 0.0.40
codegen_flags: <defaults>
</compile_context>

<pallas_src>
import functools
import math

import jax
import jax.numpy as jnp
from jax.experimental import pallas as pl
from jax.experimental.pallas import tpu as pltpu


# --------------------------- fused embedding kernel -------------------------

def _embed_kernel(cols_ref, time_ref, pos_ref, tokw_ref, tempw_ref, o_ref):
    # cols: (1, L, 3*c_in)  time: (1, L, d_t)  pos: (1, L, D)
    tok = jnp.dot(cols_ref[0], tokw_ref[...], preferred_element_type=jnp.float32)
    tmp = jnp.dot(time_ref[0], tempw_ref[...], preferred_element_type=jnp.float32)
    o_ref[0] = tok + tmp + pos_ref[0]


def positional_embedding(L, d_model):
    pos = jnp.arange(L, dtype=jnp.float32)[:, None]
    div = jnp.exp(jnp.arange(0, d_model, 2, dtype=jnp.float32)
                  * (-math.log(10000.0) / d_model))
    pe = jnp.zeros((L, d_model), jnp.float32)
    pe = pe.at[:, 0::2].set(jnp.sin(pos * div))
    pe = pe.at[:, 1::2].set(jnp.cos(pos * div))
    return pe[None]                  # (1, L, d_model)


def data_embedding(x_dec, x_time_dec, tok_w, temp_w, d_model):
    B, L, c_in = x_dec.shape
    d_t = x_time_dec.shape[-1]
    # TokenEmbedding: Conv1d(c_in, d_model, k=3, circular pad, no bias) == im2col+matmul.
    # (To load a torch conv weight (d_model, c_in, 3): tok_w = w.permute(2,1,0).reshape(3*c_in, d_model))
    xp = jnp.concatenate([x_dec[:, -1:, :], x_dec, x_dec[:, :1, :]], axis=1)
    cols = jnp.concatenate([xp[:, 0:L], xp[:, 1:L + 1], xp[:, 2:L + 2]], axis=-1)
    pos = positional_embedding(L, d_model)
    return pl.pallas_call(
        _embed_kernel,
        grid=(B,),
        in_specs=[pl.BlockSpec((1, L, 3 * c_in), lambda b: (b, 0, 0)),
                  pl.BlockSpec((1, L, d_t), lambda b: (b, 0, 0)),
                  pl.BlockSpec((1, L, d_model), lambda b: (0, 0, 0)),
                  pl.BlockSpec((3 * c_in, d_model), lambda b: (0, 0)),
                  pl.BlockSpec((d_t, d_model), lambda b: (0, 0))],
        out_specs=pl.BlockSpec((1, L, d_model), lambda b: (b, 0, 0)),
        out_shape=jax.ShapeDtypeStruct((B, L, d_model), jnp.float32),
        compiler_params=pltpu.CompilerParams(dimension_semantics=("parallel",)),
    )(cols, x_time_dec, pos, tok_w, temp_w)


# ------------------------ fused encoder-layer kernel -------------------------

def _encoder_layer_kernel(x_ref, wqkv_ref, bqkv_ref, wo_ref, bo_ref,
                          ln1g_ref, ln1b_ref, w1_ref, b1_ref,
                          w2_ref, b2_ref, ln2g_ref, ln2b_ref, *refs,
                          n_heads, eps, has_mask, output_attn):
    # Unpack optional refs (inputs first, then outputs).
    idx = 0
    mask_ref = None
    if has_mask:
        mask_ref = refs[idx]; idx += 1
    o_ref = refs[idx]; idx += 1
    attn_ref = refs[idx] if output_attn else None

    x = x_ref[0]                                       # (L, D)
    L, D = x.shape
    dh = D // n_heads

    # Fused QKV projection (1/sqrt(dh) already folded into the Q slice of wqkv/bqkv).
    qkv = jnp.dot(x, wqkv_ref[...], preferred_element_type=jnp.float32) + bqkv_ref[...]
    q = qkv[:, :D]
    k = qkv[:, D:2 * D]
    v = qkv[:, 2 * D:]

    ctx_heads = []
    for h in range(n_heads):
        qh = q[:, h * dh:(h + 1) * dh]
        kh = k[:, h * dh:(h + 1) * dh]
        vh = v[:, h * dh:(h + 1) * dh]
        # Contract last axis of both (no materialized transpose of K).
        s = jax.lax.dot_general(qh, kh, (((1,), (1,)), ((), ())),
                                preferred_element_type=jnp.float32)    # (L, L)
        if has_mask:
            s = s + mask_ref[...]
        m = jnp.max(s, axis=-1, keepdims=True)
        p = jnp.exp(s - m)
        p = p * pl.reciprocal(jnp.sum(p, axis=-1, keepdims=True), approx=True)
        if output_attn:
            attn_ref[0, h] = p
        ctx_heads.append(jnp.dot(p, vh, preferred_element_type=jnp.float32))
    ctx = jnp.concatenate(ctx_heads, axis=-1)          # (L, D)

    attn_out = jnp.dot(ctx, wo_ref[...], preferred_element_type=jnp.float32) + bo_ref[...]

    # x = LN1(x + attn_out)   (residual add fused in-kernel)
    x1 = x + attn_out
    mu = jnp.mean(x1, axis=-1, keepdims=True)
    var = jnp.mean(jnp.square(x1 - mu), axis=-1, keepdims=True)
    y = (x1 - mu) * jax.lax.rsqrt(var + eps) * ln1g_ref[...] + ln1b_ref[...]

    # ReLU FFN (Conv1d kernel-size-1 layers == linear)
    hid = jnp.dot(y, w1_ref[...], preferred_element_type=jnp.float32) + b1_ref[...]
    hid = jnp.maximum(hid, 0.0)
    ff = jnp.dot(hid, w2_ref[...], preferred_element_type=jnp.float32) + b2_ref[...]

    # out = LN2(y + ff)
    z = y + ff
    mu2 = jnp.mean(z, axis=-1, keepdims=True)
    var2 = jnp.mean(jnp.square(z - mu2), axis=-1, keepdims=True)
    o_ref[0] = (z - mu2) * jax.lax.rsqrt(var2 + eps) * ln2g_ref[...] + ln2b_ref[...]


def encoder_layer(x, lp, n_heads, mask=None, output_attn=False, eps=1e-5):
    B, L, D = x.shape
    F = lp["w1"].shape[1]
    has_mask = mask is not None
    kernel = functools.partial(_encoder_layer_kernel, n_heads=n_heads, eps=eps,
                               has_mask=has_mask, output_attn=output_attn)

    in_specs = [
        pl.BlockSpec((1, L, D), lambda b: (b, 0, 0)),        # x
        pl.BlockSpec((D, 3 * D), lambda b: (0, 0)),          # wqkv
        pl.BlockSpec((1, 3 * D), lambda b: (0, 0)),          # bqkv
        pl.BlockSpec((D, D), lambda b: (0, 0)),              # wo
        pl.BlockSpec((1, D), lambda b: (0, 0)),              # bo
        pl.BlockSpec((1, D), lambda b: (0, 0)),              # ln1_g
        pl.BlockSpec((1, D), lambda b: (0, 0)),              # ln1_b
        pl.BlockSpec((D, F), lambda b: (0, 0)),              # w1
        pl.BlockSpec((1, F), lambda b: (0, 0)),              # b1
        pl.BlockSpec((F, D), lambda b: (0, 0)),              # w2
        pl.BlockSpec((1, D), lambda b: (0, 0)),              # b2
        pl.BlockSpec((1, D), lambda b: (0, 0)),              # ln2_g
        pl.BlockSpec((1, D), lambda b: (0, 0)),              # ln2_b
    ]
    args = [x, lp["wqkv"], lp["bqkv"], lp["wo"], lp["bo"],
            lp["ln1_g"], lp["ln1_b"], lp["w1"], lp["b1"],
            lp["w2"], lp["b2"], lp["ln2_g"], lp["ln2_b"]]
    if has_mask:
        in_specs.append(pl.BlockSpec((L, L), lambda b: (0, 0)))
        args.append(mask)

    out_specs = [pl.BlockSpec((1, L, D), lambda b: (b, 0, 0))]
    out_shape = [jax.ShapeDtypeStruct((B, L, D), jnp.float32)]
    if output_attn:
        out_specs.append(pl.BlockSpec((1, n_heads, L, L), lambda b: (b, 0, 0, 0)))
        out_shape.append(jax.ShapeDtypeStruct((B, n_heads, L, L), jnp.float32))

    result = pl.pallas_call(
        kernel,
        grid=(B,),
        in_specs=in_specs,
        out_specs=out_specs,
        out_shape=out_shape,
        compiler_params=pltpu.CompilerParams(dimension_semantics=("parallel",)),
    )(*args)

    if output_attn:
        return result[0], result[1]
    return result[0], None


# ----------------------- fused final norm + projection -----------------------

def _final_kernel(x_ref, g_ref, b_ref, w_ref, bo_ref, o_ref, *, eps):
    x = x_ref[0]
    mu = jnp.mean(x, axis=-1, keepdims=True)
    var = jnp.mean(jnp.square(x - mu), axis=-1, keepdims=True)
    y = (x - mu) * jax.lax.rsqrt(var + eps) * g_ref[...] + b_ref[...]
    o_ref[0] = jnp.dot(y, w_ref[...], preferred_element_type=jnp.float32) + bo_ref[...]


def final_norm_proj(x, g, b, w, bo, eps=1e-5):
    B, L, D = x.shape
    N = w.shape[1]
    return pl.pallas_call(
        functools.partial(_final_kernel, eps=eps),
        grid=(B,),
        in_specs=[pl.BlockSpec((1, L, D), lambda i: (i, 0, 0)),
                  pl.BlockSpec((1, D), lambda i: (0, 0)),
                  pl.BlockSpec((1, D), lambda i: (0, 0)),
                  pl.BlockSpec((D, N), lambda i: (0, 0)),
                  pl.BlockSpec((1, N), lambda i: (0, 0))],
        out_specs=pl.BlockSpec((1, L, N), lambda i: (i, 0, 0)),
        out_shape=jax.ShapeDtypeStruct((B, L, N), jnp.float32),
        compiler_params=pltpu.CompilerParams(dimension_semantics=("parallel",)),
    )(x, g, b, w, bo)


# ------------------------------ model forward --------------------------------

def decoder_only_forward(x_dec, x_time_dec, params, dec_self_mask=None,
                         *, n_heads, output_attn=False):
    d_model = params["dec_norm_g"].shape[-1]

    mask = None
    if dec_self_mask is not None:
        # TODO(synk): assumes additive-float mask / bool mask with True == "masked out".
        if dec_self_mask.dtype == jnp.bool_:
            mask = jnp.where(dec_self_mask, -1e9, 0.0).astype(jnp.float32)
        else:
            mask = dec_self_mask.astype(jnp.float32)

    dec_out = data_embedding(x_dec, x_time_dec, params["tok_w"], params["temp_w"], d_model)

    dec_self_weights = []
    for lp in params["layers"]:
        dec_out, attn_w = encoder_layer(dec_out, lp, n_heads,
                                        mask=mask, output_attn=output_attn)
        dec_self_weights.append(attn_w)

    out = final_norm_proj(dec_out, params["dec_norm_g"], params["dec_norm_b"],
                          params["out_w"], params["out_b"])
    return out, ((None, None), (dec_self_weights, None))


# ------------------------------- parameters ----------------------------------

def init_params(key, d_dec_in, d_dec_out, d_temporal, d_model, d_ff, n_layers):
    """Raw parameters matching the PyTorch module's layout (separate q/k/v)."""
    def nrm(k, shape, scale=0.02):
        return scale * jax.random.normal(k, shape, dtype=jnp.float32)

    keys = iter(jax.random.split(key, 8 * n_layers + 8))
    params = {
        "tok_w": nrm(next(keys), (3 * d_dec_in, d_model)),
        "temp_w": nrm(next(keys), (d_temporal, d_model)),
        "dec_norm_g": jnp.ones((d_model,), jnp.float32),
        "dec_norm_b": jnp.zeros((d_model,), jnp.float32),
        "out_w": nrm(next(keys), (d_model, d_dec_out)),
        "out_b": jnp.zeros((d_dec_out,), jnp.float32),
        "layers": [],
    }
    for _ in range(n_layers):
        lp = {
            "wq": nrm(next(keys), (d_model, d_model)), "bq": jnp.zeros((d_model,), jnp.float32),
            "wk": nrm(next(keys), (d_model, d_model)), "bk": jnp.zeros((d_model,), jnp.float32),
            "wv": nrm(next(keys), (d_model, d_model)), "bv": jnp.zeros((d_model,), jnp.float32),
            "wo": nrm(next(keys), (d_model, d_model)), "bo": jnp.zeros((d_model,), jnp.float32),
            "ln1_g": jnp.ones((d_model,), jnp.float32), "ln1_b": jnp.zeros((d_model,), jnp.float32),
            "w1": nrm(next(keys), (d_model, d_ff)), "b1": jnp.zeros((d_ff,), jnp.float32),
            "w2": nrm(next(keys), (d_ff, d_model)), "b2": jnp.zeros((d_model,), jnp.float32),
            "ln2_g": jnp.ones((d_model,), jnp.float32), "ln2_b": jnp.zeros((d_model,), jnp.float32),
        }
        params["layers"].append(lp)
    return params


def prepare_params(raw, n_heads):
    """One-time conversion to kernel-ready form: fused QKV (scale folded into Q),
    biases / LN params as (1, N) lane rows."""
    d_model = raw["dec_norm_g"].shape[0]
    scale = 1.0 / math.sqrt(d_model // n_heads)
    row = lambda v: v.reshape(1, -1)
    p = {
        "tok_w": raw["tok_w"],
        "temp_w": raw["temp_w"],
        "dec_norm_g": row(raw["dec_norm_g"]),
        "dec_norm_b": row(raw["dec_norm_b"]),
        "out_w": raw["out_w"],
        "out_b": row(raw["out_b"]),
        "layers": [],
    }
    for lp in raw["layers"]:
        p["layers"].append({
            "wqkv": jnp.concatenate([lp["wq"] * scale, lp["wk"], lp["wv"]], axis=1),
            "bqkv": row(jnp.concatenate([lp["bq"] * scale, lp["bk"], lp["bv"]])),
            "wo": lp["wo"], "bo": row(lp["bo"]),
            "ln1_g": row(lp["ln1_g"]), "ln1_b": row(lp["ln1_b"]),
            "w1": lp["w1"], "b1": row(lp["b1"]),
            "w2": lp["w2"], "b2": row(lp["b2"]),
            "ln2_g": row(lp["ln2_g"]), "ln2_b": row(lp["ln2_b"]),
        })
    return p


# ----------------------------------- main -------------------------------------

if __name__ == "__main__":
    B, L = 2, 8
    d_dec_in, d_dec_out = 4, 4
    d_temporal = 4          # freq='h' -> 4 time features
    d_model, n_heads, d_ff, n_layers = 32, 4, 64, 1

    key = jax.random.PRNGKey(0)
    k_x, k_t, k_p = jax.random.split(key, 3)
    x_dec = jax.random.normal(k_x, (B, L, d_dec_in), dtype=jnp.float32)
    x_time_dec = jax.random.normal(k_t, (B, L, d_temporal), dtype=jnp.float32)

    raw_params = init_params(k_p, d_dec_in, d_dec_out, d_temporal, d_model, d_ff, n_layers)
    params = prepare_params(raw_params, n_heads)

    fwd_attn = jax.jit(functools.partial(decoder_only_forward,
                                         n_heads=n_heads, output_attn=True))
    fwd_fast = jax.jit(functools.partial(decoder_only_forward,
                                         n_heads=n_heads, output_attn=False))

    out, (_, (dec_self_weights, _)) = fwd_attn(x_dec, x_time_dec, params, None)
    out_fast, (_, (w_fast, _)) = fwd_fast(x_dec, x_time_dec, params, None)

    jax.block_until_ready(out)
    jax.block_until_ready(out_fast)
    jax.block_until_ready(dec_self_weights[0])

    assert out.shape == (B, L, d_dec_out)
    assert dec_self_weights[0].shape == (B, n_heads, L, L)
    assert w_fast[0] is None
    assert bool(jnp.allclose(out, out_fast, atol=1e-5, rtol=1e-5))
    print("KERNEL_OK")
</pallas_src>

<mosaic_0001>
module attributes {stable_mosaic.version = 11 : i64} {
  func.func @_embed_kernel(%arg0: i32, %arg1: memref<1x8x12xf32, #tpu.memory_space<vmem>>, %arg2: memref<1x8x4xf32, #tpu.memory_space<vmem>>, %arg3: memref<1x8x32xf32, #tpu.memory_space<vmem>>, %arg4: memref<12x32xf32, #tpu.memory_space<vmem>>, %arg5: memref<4x32xf32, #tpu.memory_space<vmem>>, %arg6: memref<1x8x32xf32, #tpu.memory_space<vmem>>) attributes {dimension_semantics = [#tpu.dimension_semantics<parallel>], iteration_bounds = array<i64: 2>, scalar_prefetch = 0 : i64, scratch_operands = 0 : i64, tpu.core_type = #tpu.core_type<tc>, window_params = [{transform_indices = @transform_0, window_bounds = array<i64: 1, 8, 12>}, {transform_indices = @transform_1, window_bounds = array<i64: 1, 8, 4>}, {pipeline_mode = #tpu.pipeline_mode<synchronous>, transform_indices = @transform_2, window_bounds = array<i64: 1, 8, 32>}, {pipeline_mode = #tpu.pipeline_mode<synchronous>, transform_indices = @transform_3, window_bounds = array<i64: 12, 32>}, {pipeline_mode = #tpu.pipeline_mode<synchronous>, transform_indices = @transform_4, window_bounds = array<i64: 4, 32>}, {transform_indices = @transform_5, window_bounds = array<i64: 1, 8, 32>}]} {
    %c0 = arith.constant 0 : index
    %c0_0 = arith.constant 0 : index
    %c0_1 = arith.constant 0 : index
    %0 = vector.load %arg1[%c0, %c0_0, %c0_1] : memref<1x8x12xf32, #tpu.memory_space<vmem>>, vector<1x8x12xf32>
    %1 = vector.shape_cast %0 : vector<1x8x12xf32> to vector<8x12xf32>
    %c0_2 = arith.constant 0 : index
    %c0_3 = arith.constant 0 : index
    %2 = vector.load %arg4[%c0_2, %c0_3] : memref<12x32xf32, #tpu.memory_space<vmem>>, vector<12x32xf32>
    %cst = arith.constant dense<0.000000e+00> : vector<8x32xf32>
    %3 = tpu.matmul %1, %2, %cst {dimension_numbers = #tpu.dot_dimension_numbers<[1], [0], [0], [1], [0, 0, 1, 1], [], []>} : vector<8x12xf32>, vector<12x32xf32>, vector<8x32xf32> -> vector<8x32xf32>
    %c0_4 = arith.constant 0 : index
    %c0_5 = arith.constant 0 : index
    %c0_6 = arith.constant 0 : index
    %4 = vector.load %arg2[%c0_4, %c0_5, %c0_6] : memref<1x8x4xf32, #tpu.memory_space<vmem>>, vector<1x8x4xf32>
    %5 = vector.shape_cast %4 : vector<1x8x4xf32> to vector<8x4xf32>
    %c0_7 = arith.constant 0 : index
    %c0_8 = arith.constant 0 : index
    %6 = vector.load %arg5[%c0_7, %c0_8] : memref<4x32xf32, #tpu.memory_space<vmem>>, vector<4x32xf32>
    %cst_9 = arith.constant dense<0.000000e+00> : vector<8x32xf32>
    %7 = tpu.matmul %5, %6, %cst_9 {dimension_numbers = #tpu.dot_dimension_numbers<[1], [0], [0], [1], [0, 0, 1, 1], [], []>} : vector<8x4xf32>, vector<4x32xf32>, vector<8x32xf32> -> vector<8x32xf32>
    %8 = arith.addf %3, %7 : vector<8x32xf32>
    %c0_10 = arith.constant 0 : index
    %c0_11 = arith.constant 0 : index
    %c0_12 = arith.constant 0 : index
    %9 = vector.load %arg3[%c0_10, %c0_11, %c0_12] : memref<1x8x32xf32, #tpu.memory_space<vmem>>, vector<1x8x32xf32>
    %10 = vector.shape_cast %9 : vector<1x8x32xf32> to vector<8x32xf32>
    %11 = arith.addf %8, %10 : vector<8x32xf32>
    %c0_13 = arith.constant 0 : index
    %c0_14 = arith.constant 0 : index
    %c0_15 = arith.constant 0 : index
    %12 = vector.load %arg6[%c0_13, %c0_14, %c0_15] : memref<1x8x32xf32, #tpu.memory_space<vmem>>, vector<1x8x32xf32>
    %13 = vector.shape_cast %12 : vector<1x8x32xf32> to vector<8x32xf32>
    %14 = vector.shape_cast %11 : vector<8x32xf32> to vector<1x8x32xf32>
    tpu.vector_store %arg6[%c0_13, %c0_14, %c0_15], %14 {strides = array<i32>} : memref<1x8x32xf32, #tpu.memory_space<vmem>>, vector<1x8x32xf32>,
    return
  }
  func.func @transform_0(%arg0: i32) -> (i32, i32, i32) {
    %c0_i32 = arith.constant 0 : i32
    %c0_i32_0 = arith.constant 0 : i32
    %c0_i32_1 = arith.constant 0 : i32
    return %arg0, %c0_i32, %c0_i32_0 : i32, i32, i32
  }
  func.func @transform_1(%arg0: i32) -> (i32, i32, i32) {
    %c0_i32 = arith.constant 0 : i32
    %c0_i32_0 = arith.constant 0 : i32
    %c0_i32_1 = arith.constant 0 : i32
    return %arg0, %c0_i32, %c0_i32_0 : i32, i32, i32
  }
  func.func @transform_2(%arg0: i32) -> (i32, i32, i32) {
    %c0_i32 = arith.constant 0 : i32
    %c0_i32_0 = arith.constant 0 : i32
    %c0_i32_1 = arith.constant 0 : i32
    %c0_i32_2 = arith.constant 0 : i32
    return %c0_i32, %c0_i32_0, %c0_i32_1 : i32, i32, i32
  }
  func.func @transform_3(%arg0: i32) -> (i32, i32) {
    %c0_i32 = arith.constant 0 : i32
    %c0_i32_0 = arith.constant 0 : i32
    %c0_i32_1 = arith.constant 0 : i32
    return %c0_i32, %c0_i32_0 : i32, i32
  }
  func.func @transform_4(%arg0: i32) -> (i32, i32) {
    %c0_i32 = arith.constant 0 : i32
    %c0_i32_0 = arith.constant 0 : i32
    %c0_i32_1 = arith.constant 0 : i32
    return %c0_i32, %c0_i32_0 : i32, i32
  }
  func.func @transform_5(%arg0: i32) -> (i32, i32, i32) {
    %c0_i32 = arith.constant 0 : i32
    %c0_i32_0 = arith.constant 0 : i32
    %c0_i32_1 = arith.constant 0 : i32
    return %arg0, %c0_i32, %c0_i32_0 : i32, i32, i32
  }
}

module attributes {stable_mosaic.version = 11 : i64} {
  func.func @_encoder_layer_kernel(%arg0: i32, %arg1: memref<1x8x32xf32, #tpu.memory_space<vmem>>, %arg2: memref<32x96xf32, #tpu.memory_space<vmem>>, %arg3: memref<1x96xf32, #tpu.memory_space<vmem>>, %arg4: memref<32x32xf32, #tpu.memory_space<vmem>>, %arg5: memref<1x32xf32, #tpu.memory_space<vmem>>, %arg6: memref<1x32xf32, #tpu.memory_space<vmem>>, %arg7: memref<1x32xf32, #tpu.memory_space<vmem>>, %arg8: memref<32x64xf32, #tpu.memory_space<vmem>>, %arg9: memref<1x64xf32, #tpu.memory_space<vmem>>, %arg10: memref<64x32xf32, #tpu.memory_space<vmem>>, %arg11: memref<1x32xf32, #tpu.memory_space<vmem>>, %arg12: memref<1x32xf32, #tpu.memory_space<vmem>>, %arg13: memref<1x32xf32, #tpu.memory_space<vmem>>, %arg14: memref<1x8x32xf32, #tpu.memory_space<vmem>>, %arg15: memref<1x4x8x8xf32, #tpu.memory_space<vmem>>) attributes {dimension_semantics = [#tpu.dimension_semantics<parallel>], iteration_bounds = array<i64: 2>, scalar_prefetch = 0 : i64, scratch_operands = 0 : i64, tpu.core_type = #tpu.core_type<tc>, window_params = [{transform_indices = @transform_0, window_bounds = array<i64: 1, 8, 32>}, {pipeline_mode = #tpu.pipeline_mode<synchronous>, transform_indices = @transform_1, window_bounds = array<i64: 32, 96>}, {pipeline_mode = #tpu.pipeline_mode<synchronous>, transform_indices = @transform_2, window_bounds = array<i64: 1, 96>}, {pipeline_mode = #tpu.pipeline_mode<synchronous>, transform_indices = @transform_3, window_bounds = array<i64: 32, 32>}, {pipeline_mode = #tpu.pipeline_mode<synchronous>, transform_indices = @transform_4, window_bounds = array<i64: 1, 32>}, {pipeline_mode = #tpu.pipeline_mode<synchronous>, transform_indices = @transform_5, window_bounds = array<i64: 1, 32>}, {pipeline_mode = #tpu.pipeline_mode<synchronous>, transform_indices = @transform_6, window_bounds = array<i64: 1, 32>}, {pipeline_mode = #tpu.pipeline_mode<synchronous>, transform_indices = @transform_7, window_bounds = array<i64: 32, 64>}, {pipeline_mode = #tpu.pipeline_mode<synchronous>, transform_indices = @transform_8, window_bounds = array<i64: 1, 64>}, {pipeline_mode = #tpu.pipeline_mode<synchronous>, transform_indices = @transform_9, window_bounds = array<i64: 64, 32>}, {pipeline_mode = #tpu.pipeline_mode<synchronous>, transform_indices = @transform_10, window_bounds = array<i64: 1, 32>}, {pipeline_mode = #tpu.pipeline_mode<synchronous>, transform_indices = @transform_11, window_bounds = array<i64: 1, 32>}, {pipeline_mode = #tpu.pipeline_mode<synchronous>, transform_indices = @transform_12, window_bounds = array<i64: 1, 32>}, {transform_indices = @transform_13, window_bounds = array<i64: 1, 8, 32>}, {transform_indices = @transform_14, window_bounds = array<i64: 1, 4, 8, 8>}]} {
    %c0 = arith.constant 0 : index
    %c0_0 = arith.constant 0 : index
    %c0_1 = arith.constant 0 : index
    %0 = vector.load %arg1[%c0, %c0_0, %c0_1] : memref<1x8x32xf32, #tpu.memory_space<vmem>>, vector<1x8x32xf32>
    %1 = vector.shape_cast %0 : vector<1x8x32xf32> to vector<8x32xf32>
    %c0_2 = arith.constant 0 : index
    %c0_3 = arith.constant 0 : index
    %2 = vector.load %arg2[%c0_2, %c0_3] : memref<32x96xf32, #tpu.memory_space<vmem>>, vector<32x96xf32>
    %cst = arith.constant dense<0.000000e+00> : vector<8x96xf32>
    %3 = tpu.matmul %1, %2, %cst {dimension_numbers = #tpu.dot_dimension_numbers<[1], [0], [0], [1], [0, 0, 1, 1], [], []>} : vector<8x32xf32>, vector<32x96xf32>, vector<8x96xf32> -> vector<8x96xf32>
    %c0_4 = arith.constant 0 : index
    %c0_5 = arith.constant 0 : index
    %4 = vector.load %arg3[%c0_4, %c0_5] : memref<1x96xf32, #tpu.memory_space<vmem>>, vector<1x96xf32>
    %5 = vector.broadcast %4 : vector<1x96xf32> to vector<8x96xf32>
    %6 = arith.addf %3, %5 : vector<8x96xf32>
    %7 = vector.extract_strided_slice %6 {offsets = [0, 0], sizes = [8, 32], strides = [1, 1]} : vector<8x96xf32> to vector<8x32xf32>
    %8 = vector.extract_strided_slice %6 {offsets = [0, 32], sizes = [8, 32], strides = [1, 1]} : vector<8x96xf32> to vector<8x32xf32>
    %9 = vector.extract_strided_slice %6 {offsets = [0, 64], sizes = [8, 32], strides = [1, 1]} : vector<8x96xf32> to vector<8x32xf32>
    %10 = vector.extract_strided_slice %7 {offsets = [0, 0], sizes = [8, 8], strides = [1, 1]} : vector<8x32xf32> to vector<8x8xf32>
    %11 = vector.extract_strided_slice %8 {offsets = [0, 0], sizes = [8, 8], strides = [1, 1]} : vector<8x32xf32> to vector<8x8xf32>
    %12 = vector.extract_strided_slice %9 {offsets = [0, 0], sizes = [8, 8], strides = [1, 1]} : vector<8x32xf32> to vector<8x8xf32>
    %cst_6 = arith.constant dense<0.000000e+00> : vector<8x8xf32>
    %13 = tpu.matmul %10, %11, %cst_6 {dimension_numbers = #tpu.dot_dimension_numbers<[1], [1], [0], [0], [0, 0, 1, 0], [], []>} : vector<8x8xf32>, vector<8x8xf32>, vector<8x8xf32> -> vector<8x8xf32>
    %cst_7 = arith.constant dense<0xFF800000> : vector<8xf32>
    %14 = vector.multi_reduction <maximumf>, %13, %cst_7 [1] : vector<8x8xf32> to vector<8xf32>
    %15 = vector.shape_cast %14 : vector<8xf32> to vector<8x1xf32>
    %16 = vector.broadcast %15 : vector<8x1xf32> to vector<8x8xf32>
    %17 = arith.subf %13, %16 : vector<8x8xf32>
    %18 = math.exp %17 : vector<8x8xf32>
    %cst_8 = arith.constant dense<0.000000e+00> : vector<8xf32>
    %19 = vector.multi_reduction <add>, %18, %cst_8 [1] : vector<8x8xf32> to vector<8xf32>
    %20 = vector.shape_cast %19 : vector<8xf32> to vector<8x1xf32>
    %21 = tpu.reciprocal %20 {approx = true} : vector<8x1xf32> -> vector<8x1xf32>
    %22 = vector.broadcast %21 : vector<8x1xf32> to vector<8x8xf32>
    %23 = arith.mulf %18, %22 : vector<8x8xf32>
    %c0_9 = arith.constant 0 : index
    %c0_10 = arith.constant 0 : index
    %c0_11 = arith.constant 0 : index
    %c0_12 = arith.constant 0 : index
    %24 = vector.load %arg15[%c0_9, %c0_10, %c0_11, %c0_12] : memref<1x4x8x8xf32, #tpu.memory_space<vmem>>, vector<1x1x8x8xf32>
    %25 = vector.shape_cast %24 : vector<1x1x8x8xf32> to vector<8x8xf32>
    %26 = vector.shape_cast %23 : vector<8x8xf32> to vector<1x1x8x8xf32>
    tpu.vector_store %arg15[%c0_9, %c0_10, %c0_11, %c0_12], %26 {strides = array<i32>} : memref<1x4x8x8xf32, #tpu.memory_space<vmem>>, vector<1x1x8x8xf32>,
    %cst_13 = arith.constant dense<0.000000e+00> : vector<8x8xf32>
    %27 = tpu.matmul %23, %12, %cst_13 {dimension_numbers = #tpu.dot_dimension_numbers<[1], [0], [0], [1], [0, 0, 1, 1], [], []>} : vector<8x8xf32>, vector<8x8xf32>, vector<8x8xf32> -> vector<8x8xf32>
    %28 = vector.extract_strided_slice %7 {offsets = [0, 8], sizes = [8, 8], strides = [1, 1]} : vector<8x32xf32> to vector<8x8xf32>
    %29 = vector.extract_strided_slice %8 {offsets = [0, 8], sizes = [8, 8], strides = [1, 1]} : vector<8x32xf32> to vector<8x8xf32>
    %30 = vector.extract_strided_slice %9 {offsets = [0, 8], sizes = [8, 8], strides = [1, 1]} : vector<8x32xf32> to vector<8x8xf32>
    %cst_14 = arith.constant dense<0.000000e+00> : vector<8x8xf32>
    %31 = tpu.matmul %28, %29, %cst_14 {dimension_numbers = #tpu.dot_dimension_numbers<[1], [1], [0], [0], [0, 0, 1, 0], [], []>} : vector<8x8xf32>, vector<8x8xf32>, vector<8x8xf32> -> vector<8x8xf32>
    %cst_15 = arith.constant dense<0xFF800000> : vector<8xf32>
    %32 = vector.multi_reduction <maximumf>, %31, %cst_15 [1] : vector<8x8xf32> to vector<8xf32>
    %33 = vector.shape_cast %32 : vector<8xf32> to vector<8x1xf32>
    %34 = vector.broadcast %33 : vector<8x1xf32> to vector<8x8xf32>
    %35 = arith.subf %31, %34 : vector<8x8xf32>
    %36 = math.exp %35 : vector<8x8xf32>
    %cst_16 = arith.constant dense<0.000000e+00> : vector<8xf32>
    %37 = vector.multi_reduction <add>, %36, %cst_16 [1] : vector<8x8xf32> to vector<8xf32>
    %38 = vector.shape_cast %37 : vector<8xf32> to vector<8x1xf32>
    %39 = tpu.reciprocal %38 {approx = true} : vector<8x1xf32> -> vector<8x1xf32>
    %40 = vector.broadcast %39 : vector<8x1xf32> to vector<8x8xf32>
    %41 = arith.mulf %36, %40 : vector<8x8xf32>
    %c0_17 = arith.constant 0 : index
    %c1 = arith.constant 1 : index
    %c0_18 = arith.constant 0 : index
    %c0_19 = arith.constant 0 : index
    %42 = vector.load %arg15[%c0_17, %c1, %c0_18, %c0_19] : memref<1x4x8x8xf32, #tpu.memory_space<vmem>>, vector<1x1x8x8xf32>
    %43 = vector.shape_cast %42 : vector<1x1x8x8xf32> to vector<8x8xf32>
    %44 = vector.shape_cast %41 : vector<8x8xf32> to vector<1x1x8x8xf32>
    tpu.vector_store %arg15[%c0_17, %c1, %c0_18, %c0_19], %44 {strides = array<i32>} : memref<1x4x8x8xf32, #tpu.memory_space<vmem>>, vector<1x1x8x8xf32>,
    %cst_20 = arith.constant dense<0.000000e+00> : vector<8x8xf32>
    %45 = tpu.matmul %41, %30, %cst_20 {dimension_numbers = #tpu.dot_dimension_numbers<[1], [0], [0], [1], [0, 0, 1, 1], [], []>} : vector<8x8xf32>, vector<8x8xf32>, vector<8x8xf32> -> vector<8x8xf32>
    %46 = vector.extract_strided_slice %7 {offsets = [0, 16], sizes = [8, 8], strides = [1, 1]} : vector<8x32xf32> to vector<8x8xf32>
    %47 = vector.extract_strided_slice %8 {offsets = [0, 16], sizes = [8, 8], strides = [1, 1]} : vector<8x32xf32> to vector<8x8xf32>
    %48 = vector.extract_strided_slice %9 {offsets = [0, 16], sizes = [8, 8], strides = [1, 1]} : vector<8x32xf32> to vector<8x8xf32>
    %cst_21 = arith.constant dense<0.000000e+00> : vector<8x8xf32>
    %49 = tpu.matmul %46, %47, %cst_21 {dimension_numbers = #tpu.dot_dimension_numbers<[1], [1], [0], [0], [0, 0, 1, 0], [], []>} : vector<8x8xf32>, vector<8x8xf32>, vector<8x8xf32> -> vector<8x8xf32>
    %cst_22 = arith.constant dense<0xFF800000> : vector<8xf32>
    %50 = vector.multi_reduction <maximumf>, %49, %cst_22 [1] : vector<8x8xf32> to vector<8xf32>
    %51 = vector.shape_cast %50 : vector<8xf32> to vector<8x1xf32>
    %52 = vector.broadcast %51 : vector<8x1xf32> to vector<8x8xf32>
    %53 = arith.subf %49, %52 : vector<8x8xf32>
    %54 = math.exp %53 : vector<8x8xf32>
    %cst_23 = arith.constant dense<0.000000e+00> : vector<8xf32>
    %55 = vector.multi_reduction <add>, %54, %cst_23 [1] : vector<8x8xf32> to vector<8xf32>
    %56 = vector.shape_cast %55 : vector<8xf32> to vector<8x1xf32>
    %57 = tpu.reciprocal %56 {approx = true} : vector<8x1xf32> -> vector<8x1xf32>
    %58 = vector.broadcast %57 : vector<8x1xf32> to vector<8x8xf32>
    %59 = arith.mulf %54, %58 : vector<8x8xf32>
    %c0_24 = arith.constant 0 : index
    %c2 = arith.constant 2 : index
    %c0_25 = arith.constant 0 : index
    %c0_26 = arith.constant 0 : index
    %60 = vector.load %arg15[%c0_24, %c2, %c0_25, %c0_26] : memref<1x4x8x8xf32, #tpu.memory_space<vmem>>, vector<1x1x8x8xf32>
    %61 = vector.shape_cast %60 : vector<1x1x8x8xf32> to vector<8x8xf32>
    %62 = vector.shape_cast %59 : vector<8x8xf32> to vector<1x1x8x8xf32>
    tpu.vector_store %arg15[%c0_24, %c2, %c0_25, %c0_26], %62 {strides = array<i32>} : memref<1x4x8x8xf32, #tpu.memory_space<vmem>>, vector<1x1x8x8xf32>,
    %cst_27 = arith.constant dense<0.000000e+00> : vector<8x8xf32>
    %63 = tpu.matmul %59, %48, %cst_27 {dimension_numbers = #tpu.dot_dimension_numbers<[1], [0], [0], [1], [0, 0, 1, 1], [], []>} : vector<8x8xf32>, vector<8x8xf32>, vector<8x8xf32> -> vector<8x8xf32>
    %64 = vector.extract_strided_slice %7 {offsets = [0, 24], sizes = [8, 8], strides = [1, 1]} : vector<8x32xf32> to vector<8x8xf32>
    %65 = vector.extract_strided_slice %8 {offsets = [0, 24], sizes = [8, 8], strides = [1, 1]} : vector<8x32xf32> to vector<8x8xf32>
    %66 = vector.extract_strided_slice %9 {offsets = [0, 24], sizes = [8, 8], strides = [1, 1]} : vector<8x32xf32> to vector<8x8xf32>
    %cst_28 = arith.constant dense<0.000000e+00> : vector<8x8xf32>
    %67 = tpu.matmul %64, %65, %cst_28 {dimension_numbers = #tpu.dot_dimension_numbers<[1], [1], [0], [0], [0, 0, 1, 0], [], []>} : vector<8x8xf32>, vector<8x8xf32>, vector<8x8xf32> -> vector<8x8xf32>
    %cst_29 = arith.constant dense<0xFF800000> : vector<8xf32>
    %68 = vector.multi_reduction <maximumf>, %67, %cst_29 [1] : vector<8x8xf32> to vector<8xf32>
    %69 = vector.shape_cast %68 : vector<8xf32> to vector<8x1xf32>
    %70 = vector.broadcast %69 : vector<8x1xf32> to vector<8x8xf32>
    %71 = arith.subf %67, %70 : vector<8x8xf32>
    %72 = math.exp %71 : vector<8x8xf32>
    %cst_30 = arith.constant dense<0.000000e+00> : vector<8xf32>
    %73 = vector.multi_reduction <add>, %72, %cst_30 [1] : vector<8x8xf32> to vector<8xf32>
    %74 = vector.shape_cast %73 : vector<8xf32> to vector<8x1xf32>
    %75 = tpu.reciprocal %74 {approx = true} : vector<8x1xf32> -> vector<8x1xf32>
    %76 = vector.broadcast %75 : vector<8x1xf32> to vector<8x8xf32>
    %77 = arith.mulf %72, %76 : vector<8x8xf32>
    %c0_31 = arith.constant 0 : index
    %c3 = arith.constant 3 : index
    %c0_32 = arith.constant 0 : index
    %c0_33 = arith.constant 0 : index
    %78 = vector.load %arg15[%c0_31, %c3, %c0_32, %c0_33] : memref<1x4x8x8xf32, #tpu.memory_space<vmem>>, vector<1x1x8x8xf32>
    %79 = vector.shape_cast %78 : vector<1x1x8x8xf32> to vector<8x8xf32>
    %80 = vector.shape_cast %77 : vector<8x8xf32> to vector<1x1x8x8xf32>
    tpu.vector_store %arg15[%c0_31, %c3, %c0_32, %c0_33], %80 {strides = array<i32>} : memref<1x4x8x8xf32, #tpu.memory_space<vmem>>, vector<1x1x8x8xf32>,
    %cst_34 = arith.constant dense<0.000000e+00> : vector<8x8xf32>
    %81 = tpu.matmul %77, %66, %cst_34 {dimension_numbers = #tpu.dot_dimension_numbers<[1], [0], [0], [1], [0, 0, 1, 1], [], []>} : vector<8x8xf32>, vector<8x8xf32>, vector<8x8xf32> -> vector<8x8xf32>
    %82 = tpu.concatenate %27, %45, %63, %81 in 1 : vector<8x8xf32>, vector<8x8xf32>, vector<8x8xf32>, vector<8x8xf32> -> vector<8x32xf32>
    %c0_35 = arith.constant 0 : index
    %c0_36 = arith.constant 0 : index
    %83 = vector.load %arg4[%c0_35, %c0_36] : memref<32x32xf32, #tpu.memory_space<vmem>>, vector<32x32xf32>
    %cst_37 = arith.constant dense<0.000000e+00> : vector<8x32xf32>
    %84 = tpu.matmul %82, %83, %cst_37 {dimension_numbers = #tpu.dot_dimension_numbers<[1], [0], [0], [1], [0, 0, 1, 1], [], []>} : vector<8x32xf32>, vector<32x32xf32>, vector<8x32xf32> -> vector<8x32xf32>
    %c0_38 = arith.constant 0 : index
    %c0_39 = arith.constant 0 : index
    %85 = vector.load %arg5[%c0_38, %c0_39] : memref<1x32xf32, #tpu.memory_space<vmem>>, vector<1x32xf32>
    %86 = vector.broadcast %85 : vector<1x32xf32> to vector<8x32xf32>
    %87 = arith.addf %84, %86 : vector<8x32xf32>
    %88 = arith.addf %1, %87 : vector<8x32xf32>
    %cst_40 = arith.constant dense<0.000000e+00> : vector<8xf32>
    %89 = vector.multi_reduction <add>, %88, %cst_40 [1] : vector<8x32xf32> to vector<8xf32>
    %90 = vector.shape_cast %89 : vector<8xf32> to vector<8x1xf32>
    %cst_41 = arith.constant 3.200000e+01 : f32
    %91 = vector.broadcast %cst_41 : f32 to vector<8x1xf32>
    %92 = arith.divf %90, %91 : vector<8x1xf32>
    %93 = vector.broadcast %92 : vector<8x1xf32> to vector<8x32xf32>
    %94 = arith.subf %88, %93 : vector<8x32xf32>
    %95 = arith.mulf %94, %94 : vector<8x32xf32>
    %cst_42 = arith.constant dense<0.000000e+00> : vector<8xf32>
    %96 = vector.multi_reduction <add>, %95, %cst_42 [1] : vector<8x32xf32> to vector<8xf32>
    %97 = vector.shape_cast %96 : vector<8xf32> to vector<8x1xf32>
    %cst_43 = arith.constant 3.200000e+01 : f32
    %98 = vector.broadcast %cst_43 : f32 to vector<8x1xf32>
    %99 = arith.divf %97, %98 : vector<8x1xf32>
    %100 = vector.broadcast %92 : vector<8x1xf32> to vector<8x32xf32>
    %101 = arith.subf %88, %100 : vector<8x32xf32>
    %cst_44 = arith.constant 9.99999974E-6 : f32
    %102 = vector.broadcast %cst_44 : f32 to vector<8x1xf32>
    %103 = arith.addf %99, %102 : vector<8x1xf32>
    %104 = math.rsqrt %103 : vector<8x1xf32>
    %105 = vector.broadcast %104 : vector<8x1xf32> to vector<8x32xf32>
    %106 = arith.mulf %101, %105 : vector<8x32xf32>
    %c0_45 = arith.constant 0 : index
    %c0_46 = arith.constant 0 : index
    %107 = vector.load %arg6[%c0_45, %c0_46] : memref<1x32xf32, #tpu.memory_space<vmem>>, vector<1x32xf32>
    %108 = vector.broadcast %107 : vector<1x32xf32> to vector<8x32xf32>
    %109 = arith.mulf %106, %108 : vector<8x32xf32>
    %c0_47 = arith.constant 0 : index
    %c0_48 = arith.constant 0 : index
    %110 = vector.load %arg7[%c0_47, %c0_48] : memref<1x32xf32, #tpu.memory_space<vmem>>, vector<1x32xf32>
    %111 = vector.broadcast %110 : vector<1x32xf32> to vector<8x32xf32>
    %112 = arith.addf %109, %111 : vector<8x32xf32>
    %c0_49 = arith.constant 0 : index
    %c0_50 = arith.constant 0 : index
    %113 = vector.load %arg8[%c0_49, %c0_50] : memref<32x64xf32, #tpu.memory_space<vmem>>, vector<32x64xf32>
    %cst_51 = arith.constant dense<0.000000e+00> : vector<8x64xf32>
    %114 = tpu.matmul %112, %113, %cst_51 {dimension_numbers = #tpu.dot_dimension_numbers<[1], [0], [0], [1], [0, 0, 1, 1], [], []>} : vector<8x32xf32>, vector<32x64xf32>, vector<8x64xf32> -> vector<8x64xf32>
    %c0_52 = arith.constant 0 : index
    %c0_53 = arith.constant 0 : index
    %115 = vector.load %arg9[%c0_52, %c0_53] : memref<1x64xf32, #tpu.memory_space<vmem>>, vector<1x64xf32>
    %116 = vector.broadcast %115 : vector<1x64xf32> to vector<8x64xf32>
    %117 = arith.addf %114, %116 : vector<8x64xf32>
    %cst_54 = arith.constant 0.000000e+00 : f32
    %118 = vector.broadcast %cst_54 : f32 to vector<8x64xf32>
    %119 = arith.maximumf %117, %118 : vector<8x64xf32>
    %c0_55 = arith.constant 0 : index
    %c0_56 = arith.constant 0 : index
    %120 = vector.load %arg10[%c0_55, %c0_56] : memref<64x32xf32, #tpu.memory_space<vmem>>, vector<64x32xf32>
    %cst_57 = arith.constant dense<0.000000e+00> : vector<8x32xf32>
    %121 = tpu.matmul %119, %120, %cst_57 {dimension_numbers = #tpu.dot_dimension_numbers<[1], [0], [0], [1], [0, 0, 1, 1], [], []>} : vector<8x64xf32>, vector<64x32xf32>, vector<8x32xf32> -> vector<8x32xf32>
    %c0_58 = arith.constant 0 : index
    %c0_59 = arith.constant 0 : index
    %122 = vector.load %arg11[%c0_58, %c0_59] : memref<1x32xf32, #tpu.memory_space<vmem>>, vector<1x32xf32>
    %123 = vector.broadcast %122 : vector<1x32xf32> to vector<8x32xf32>
    %124 = arith.addf %121, %123 : vector<8x32xf32>
    %125 = arith.addf %112, %124 : vector<8x32xf32>
    %cst_60 = arith.constant dense<0.000000e+00> : vector<8xf32>
    %126 = vector.multi_reduction <add>, %125, %cst_60 [1] : vector<8x32xf32> to vector<8xf32>
    %127 = vector.shape_cast %126 : vector<8xf32> to vector<8x1xf32>
    %cst_61 = arith.constant 3.200000e+01 : f32
    %128 = vector.broadcast %cst_61 : f32 to vector<8x1xf32>
    %129 = arith.divf %127, %128 : vector<8x1xf32>
    %130 = vector.broadcast %129 : vector<8x1xf32> to vector<8x32xf32>
    %131 = arith.subf %125, %130 : vector<8x32xf32>
    %132 = arith.mulf %131, %131 : vector<8x32xf32>
    %cst_62 = arith.constant dense<0.000000e+00> : vector<8xf32>
    %133 = vector.multi_reduction <add>, %132, %cst_62 [1] : vector<8x32xf32> to vector<8xf32>
    %134 = vector.shape_cast %133 : vector<8xf32> to vector<8x1xf32>
    %cst_63 = arith.constant 3.200000e+01 : f32
    %135 = vector.broadcast %cst_63 : f32 to vector<8x1xf32>
    %136 = arith.divf %134, %135 : vector<8x1xf32>
    %137 = vector.broadcast %129 : vector<8x1xf32> to vector<8x32xf32>
    %138 = arith.subf %125, %137 : vector<8x32xf32>
    %cst_64 = arith.constant 9.99999974E-6 : f32
    %139 = vector.broadcast %cst_64 : f32 to vector<8x1xf32>
    %140 = arith.addf %136, %139 : vector<8x1xf32>
    %141 = math.rsqrt %140 : vector<8x1xf32>
    %142 = vector.broadcast %141 : vector<8x1xf32> to vector<8x32xf32>
    %143 = arith.mulf %138, %142 : vector<8x32xf32>
    %c0_65 = arith.constant 0 : index
    %c0_66 = arith.constant 0 : index
    %144 = vector.load %arg12[%c0_65, %c0_66] : memref<1x32xf32, #tpu.memory_space<vmem>>, vector<1x32xf32>
    %145 = vector.broadcast %144 : vector<1x32xf32> to vector<8x32xf32>
    %146 = arith.mulf %143, %145 : vector<8x32xf32>
    %c0_67 = arith.constant 0 : index
    %c0_68 = arith.constant 0 : index
    %147 = vector.load %arg13[%c0_67, %c0_68] : memref<1x32xf32, #tpu.memory_space<vmem>>, vector<1x32xf32>
    %148 = vector.broadcast %147 : vector<1x32xf32> to vector<8x32xf32>
    %149 = arith.addf %146, %148 : vector<8x32xf32>
    %c0_69 = arith.constant 0 : index
    %c0_70 = arith.constant 0 : index
    %c0_71 = arith.constant 0 : index
    %150 = vector.load %arg14[%c0_69, %c0_70, %c0_71] : memref<1x8x32xf32, #tpu.memory_space<vmem>>, vector<1x8x32xf32>
    %151 = vector.shape_cast %150 : vector<1x8x32xf32> to vector<8x32xf32>
    %152 = vector.shape_cast %149 : vector<8x32xf32> to vector<1x8x32xf32>
    tpu.vector_store %arg14[%c0_69, %c0_70, %c0_71], %152 {strides = array<i32>} : memref<1x8x32xf32, #tpu.memory_space<vmem>>, vector<1x8x32xf32>,
    return
  }
  func.func @transform_0(%arg0: i32) -> (i32, i32, i32) {
    %c0_i32 = arith.constant 0 : i32
    %c0_i32_0 = arith.constant 0 : i32
    %c0_i32_1 = arith.constant 0 : i32
    return %arg0, %c0_i32, %c0_i32_0 : i32, i32, i32
  }
  func.func @transform_1(%arg0: i32) -> (i32, i32) {
    %c0_i32 = arith.constant 0 : i32
    %c0_i32_0 = arith.constant 0 : i32
    %c0_i32_1 = arith.constant 0 : i32
    return %c0_i32, %c0_i32_0 : i32, i32
  }
  func.func @transform_2(%arg0: i32) -> (i32, i32) {
    %c0_i32 = arith.constant 0 : i32
    %c0_i32_0 = arith.constant 0 : i32
    %c0_i32_1 = arith.constant 0 : i32
    return %c0_i32, %c0_i32_0 : i32, i32
  }
  func.func @transform_3(%arg0: i32) -> (i32, i32) {
    %c0_i32 = arith.constant 0 : i32
    %c0_i32_0 = arith.constant 0 : i32
    %c0_i32_1 = arith.constant 0 : i32
    return %c0_i32, %c0_i32_0 : i32, i32
  }
  func.func @transform_4(%arg0: i32) -> (i32, i32) {
    %c0_i32 = arith.constant 0 : i32
    %c0_i32_0 = arith.constant 0 : i32
    %c0_i32_1 = arith.constant 0 : i32
    return %c0_i32, %c0_i32_0 : i32, i32
  }
  func.func @transform_5(%arg0: i32) -> (i32, i32) {
    %c0_i32 = arith.constant 0 : i32
    %c0_i32_0 = arith.constant 0 : i32
    %c0_i32_1 = arith.constant 0 : i32
    return %c0_i32, %c0_i32_0 : i32, i32
  }
  func.func @transform_6(%arg0: i32) -> (i32, i32) {
    %c0_i32 = arith.constant 0 : i32
    %c0_i32_0 = arith.constant 0 : i32
    %c0_i32_1 = arith.constant 0 : i32
    return %c0_i32, %c0_i32_0 : i32, i32
  }
  func.func @transform_7(%arg0: i32) -> (i32, i32) {
    %c0_i32 = arith.constant 0 : i32
    %c0_i32_0 = arith.constant 0 : i32
    %c0_i32_1 = arith.constant 0 : i32
    return %c0_i32, %c0_i32_0 : i32, i32
  }
  func.func @transform_8(%arg0: i32) -> (i32, i32) {
    %c0_i32 = arith.constant 0 : i32
    %c0_i32_0 = arith.constant 0 : i32
    %c0_i32_1 = arith.constant 0 : i32
    return %c0_i32, %c0_i32_0 : i32, i32
  }
  func.func @transform_9(%arg0: i32) -> (i32, i32) {
    %c0_i32 = arith.constant 0 : i32
    %c0_i32_0 = arith.constant 0 : i32
    %c0_i32_1 = arith.constant 0 : i32
    return %c0_i32, %c0_i32_0 : i32, i32
  }
  func.func @transform_10(%arg0: i32) -> (i32, i32) {
    %c0_i32 = arith.constant 0 : i32
    %c0_i32_0 = arith.constant 0 : i32
    %c0_i32_1 = arith.constant 0 : i32
    return %c0_i32, %c0_i32_0 : i32, i32
  }
  func.func @transform_11(%arg0: i32) -> (i32, i32) {
    %c0_i32 = arith.constant 0 : i32
    %c0_i32_0 = arith.constant 0 : i32
    %c0_i32_1 = arith.constant 0 : i32
    return %c0_i32, %c0_i32_0 : i32, i32
  }
  func.func @transform_12(%arg0: i32) -> (i32, i32) {
    %c0_i32 = arith.constant 0 : i32
    %c0_i32_0 = arith.constant 0 : i32
    %c0_i32_1 = arith.constant 0 : i32
    return %c0_i32, %c0_i32_0 : i32, i32
  }
  func.func @transform_13(%arg0: i32) -> (i32, i32, i32) {
    %c0_i32 = arith.constant 0 : i32
    %c0_i32_0 = arith.constant 0 : i32
    %c0_i32_1 = arith.constant 0 : i32
    return %arg0, %c0_i32, %c0_i32_0 : i32, i32, i32
  }
  func.func @transform_14(%arg0: i32) -> (i32, i32, i32, i32) {
    %c0_i32 = arith.constant 0 : i32
    %c0_i32_0 = arith.constant 0 : i32
    %c0_i32_1 = arith.constant 0 : i32
    %c0_i32_2 = arith.constant 0 : i32
    return %arg0, %c0_i32, %c0_i32_0, %c0_i32_1 : i32, i32, i32, i32
  }
}

module attributes {stable_mosaic.version = 11 : i64} {
  func.func @_final_kernel(%arg0: i32, %arg1: memref<1x8x32xf32, #tpu.memory_space<vmem>>, %arg2: memref<1x32xf32, #tpu.memory_space<vmem>>, %arg3: memref<1x32xf32, #tpu.memory_space<vmem>>, %arg4: memref<32x4xf32, #tpu.memory_space<vmem>>, %arg5: memref<1x4xf32, #tpu.memory_space<vmem>>, %arg6: memref<1x8x4xf32, #tpu.memory_space<vmem>>) attributes {dimension_semantics = [#tpu.dimension_semantics<parallel>], iteration_bounds = array<i64: 2>, scalar_prefetch = 0 : i64, scratch_operands = 0 : i64, tpu.core_type = #tpu.core_type<tc>, window_params = [{transform_indices = @transform_0, window_bounds = array<i64: 1, 8, 32>}, {pipeline_mode = #tpu.pipeline_mode<synchronous>, transform_indices = @transform_1, window_bounds = array<i64: 1, 32>}, {pipeline_mode = #tpu.pipeline_mode<synchronous>, transform_indices = @transform_2, window_bounds = array<i64: 1, 32>}, {pipeline_mode = #tpu.pipeline_mode<synchronous>, transform_indices = @transform_3, window_bounds = array<i64: 32, 4>}, {pipeline_mode = #tpu.pipeline_mode<synchronous>, transform_indices = @transform_4, window_bounds = array<i64: 1, 4>}, {transform_indices = @transform_5, window_bounds = array<i64: 1, 8, 4>}]} {
    %c0 = arith.constant 0 : index
    %c0_0 = arith.constant 0 : index
    %c0_1 = arith.constant 0 : index
    %0 = vector.load %arg1[%c0, %c0_0, %c0_1] : memref<1x8x32xf32, #tpu.memory_space<vmem>>, vector<1x8x32xf32>
    %1 = vector.shape_cast %0 : vector<1x8x32xf32> to vector<8x32xf32>
    %cst = arith.constant dense<0.000000e+00> : vector<8xf32>
    %2 = vector.multi_reduction <add>, %1, %cst [1] : vector<8x32xf32> to vector<8xf32>
    %3 = vector.shape_cast %2 : vector<8xf32> to vector<8x1xf32>
    %cst_2 = arith.constant 3.200000e+01 : f32
    %4 = vector.broadcast %cst_2 : f32 to vector<8x1xf32>
    %5 = arith.divf %3, %4 : vector<8x1xf32>
    %6 = vector.broadcast %5 : vector<8x1xf32> to vector<8x32xf32>
    %7 = arith.subf %1, %6 : vector<8x32xf32>
    %8 = arith.mulf %7, %7 : vector<8x32xf32>
    %cst_3 = arith.constant dense<0.000000e+00> : vector<8xf32>
    %9 = vector.multi_reduction <add>, %8, %cst_3 [1] : vector<8x32xf32> to vector<8xf32>
    %10 = vector.shape_cast %9 : vector<8xf32> to vector<8x1xf32>
    %cst_4 = arith.constant 3.200000e+01 : f32
    %11 = vector.broadcast %cst_4 : f32 to vector<8x1xf32>
    %12 = arith.divf %10, %11 : vector<8x1xf32>
    %13 = vector.broadcast %5 : vector<8x1xf32> to vector<8x32xf32>
    %14 = arith.subf %1, %13 : vector<8x32xf32>
    %cst_5 = arith.constant 9.99999974E-6 : f32
    %15 = vector.broadcast %cst_5 : f32 to vector<8x1xf32>
    %16 = arith.addf %12, %15 : vector<8x1xf32>
    %17 = math.rsqrt %16 : vector<8x1xf32>
    %18 = vector.broadcast %17 : vector<8x1xf32> to vector<8x32xf32>
    %19 = arith.mulf %14, %18 : vector<8x32xf32>
    %c0_6 = arith.constant 0 : index
    %c0_7 = arith.constant 0 : index
    %20 = vector.load %arg2[%c0_6, %c0_7] : memref<1x32xf32, #tpu.memory_space<vmem>>, vector<1x32xf32>
    %21 = vector.broadcast %20 : vector<1x32xf32> to vector<8x32xf32>
    %22 = arith.mulf %19, %21 : vector<8x32xf32>
    %c0_8 = arith.constant 0 : index
    %c0_9 = arith.constant 0 : index
    %23 = vector.load %arg3[%c0_8, %c0_9] : memref<1x32xf32, #tpu.memory_space<vmem>>, vector<1x32xf32>
    %24 = vector.broadcast %23 : vector<1x32xf32> to vector<8x32xf32>
    %25 = arith.addf %22, %24 : vector<8x32xf32>
    %c0_10 = arith.constant 0 : index
    %c0_11 = arith.constant 0 : index
    %26 = vector.load %arg4[%c0_10, %c0_11] : memref<32x4xf32, #tpu.memory_space<vmem>>, vector<32x4xf32>
    %cst_12 = arith.constant dense<0.000000e+00> : vector<8x4xf32>
    %27 = tpu.matmul %25, %26, %cst_12 {dimension_numbers = #tpu.dot_dimension_numbers<[1], [0], [0], [1], [0, 0, 1, 1], [], []>} : vector<8x32xf32>, vector<32x4xf32>, vector<8x4xf32> -> vector<8x4xf32>
    %c0_13 = arith.constant 0 : index
    %c0_14 = arith.constant 0 : index
    %28 = vector.load %arg5[%c0_13, %c0_14] : memref<1x4xf32, #tpu.memory_space<vmem>>, vector<1x4xf32>
    %29 = vector.broadcast %28 : vector<1x4xf32> to vector<8x4xf32>
    %30 = arith.addf %27, %29 : vector<8x4xf32>
    %c0_15 = arith.constant 0 : index
    %c0_16 = arith.constant 0 : index
    %c0_17 = arith.constant 0 : index
    %31 = vector.load %arg6[%c0_15, %c0_16, %c0_17] : memref<1x8x4xf32, #tpu.memory_space<vmem>>, vector<1x8x4xf32>
    %32 = vector.shape_cast %31 : vector<1x8x4xf32> to vector<8x4xf32>
    %33 = vector.shape_cast %30 : vector<8x4xf32> to vector<1x8x4xf32>
    tpu.vector_store %arg6[%c0_15, %c0_16, %c0_17], %33 {strides = array<i32>} : memref<1x8x4xf32, #tpu.memory_space<vmem>>, vector<1x8x4xf32>,
    return
  }
  func.func @transform_0(%arg0: i32) -> (i32, i32, i32) {
    %c0_i32 = arith.constant 0 : i32
    %c0_i32_0 = arith.constant 0 : i32
    %c0_i32_1 = arith.constant 0 : i32
    return %arg0, %c0_i32, %c0_i32_0 : i32, i32, i32
  }
  func.func @transform_1(%arg0: i32) -> (i32, i32) {
    %c0_i32 = arith.constant 0 : i32
    %c0_i32_0 = arith.constant 0 : i32
    %c0_i32_1 = arith.constant 0 : i32
    return %c0_i32, %c0_i32_0 : i32, i32
  }
  func.func @transform_2(%arg0: i32) -> (i32, i32) {
    %c0_i32 = arith.constant 0 : i32
    %c0_i32_0 = arith.constant 0 : i32
    %c0_i32_1 = arith.constant 0 : i32
    return %c0_i32, %c0_i32_0 : i32, i32
  }
  func.func @transform_3(%arg0: i32) -> (i32, i32) {
    %c0_i32 = arith.constant 0 : i32
    %c0_i32_0 = arith.constant 0 : i32
    %c0_i32_1 = arith.constant 0 : i32
    return %c0_i32, %c0_i32_0 : i32, i32
  }
  func.func @transform_4(%arg0: i32) -> (i32, i32) {
    %c0_i32 = arith.constant 0 : i32
    %c0_i32_0 = arith.constant 0 : i32
    %c0_i32_1 = arith.constant 0 : i32
    return %c0_i32, %c0_i32_0 : i32, i32
  }
  func.func @transform_5(%arg0: i32) -> (i32, i32, i32) {
    %c0_i32 = arith.constant 0 : i32
    %c0_i32_0 = arith.constant 0 : i32
    %c0_i32_1 = arith.constant 0 : i32
    return %arg0, %c0_i32, %c0_i32_0 : i32, i32, i32
  }
}

</mosaic_0001>

<llo_original>
// kernel: decoder_only_forward.3
$region0: #{decoder_only_forward.3}
  #allocation0 [shape = 'u32[]', space=smem, size = 0x4, offset = 0x4, fixed_abs, tag = 'smem constant byte address 0x4 - core index']
  #allocation1 [shape = 'u32[144,128]{1,0:T(1,128)}', space=vmem, size = 0x12000, scoped, tag = 'internal scratch']
  %s0 = inlined_call_operand.vmem [shape: f32[2,8,12], index: 0, kind: input, shape index: {}]
  %s1 = inlined_call_operand.vmem [shape: f32[2,8,4], index: 1, kind: input, shape index: {}]
  %s2 = inlined_call_operand.vmem [shape: f32[1,8,32], index: 2, kind: input, shape index: {}]
  %s3 = inlined_call_operand.vmem [shape: f32[12,32], index: 3, kind: input, shape index: {}]
  %s4 = inlined_call_operand.vmem [shape: f32[4,32], index: 4, kind: input, shape index: {}]
  %s5 = inlined_call_operand.vmem [shape: f32[2,8,32], index: 5, kind: output, shape index: {}]
  %s6 = sld [smem:[#allocation0]]
  $region53: #{decoder_only_forward.3} parent=0
    _
  %s8 = ssub.s32 1, %s6
  %s9 = scalar_select 0, %s8, %s6
  loop: start=0, step=1, limit=4
  $region2: #{decoder_only_forward.3} parent=0 // loop_pre_header
    _
  $region3: #{decoder_only_forward.3} parent=0 // loop_header
    %s11 = sphi 0, %s15
    %p12 = scmp.ge.s32.totalorder %s11, 4
    %s21 = sphi 0, %s23
    %s24 = sphi 0, %s21
    %s25 = sphi 0, %s24
    %s41 = sphi 0, %s25
    %s47 = sphi 0, %s49
    %s50 = sphi 0, %s47
    %s51 = sphi 0, %s50
    %s67 = sphi 0, %s51
    %s71 = sphi 0, %s71
    %s73 = sphi 0, %s71
    %s74 = sphi 0, %s73
    %s88 = sphi 0, %s74
    %s92 = sphi 0, %s92
    %s94 = sphi 0, %s92
    %s95 = sphi 0, %s94
    %s109 = sphi 0, %s95
    %s113 = sphi 0, %s113
    %s115 = sphi 0, %s113
    %s116 = sphi 0, %s115
    %s130 = sphi 0, %s116
    %s136 = sphi 0, %s138
    %s139 = sphi 0, %s136
    %s140 = sphi 0, %s139
    %s156 = sphi 0, %s140
  $region4: #{decoder_only_forward.3} parent=0 // loop_header_branch
    %14 = sbr.rel (%p12) target = $region8
  $region5: #{decoder_only_forward.3} parent=0 // loop_body
    %s16 = ssub.s32 %s11, 1
    %s17 = ssub.s32 %s11, 2
    %s18 = sadd.s32 %s11, 1
    %s19 = ssub.s32 %s11, %s18
    %p20 = scmp.eq.s32.totalorder %s19, 0
    %s22 = sadd.s32 %s21, 1
    %s23 = scalar_select %p20, %s21, %s22
    %p26 = pneg %p20
    %p27 = scmp.eq.s32.totalorder %s11, 1
    %p28 = por %p26, %p27
    %p29 = scmp.ne.s32.totalorder %s21, %s24
    %p30 = scmp.eq.s32.totalorder %s11, 0
    %p31 = por %p29, %p30
    %p32 = scmp.ne.s32.totalorder %s21, %s24
    %p33 = scmp.eq.s32.totalorder %s16, 1
    %p34 = por %p32, %p33
    %p35 = scmp.ne.s32.totalorder %s24, %s25
    %p36 = scmp.eq.s32.totalorder %s16, 0
    %p37 = por %p35, %p36
    %p38 = scmp.ne.s32.totalorder %s24, %s25
    %p39 = scmp.eq.s32.totalorder %s17, 1
    %p40 = por %p38, %p39
    %p42 = scmp.ne.s32.totalorder %s25, %s41
    %p43 = scmp.eq.s32.totalorder %s17, 0
    %p44 = por %p42, %p43
    %s45 = ssub.s32 %s11, %s18
    %p46 = scmp.eq.s32.totalorder %s45, 0
    %s48 = sadd.s32 %s47, 1
    %s49 = scalar_select %p46, %s47, %s48
    %p52 = pneg %p46
    %p53 = scmp.eq.s32.totalorder %s11, 1
    %p54 = por %p52, %p53
    %p55 = scmp.ne.s32.totalorder %s47, %s50
    %p56 = scmp.eq.s32.totalorder %s11, 0
    %p57 = por %p55, %p56
    %p58 = scmp.ne.s32.totalorder %s47, %s50
    %p59 = scmp.eq.s32.totalorder %s16, 1
    %p60 = por %p58, %p59
    %p61 = scmp.ne.s32.totalorder %s50, %s51
    %p62 = scmp.eq.s32.totalorder %s16, 0
    %p63 = por %p61, %p62
    %p64 = scmp.ne.s32.totalorder %s50, %s51
    %p65 = scmp.eq.s32.totalorder %s17, 1
    %p66 = por %p64, %p65
    %p68 = scmp.ne.s32.totalorder %s51, %s67
    %p69 = scmp.eq.s32.totalorder %s17, 0
    %p70 = por %p68, %p69
    %s72 = sadd.s32 %s71, 1
    %p75 = scmp.eq.s32.totalorder %s11, 1
    %p76 = scmp.ne.s32.totalorder %s71, %s73
    %p77 = scmp.eq.s32.totalorder %s11, 0
    %p78 = por %p76, %p77
    %p79 = scmp.ne.s32.totalorder %s71, %s73
    %p80 = scmp.eq.s32.totalorder %s16, 1
    %p81 = por %p79, %p80
    %p82 = scmp.ne.s32.totalorder %s73, %s74
    %p83 = scmp.eq.s32.totalorder %s16, 0
    %p84 = por %p82, %p83
    %p85 = scmp.ne.s32.totalorder %s73, %s74
    %p86 = scmp.eq.s32.totalorder %s17, 1
    %p87 = por %p85, %p86
    %p89 = scmp.ne.s32.totalorder %s74, %s88
    %p90 = scmp.eq.s32.totalorder %s17, 0
    %p91 = por %p89, %p90
    %s93 = sadd.s32 %s92, 1
    %p96 = scmp.eq.s32.totalorder %s11, 1
    %p97 = scmp.ne.s32.totalorder %s92, %s94
    %p98 = scmp.eq.s32.totalorder %s11, 0
    %p99 = por %p97, %p98
    %p100 = scmp.ne.s32.totalorder %s92, %s94
    %p101 = scmp.eq.s32.totalorder %s16, 1
    %p102 = por %p100, %p101
    %p103 = scmp.ne.s32.totalorder %s94, %s95
    %p104 = scmp.eq.s32.totalorder %s16, 0
    %p105 = por %p103, %p104
    %p106 = scmp.ne.s32.totalorder %s94, %s95
    %p107 = scmp.eq.s32.totalorder %s17, 1
    %p108 = por %p106, %p107
    %p110 = scmp.ne.s32.totalorder %s95, %s109
    %p111 = scmp.eq.s32.totalorder %s17, 0
    %p112 = por %p110, %p111
    %s114 = sadd.s32 %s113, 1
    %p117 = scmp.eq.s32.totalorder %s11, 1
    %p118 = scmp.ne.s32.totalorder %s113, %s115
    %p119 = scmp.eq.s32.totalorder %s11, 0
    %p120 = por %p118, %p119
    %p121 = scmp.ne.s32.totalorder %s113, %s115
    %p122 = scmp.eq.s32.totalorder %s16, 1
    %p123 = por %p121, %p122
    %p124 = scmp.ne.s32.totalorder %s115, %s116
    %p125 = scmp.eq.s32.totalorder %s16, 0
    %p126 = por %p124, %p125
    %p127 = scmp.ne.s32.totalorder %s115, %s116
    %p128 = scmp.eq.s32.totalorder %s17, 1
    %p129 = por %p127, %p128
    %p131 = scmp.ne.s32.totalorder %s116, %s130
    %p132 = scmp.eq.s32.totalorder %s17, 0
    %p133 = por %p131, %p132
    %s134 = ssub.s32 %s11, %s18
    %p135 = scmp.eq.s32.totalorder %s134, 0
    %s137 = sadd.s32 %s136, 1
    %s138 = scalar_select %p135, %s136, %s137
    %p141 = pneg %p135
    %p142 = scmp.eq.s32.totalorder %s11, 1
    %p143 = por %p141, %p142
    %p144 = scmp.ne.s32.totalorder %s136, %s139
    %p145 = scmp.eq.s32.totalorder %s11, 0
    %p146 = por %p144, %p145
    %p147 = scmp.ne.s32.totalorder %s136, %s139
    %p148 = scmp.eq.s32.totalorder %s16, 1
    %p149 = por %p147, %p148
    %p150 = scmp.ne.s32.totalorder %s139, %s140
    %p151 = scmp.eq.s32.totalorder %s16, 0
    %p152 = por %p150, %p151
    %p153 = scmp.ne.s32.totalorder %s139, %s140
    %p154 = scmp.eq.s32.totalorder %s17, 1
    %p155 = por %p153, %p154
    %p157 = scmp.ne.s32.totalorder %s140, %s156
    %p158 = scmp.eq.s32.totalorder %s17, 0
    %p159 = por %p157, %p158
    %p160 = scmp.le.s32.totalorder 1, %s11
    %p161 = scmp.lt.s32.totalorder %s11, 3
    %p162 = pnand %p160, %p161
    %p163 = pneg %p162
    // Predicated region
    $region9: #{decoder_only_forward.3} parent=5 // pred_check
      _
    $region10: #{decoder_only_forward.3} parent=5 // pred_check_branch
      %165 = sbr.rel (%p162) target = $region12
    $region11: #{decoder_only_forward.3} parent=5 // pred_region
      %s166 = ssub.s32 %s11, 1
      // Predicated region
      $region13: #{decoder_only_forward.3} parent=11 // pred_check
        %p167 = pneg %p84
      $region14: #{decoder_only_forward.3} parent=11 // pred_check_branch
        %169 = sbr.rel (%p167) target = $region16
      $region15: #{decoder_only_forward.3} parent=11 // pred_region
        _
      $region16: #{decoder_only_forward.3} parent=11 // pred_fallthru
        _
      // Predicated region
      $region17: #{decoder_only_forward.3} parent=11 // pred_check
        %p170 = pneg %p105
      $region18: #{decoder_only_forward.3} parent=11 // pred_check_branch
        %172 = sbr.rel (%p170) target = $region20
      $region19: #{decoder_only_forward.3} parent=11 // pred_region
        _
      $region20: #{decoder_only_forward.3} parent=11 // pred_fallthru
        _
      // Predicated region
      $region21: #{decoder_only_forward.3} parent=11 // pred_check
        %p173 = pneg %p126
      $region22: #{decoder_only_forward.3} parent=11 // pred_check_branch
        %175 = sbr.rel (%p173) target = $region24
      $region23: #{decoder_only_forward.3} parent=11 // pred_region
        _
      $region24: #{decoder_only_forward.3} parent=11 // pred_fallthru
        _
    $region12: #{decoder_only_forward.3} parent=5 // pred_fallthru
      _
    %p176 = scmp.lt.s32.totalorder %s11, 2
    // Predicated region
    $region25: #{decoder_only_forward.3} parent=5 // pred_check
      %p177 = pneg %p176
    $region26: #{decoder_only_forward.3} parent=5 // pred_check_branch
      %179 = sbr.rel (%p177) target = $region28
    $region27: #{decoder_only_forward.3} parent=5 // pred_region
      // Predicated region
      $region29: #{decoder_only_forward.3} parent=27 // pred_check
        %p180 = pneg %p31
      $region30: #{decoder_only_forward.3} parent=27 // pred_check_branch
        %182 = sbr.rel (%p180) target = $region32
      $region31: #{decoder_only_forward.3} parent=27 // pred_region
        %p183 = scmp.lt.s32.totalorder %s11, 1
        %s184 = scalar_select %p183, %s11, 1
        %s185 = smul.addr %s184, 8
        %s186 = scalar_lea.vmem %s0, %s185
      $region32: #{decoder_only_forward.3} parent=27 // pred_fallthru
        _
      // Predicated region
      $region33: #{decoder_only_forward.3} parent=27 // pred_check
        %p187 = pneg %p57
      $region34: #{decoder_only_forward.3} parent=27 // pred_check_branch
        %189 = sbr.rel (%p187) target = $region36
      $region35: #{decoder_only_forward.3} parent=27 // pred_region
        %p190 = scmp.lt.s32.totalorder %s11, 1
        %s191 = scalar_select %p190, %s11, 1
        %s192 = smul.addr %s191, 8
        %s193 = scalar_lea.vmem %s1, %s192
      $region36: #{decoder_only_forward.3} parent=27 // pred_fallthru
        _
    $region28: #{decoder_only_forward.3} parent=5 // pred_fallthru
      _
    %p194 = scmp.le.s32.totalorder 1, %s11
    %p195 = scmp.lt.s32.totalorder %s11, 3
    %p196 = pnand %p194, %p195
    %p197 = pneg %p196
    // Predicated region
    $region37: #{decoder_only_forward.3} parent=5 // pred_check
      _
    $region38: #{decoder_only_forward.3} parent=5 // pred_check_branch
      %199 = sbr.rel (%p196) target = $region40
    $region39: #{decoder_only_forward.3} parent=5 // pred_region
      %s200 = ssub.s32 %s11, 1
      %p201 = scmp.lt.s32.totalorder %s16, 1
      %s202 = scalar_select %p201, %s16, 1
      %s203 = smul.addr %s202, 8
      %s204 = scalar_lea.vmem %s0, %s203
      %p205 = pneg %p37
      %p206 = pneg %p34
      %p207 = scmp.lt.s32.totalorder %s16, 1
      %s208 = scalar_select %p207, %s16, 1
      %s209 = smul.addr %s208, 8
      %s210 = scalar_lea.vmem %s1, %s209
      %p211 = pneg %p63
      %p212 = pneg %p60
      %p213 = pneg %p84
      %p214 = pneg %p81
      %p215 = pneg %p105
      %p216 = pneg %p102
      %p217 = pneg %p126
      %p218 = pneg %p123
      %p219 = pneg %p152
      %p220 = pneg %p149
      %p221 = scmp.lt.s32.totalorder %s16, 1
      %s222 = scalar_select %p221, %s16, 1
      %s223 = smul.addr %s222, 8
      %s224 = scalar_lea.vmem %s5, %s223
      %p225 = scmp.lt.s32.totalorder %s16, 1
      %s226 = scalar_select %p225, %s16, 1
      %s227 = smul.addr %s226, 8
      %s228 = scalar_lea.vmem %s0, %s227
      %p229 = scmp.lt.s32.totalorder %s16, 1
      %s230 = scalar_select %p229, %s16, 1
      %s231 = smul.addr %s230, 8
      %s232 = scalar_lea.vmem %s1, %s231
      %p233 = scmp.lt.s32.totalorder %s16, 1
      %s234 = scalar_select %p233, %s16, 1
      %s235 = smul.addr %s234, 8
      %s236 = scalar_lea.vmem %s5, %s235
      %v237 = vld [vmem:[%s228] sm:$0xff]
      %v238 = vld [vmem:[%s3] sm:$0xff]
      %v239 = vld [vmem:[%s3 + $0x8] sm:$0xf]
      %v240 = vld [vmem:[%s232] sm:$0xff]
      %v241 = vld [vmem:[%s4] sm:$0xf]
      %vm242 = vcmask 31744
      %v244 = vsel %vm242, %v240, 0
      %vm246 = vcmask 1043456
      %v248 = vsel %vm246, %v241, 0
      %250 = vmatprep.subr.mxu0 0.0
      %251 = vmatpush1.msra.mxu0 0.0
      %252 = vmatprep.subr.mxu0 0.0
      %253 = vmatpush1.msra.mxu0 0.0
      %254 = vmatprep.subr.mxu0 0.0
      %255 = vmatpush1.msra.mxu0 0.0
      %256 = vmatprep.subr.mxu0 0.0
      %257 = vmatpush1.msra.mxu0 0.0
      %258 = vmatprep.subr.mxu0 0.0
      %259 = vmatpush1.msra.mxu0 0.0
      %260 = vmatprep.subr.mxu0 0.0
      %261 = vmatpush1.msra.mxu0 0.0
      %262 = vmatprep.subr.mxu0 0.0
      %263 = vmatpush1.msra.mxu0 0.0
      %264 = vmatprep.subr.mxu0 0.0
      %265 = vmatpush1.msra.mxu0 0.0
      %266 = vmatprep.subr.mxu0 0.0
      %267 = vmatpush1.msra.mxu0 0.0
      %268 = vmatprep.subr.mxu0 0.0
      %269 = vmatpush1.msra.mxu0 0.0
      %270 = vmatprep.subr.mxu0 0.0
      %271 = vmatpush1.msra.mxu0 0.0
      %272 = vmatprep.subr.mxu0 0.0
      %273 = vmatpush1.msra.mxu0 0.0
      %274 = vmatprep.subr.mxu0 0.0
      %275 = vmatpush1.msra.mxu0 0.0
      %276 = vmatprep.subr.mxu0 0.0
      %277 = vmatpush1.msra.mxu0 0.0
      %278 = vmatprep.subr.mxu0 0.0
      %279 = vmatpush1.msra.mxu0 0.0
      %280 = vmatprep.subr.mxu0 0.0
      %281 = vmatpush1.msra.mxu0 %v248
      %282 = vmatprep.subr.mxu0 0.0
      %283 = vmatpush2.msra.mxu0 0.0
      %284 = vmatprep.subr.mxu0 0.0
      %285 = vmatpush2.msra.mxu0 0.0
      %286 = vmatprep.subr.mxu0 0.0
      %287 = vmatpush2.msra.mxu0 0.0
      %288 = vmatprep.subr.mxu0 0.0
      %289 = vmatpush2.msra.mxu0 0.0
      %290 = vmatprep.subr.mxu0 0.0
      %291 = vmatpush2.msra.mxu0 0.0
      %292 = vmatprep.subr.mxu0 0.0
      %293 = vmatpush2.msra.mxu0 0.0
      %294 = vmatprep.subr.mxu0 0.0
      %295 = vmatpush2.msra.mxu0 0.0
      %296 = vmatprep.subr.mxu0 0.0
      %297 = vmatpush2.msra.mxu0 0.0
      %298 = vmatprep.subr.mxu0 0.0
      %299 = vmatpush2.msra.mxu0 0.0
      %300 = vmatprep.subr.mxu0 0.0
      %301 = vmatpush2.msra.mxu0 0.0
      %302 = vmatprep.subr.mxu0 0.0
      %303 = vmatpush2.msra.mxu0 0.0
      %304 = vmatprep.subr.mxu0 0.0
      %305 = vmatpush2.msra.mxu0 0.0
      %306 = vmatprep.subr.mxu0 0.0
      %307 = vmatpush2.msra.mxu0 0.0
      %308 = vmatprep.subr.mxu0 0.0
      %309 = vmatpush2.msra.mxu0 0.0
      %310 = vmatprep.subr.mxu0 0.0
      %311 = vmatpush2.msra.mxu0 0.0
      %312 = vmatprep.subr.mxu0 0.0
      %313 = vmatpush2.msra.mxu0 0.0
      %314 = vmatprep.mubr.f32.mxu0 0.0
      %315 = vmatmul.mubr.f32.gmra.mxu0 %v244
      %v316 = vpop.f32.mrf.mxu0
      %v317 = vadd.f32 0.0, %v316
      %v318 = vpop.f32.mrf.mxu0
      %319 = vdwg.mxu0
      %vm320 = vcmask 97280
      %v322 = vsel %vm320, %v237, 0
      %v325 = vsel %vm246, %v239, 0
      %327 = vmatprep.subr.mxu0 0.0
      %328 = vmatpush1.msra.mxu0 0.0
      %329 = vmatprep.subr.mxu0 0.0
      %330 = vmatpush1.msra.mxu0 0.0
      %331 = vmatprep.subr.mxu0 0.0
      %332 = vmatpush1.msra.mxu0 0.0
      %333 = vmatprep.subr.mxu0 0.0
      %334 = vmatpush1.msra.mxu0 0.0
      %335 = vmatprep.subr.mxu0 0.0
      %336 = vmatpush1.msra.mxu0 0.0
      %337 = vmatprep.subr.mxu0 0.0
      %338 = vmatpush1.msra.mxu0 0.0
      %339 = vmatprep.subr.mxu0 0.0
      %340 = vmatpush1.msra.mxu0 0.0
      %341 = vmatprep.subr.mxu0 0.0
      %342 = vmatpush1.msra.mxu0 0.0
      %343 = vmatprep.subr.mxu0 0.0
      %344 = vmatpush1.msra.mxu0 0.0
      %345 = vmatprep.subr.mxu0 0.0
      %346 = vmatpush1.msra.mxu0 0.0
      %347 = vmatprep.subr.mxu0 0.0
      %348 = vmatpush1.msra.mxu0 0.0
      %349 = vmatprep.subr.mxu0 0.0
      %350 = vmatpush1.msra.mxu0 0.0
      %351 = vmatprep.subr.mxu0 0.0
      %352 = vmatpush1.msra.mxu0 0.0
      %353 = vmatprep.subr.mxu0 0.0
      %354 = vmatpush1.msra.mxu0 0.0
      %355 = vmatprep.subr.mxu0 0.0
      %356 = vmatpush1.msra.mxu0 %v325
      %357 = vmatprep.subr.mxu0 0.0
      %358 = vmatpush1.msra.mxu0 %v238
      %359 = vmatprep.subr.mxu0 0.0
      %360 = vmatpush2.msra.mxu0 0.0
      %361 = vmatprep.subr.mxu0 0.0
      %362 = vmatpush2.msra.mxu0 0.0
      %363 = vmatprep.subr.mxu0 0.0
      %364 = vmatpush2.msra.mxu0 0.0
      %365 = vmatprep.subr.mxu0 0.0
      %366 = vmatpush2.msra.mxu0 0.0
      %367 = vmatprep.subr.mxu0 0.0
      %368 = vmatpush2.msra.mxu0 0.0
      %369 = vmatprep.subr.mxu0 0.0
      %370 = vmatpush2.msra.mxu0 0.0
      %371 = vmatprep.subr.mxu0 0.0
      %372 = vmatpush2.msra.mxu0 0.0
      %373 = vmatprep.subr.mxu0 0.0
      %374 = vmatpush2.msra.mxu0 0.0
      %375 = vmatprep.subr.mxu0 0.0
      %376 = vmatpush2.msra.mxu0 0.0
      %377 = vmatprep.subr.mxu0 0.0
      %378 = vmatpush2.msra.mxu0 0.0
      %379 = vmatprep.subr.mxu0 0.0
      %380 = vmatpush2.msra.mxu0 0.0
      %381 = vmatprep.subr.mxu0 0.0
      %382 = vmatpush2.msra.mxu0 0.0
      %383 = vmatprep.subr.mxu0 0.0
      %384 = vmatpush2.msra.mxu0 0.0
      %385 = vmatprep.subr.mxu0 0.0
      %386 = vmatpush2.msra.mxu0 0.0
      %387 = vmatprep.subr.mxu0 0.0
      %388 = vmatpush2.msra.mxu0 0.0
      %389 = vmatprep.subr.mxu0 0.0
      %390 = vmatpush2.msra.mxu0 0.0
      %391 = vmatprep.mubr.f32.mxu0 0.0
      %392 = vmatmul.mubr.f32.gmra.mxu0 %v322
      %v393 = vpop.f32.mrf.mxu0
      %v394 = vadd.f32 %v317, %v393
      %v395 = vpop.f32.mrf.mxu0
      %396 = vdwg.mxu0
      %v397 = vld [vmem:[%s2] sm:$0xff]
      %v398 = vadd.f32 %v394, %v397
      %vm399 = vcmask 261120
      %400 = vst.msk [vmem:[%s236] sm:$0xff] %vm399, %v398
      %p401 = scmp.lt.s32.totalorder %s16, 1
      %s402 = scalar_select %p401, %s16, 1
      %s403 = smul.addr %s402, 8
      %s404 = scalar_lea.vmem %s5, %s403
      // Predicated region
      $region41: #{decoder_only_forward.3} parent=39 // pred_check
        %p405 = pneg %p149
      $region42: #{decoder_only_forward.3} parent=39 // pred_check_branch
        %407 = sbr.rel (%p405) target = $region44
      $region43: #{decoder_only_forward.3} parent=39 // pred_region
        _
      $region44: #{decoder_only_forward.3} parent=39 // pred_fallthru
        _
    $region40: #{decoder_only_forward.3} parent=5 // pred_fallthru
      _
    %p408 = scmp.le.s32.totalorder 2, %s11
    // Predicated region
    $region45: #{decoder_only_forward.3} parent=5 // pred_check
      %p409 = pneg %p408
    $region46: #{decoder_only_forward.3} parent=5 // pred_check_branch
      %411 = sbr.rel (%p409) target = $region48
    $region47: #{decoder_only_forward.3} parent=5 // pred_region
      %s412 = ssub.s32 %s11, 2
      // Predicated region
      $region49: #{decoder_only_forward.3} parent=47 // pred_check
        %p413 = pneg %p155
      $region50: #{decoder_only_forward.3} parent=47 // pred_check_branch
        %415 = sbr.rel (%p413) target = $region52
      $region51: #{decoder_only_forward.3} parent=47 // pred_region
        %p416 = scmp.lt.s32.totalorder %s17, 1
        %s417 = scalar_select %p416, %s17, 1
        %s418 = smul.addr %s417, 8
        %s419 = scalar_lea.vmem %s5, %s418
      $region52: #{decoder_only_forward.3} parent=47 // pred_fallthru
        _
    $region48: #{decoder_only_forward.3} parent=5 // pred_fallthru
      _
  $region6: #{decoder_only_forward.3} parent=0 // loop_footer
    %s15 = sadd.s32 1, %s11
  $region7: #{decoder_only_forward.3} parent=0 // loop_footer_branch
    %10 = sbr.rel target = $region3
  $region8: #{decoder_only_forward.3} parent=0 // loop_exit
    _

// kernel: decoder_only_forward.5
$region0: #{decoder_only_forward.5}
  #allocation0 [shape = 'u32[]', space=smem, size = 0x4, offset = 0x4, fixed_abs, tag = 'smem constant byte address 0x4 - core index']
  #allocation1 [shape = 'u32[144,128]{1,0:T(1,128)}', space=vmem, size = 0x12000, scoped, tag = 'internal scratch']
  %s0 = inlined_call_operand.vmem [shape: f32[2,8,32], index: 0, kind: input, shape index: {}]
  %s1 = inlined_call_operand.vmem [shape: f32[1,32], index: 1, kind: input, shape index: {}]
  %s2 = inlined_call_operand.vmem [shape: f32[1,32], index: 2, kind: input, shape index: {}]
  %s3 = inlined_call_operand.vmem [shape: f32[32,4], index: 3, kind: input, shape index: {}]
  %s4 = inlined_call_operand.vmem [shape: f32[1,4], index: 4, kind: input, shape index: {}]
  %s5 = inlined_call_operand.vmem [shape: f32[2,8,4], index: 5, kind: output, shape index: {}]
  %s6 = sld [smem:[#allocation0]]
  $region53: #{decoder_only_forward.5} parent=0
    _
  %s8 = ssub.s32 1, %s6
  %s9 = scalar_select 0, %s8, %s6
  loop: start=0, step=1, limit=4
  $region2: #{decoder_only_forward.5} parent=0 // loop_pre_header
    _
  $region3: #{decoder_only_forward.5} parent=0 // loop_header
    %s11 = sphi 0, %s15
    %p12 = scmp.ge.s32.totalorder %s11, 4
    %s21 = sphi 0, %s23
    %s24 = sphi 0, %s21
    %s25 = sphi 0, %s24
    %s41 = sphi 0, %s25
    %s45 = sphi 0, %s45
    %s47 = sphi 0, %s45
    %s48 = sphi 0, %s47
    %s62 = sphi 0, %s48
    %s66 = sphi 0, %s66
    %s68 = sphi 0, %s66
    %s69 = sphi 0, %s68
    %s83 = sphi 0, %s69
    %s87 = sphi 0, %s87
    %s89 = sphi 0, %s87
    %s90 = sphi 0, %s89
    %s104 = sphi 0, %s90
    %s108 = sphi 0, %s108
    %s110 = sphi 0, %s108
    %s111 = sphi 0, %s110
    %s125 = sphi 0, %s111
    %s131 = sphi 0, %s133
    %s134 = sphi 0, %s131
    %s135 = sphi 0, %s134
    %s151 = sphi 0, %s135
  $region4: #{decoder_only_forward.5} parent=0 // loop_header_branch
    %14 = sbr.rel (%p12) target = $region8
  $region5: #{decoder_only_forward.5} parent=0 // loop_body
    %s16 = ssub.s32 %s11, 1
    %s17 = ssub.s32 %s11, 2
    %s18 = sadd.s32 %s11, 1
    %s19 = ssub.s32 %s11, %s18
    %p20 = scmp.eq.s32.totalorder %s19, 0
    %s22 = sadd.s32 %s21, 1
    %s23 = scalar_select %p20, %s21, %s22
    %p26 = pneg %p20
    %p27 = scmp.eq.s32.totalorder %s11, 1
    %p28 = por %p26, %p27
    %p29 = scmp.ne.s32.totalorder %s21, %s24
    %p30 = scmp.eq.s32.totalorder %s11, 0
    %p31 = por %p29, %p30
    %p32 = scmp.ne.s32.totalorder %s21, %s24
    %p33 = scmp.eq.s32.totalorder %s16, 1
    %p34 = por %p32, %p33
    %p35 = scmp.ne.s32.totalorder %s24, %s25
    %p36 = scmp.eq.s32.totalorder %s16, 0
    %p37 = por %p35, %p36
    %p38 = scmp.ne.s32.totalorder %s24, %s25
    %p39 = scmp.eq.s32.totalorder %s17, 1
    %p40 = por %p38, %p39
    %p42 = scmp.ne.s32.totalorder %s25, %s41
    %p43 = scmp.eq.s32.totalorder %s17, 0
    %p44 = por %p42, %p43
    %s46 = sadd.s32 %s45, 1
    %p49 = scmp.eq.s32.totalorder %s11, 1
    %p50 = scmp.ne.s32.totalorder %s45, %s47
    %p51 = scmp.eq.s32.totalorder %s11, 0
    %p52 = por %p50, %p51
    %p53 = scmp.ne.s32.totalorder %s45, %s47
    %p54 = scmp.eq.s32.totalorder %s16, 1
    %p55 = por %p53, %p54
    %p56 = scmp.ne.s32.totalorder %s47, %s48
    %p57 = scmp.eq.s32.totalorder %s16, 0
    %p58 = por %p56, %p57
    %p59 = scmp.ne.s32.totalorder %s47, %s48
    %p60 = scmp.eq.s32.totalorder %s17, 1
    %p61 = por %p59, %p60
    %p63 = scmp.ne.s32.totalorder %s48, %s62
    %p64 = scmp.eq.s32.totalorder %s17, 0
    %p65 = por %p63, %p64
    %s67 = sadd.s32 %s66, 1
    %p70 = scmp.eq.s32.totalorder %s11, 1
    %p71 = scmp.ne.s32.totalorder %s66, %s68
    %p72 = scmp.eq.s32.totalorder %s11, 0
    %p73 = por %p71, %p72
    %p74 = scmp.ne.s32.totalorder %s66, %s68
    %p75 = scmp.eq.s32.totalorder %s16, 1
    %p76 = por %p74, %p75
    %p77 = scmp.ne.s32.totalorder %s68, %s69
    %p78 = scmp.eq.s32.totalorder %s16, 0
    %p79 = por %p77, %p78
    %p80 = scmp.ne.s32.totalorder %s68, %s69
    %p81 = scmp.eq.s32.totalorder %s17, 1
    %p82 = por %p80, %p81
    %p84 = scmp.ne.s32.totalorder %s69, %s83
    %p85 = scmp.eq.s32.totalorder %s17, 0
    %p86 = por %p84, %p85
    %s88 = sadd.s32 %s87, 1
    %p91 = scmp.eq.s32.totalorder %s11, 1
    %p92 = scmp.ne.s32.totalorder %s87, %s89
    %p93 = scmp.eq.s32.totalorder %s11, 0
    %p94 = por %p92, %p93
    %p95 = scmp.ne.s32.totalorder %s87, %s89
    %p96 = scmp.eq.s32.totalorder %s16, 1
    %p97 = por %p95, %p96
    %p98 = scmp.ne.s32.totalorder %s89, %s90
    %p99 = scmp.eq.s32.totalorder %s16, 0
    %p100 = por %p98, %p99
    %p101 = scmp.ne.s32.totalorder %s89, %s90
    %p102 = scmp.eq.s32.totalorder %s17, 1
    %p103 = por %p101, %p102
    %p105 = scmp.ne.s32.totalorder %s90, %s104
    %p106 = scmp.eq.s32.totalorder %s17, 0
    %p107 = por %p105, %p106
    %s109 = sadd.s32 %s108, 1
    %p112 = scmp.eq.s32.totalorder %s11, 1
    %p113 = scmp.ne.s32.totalorder %s108, %s110
    %p114 = scmp.eq.s32.totalorder %s11, 0
    %p115 = por %p113, %p114
    %p116 = scmp.ne.s32.totalorder %s108, %s110
    %p117 = scmp.eq.s32.totalorder %s16, 1
    %p118 = por %p116, %p117
    %p119 = scmp.ne.s32.totalorder %s110, %s111
    %p120 = scmp.eq.s32.totalorder %s16, 0
    %p121 = por %p119, %p120
    %p122 = scmp.ne.s32.totalorder %s110, %s111
    %p123 = scmp.eq.s32.totalorder %s17, 1
    %p124 = por %p122, %p123
    %p126 = scmp.ne.s32.totalorder %s111, %s125
    %p127 = scmp.eq.s32.totalorder %s17, 0
    %p128 = por %p126, %p127
    %s129 = ssub.s32 %s11, %s18
    %p130 = scmp.eq.s32.totalorder %s129, 0
    %s132 = sadd.s32 %s131, 1
    %s133 = scalar_select %p130, %s131, %s132
    %p136 = pneg %p130
    %p137 = scmp.eq.s32.totalorder %s11, 1
    %p138 = por %p136, %p137
    %p139 = scmp.ne.s32.totalorder %s131, %s134
    %p140 = scmp.eq.s32.totalorder %s11, 0
    %p141 = por %p139, %p140
    %p142 = scmp.ne.s32.totalorder %s131, %s134
    %p143 = scmp.eq.s32.totalorder %s16, 1
    %p144 = por %p142, %p143
    %p145 = scmp.ne.s32.totalorder %s134, %s135
    %p146 = scmp.eq.s32.totalorder %s16, 0
    %p147 = por %p145, %p146
    %p148 = scmp.ne.s32.totalorder %s134, %s135
    %p149 = scmp.eq.s32.totalorder %s17, 1
    %p150 = por %p148, %p149
    %p152 = scmp.ne.s32.totalorder %s135, %s151
    %p153 = scmp.eq.s32.totalorder %s17, 0
    %p154 = por %p152, %p153
    %p155 = scmp.le.s32.totalorder 1, %s11
    %p156 = scmp.lt.s32.totalorder %s11, 3
    %p157 = pnand %p155, %p156
    %p158 = pneg %p157
    // Predicated region
    $region9: #{decoder_only_forward.5} parent=5 // pred_check
      _
    $region10: #{decoder_only_forward.5} parent=5 // pred_check_branch
      %160 = sbr.rel (%p157) target = $region12
    $region11: #{decoder_only_forward.5} parent=5 // pred_region
      %s161 = ssub.s32 %s11, 1
      // Predicated region
      $region13: #{decoder_only_forward.5} parent=11 // pred_check
        %p162 = pneg %p58
      $region14: #{decoder_only_forward.5} parent=11 // pred_check_branch
        %164 = sbr.rel (%p162) target = $region16
      $region15: #{decoder_only_forward.5} parent=11 // pred_region
        _
      $region16: #{decoder_only_forward.5} parent=11 // pred_fallthru
        _
      // Predicated region
      $region17: #{decoder_only_forward.5} parent=11 // pred_check
        %p165 = pneg %p79
      $region18: #{decoder_only_forward.5} parent=11 // pred_check_branch
        %167 = sbr.rel (%p165) target = $region20
      $region19: #{decoder_only_forward.5} parent=11 // pred_region
        _
      $region20: #{decoder_only_forward.5} parent=11 // pred_fallthru
        _
      // Predicated region
      $region21: #{decoder_only_forward.5} parent=11 // pred_check
        %p168 = pneg %p100
      $region22: #{decoder_only_forward.5} parent=11 // pred_check_branch
        %170 = sbr.rel (%p168) target = $region24
      $region23: #{decoder_only_forward.5} parent=11 // pred_region
        _
      $region24: #{decoder_only_forward.5} parent=11 // pred_fallthru
        _
      // Predicated region
      $region25: #{decoder_only_forward.5} parent=11 // pred_check
        %p171 = pneg %p121
      $region26: #{decoder_only_forward.5} parent=11 // pred_check_branch
        %173 = sbr.rel (%p171) target = $region28
      $region27: #{decoder_only_forward.5} parent=11 // pred_region
        _
      $region28: #{decoder_only_forward.5} parent=11 // pred_fallthru
        _
    $region12: #{decoder_only_forward.5} parent=5 // pred_fallthru
      _
    %p174 = scmp.lt.s32.totalorder %s11, 2
    // Predicated region
    $region29: #{decoder_only_forward.5} parent=5 // pred_check
      %p175 = pneg %p174
    $region30: #{decoder_only_forward.5} parent=5 // pred_check_branch
      %177 = sbr.rel (%p175) target = $region32
    $region31: #{decoder_only_forward.5} parent=5 // pred_region
      // Predicated region
      $region33: #{decoder_only_forward.5} parent=31 // pred_check
        %p178 = pneg %p31
      $region34: #{decoder_only_forward.5} parent=31 // pred_check_branch
        %180 = sbr.rel (%p178) target = $region36
      $region35: #{decoder_only_forward.5} parent=31 // pred_region
        %p181 = scmp.lt.s32.totalorder %s11, 1
        %s182 = scalar_select %p181, %s11, 1
        %s183 = smul.addr %s182, 8
        %s184 = scalar_lea.vmem %s0, %s183
      $region36: #{decoder_only_forward.5} parent=31 // pred_fallthru
        _
    $region32: #{decoder_only_forward.5} parent=5 // pred_fallthru
      _
    %p185 = scmp.le.s32.totalorder 1, %s11
    %p186 = scmp.lt.s32.totalorder %s11, 3
    %p187 = pnand %p185, %p186
    %p188 = pneg %p187
    // Predicated region
    $region37: #{decoder_only_forward.5} parent=5 // pred_check
      _
    $region38: #{decoder_only_forward.5} parent=5 // pred_check_branch
      %190 = sbr.rel (%p187) target = $region40
    $region39: #{decoder_only_forward.5} parent=5 // pred_region
      %s191 = ssub.s32 %s11, 1
      %p192 = scmp.lt.s32.totalorder %s16, 1
      %s193 = scalar_select %p192, %s16, 1
      %s194 = smul.addr %s193, 8
      %s195 = scalar_lea.vmem %s0, %s194
      %p196 = pneg %p37
      %p197 = pneg %p34
      %p198 = pneg %p58
      %p199 = pneg %p55
      %p200 = pneg %p79
      %p201 = pneg %p76
      %p202 = pneg %p100
      %p203 = pneg %p97
      %p204 = pneg %p121
      %p205 = pneg %p118
      %p206 = pneg %p147
      %p207 = pneg %p144
      %p208 = scmp.lt.s32.totalorder %s16, 1
      %s209 = scalar_select %p208, %s16, 1
      %s210 = smul.addr %s209, 8
      %s211 = scalar_lea.vmem %s5, %s210
      %p212 = scmp.lt.s32.totalorder %s16, 1
      %s213 = scalar_select %p212, %s16, 1
      %s214 = smul.addr %s213, 8
      %s215 = scalar_lea.vmem %s0, %s214
      %p216 = scmp.lt.s32.totalorder %s16, 1
      %s217 = scalar_select %p216, %s16, 1
      %s218 = smul.addr %s217, 8
      %s219 = scalar_lea.vmem %s5, %s218
      %v220 = vld [vmem:[%s215] sm:$0xff]
      %vm221 = vcmask 261120
      %v222 = vsel %vm221, %v220, 0.0
      %223 = vadd.xlane.f32.xlu0 %v222
      %v224 = vpop.xlane.xlu0 %223
      %v225 = vrcp.pop 32.0
      %v226 = vmul.f32 %v224, %v225
      %v227 = vsub.f32 %v220, %v226
      %v228 = vmul.f32 %v227, %v227
      %v229 = vsel %vm221, %v228, 0.0
      %230 = vadd.xlane.f32.xlu0 %v229
      %v231 = vpop.xlane.xlu0 %230
      %v232 = vmul.f32 %v231, %v225
      %v233 = vadd.f32 %v232, 1e-05
      %v234 = vrsqrt.pop %v233
      %v235 = vmul.f32 %v227, %v234
      %v236 = vld [vmem:[%s1] sm:$0x1]
      %v238 = vlaneseq
      %v239 = vshrl.u32 %v238, 7
      %v240 = vsub.s32 0, %v239
      %v241 = vrot.slane %v236, %v240
      %v243 = vmul.f32 %v235, %v241
      %v244 = vld [vmem:[%s2] sm:$0x1]
      %v246 = vlaneseq
      %v247 = vshrl.u32 %v246, 7
      %v248 = vsub.s32 0, %v247
      %v249 = vrot.slane %v244, %v248
      %v251 = vadd.f32 %v243, %v249
      %v252 = vld [vmem:[%s3] sm:$0xff]
      %v253 = vld [vmem:[%s3 + $0x8] sm:$0xff]
      %v254 = vld [vmem:[%s3 + $0x10] sm:$0xff]
      %v255 = vld [vmem:[%s3 + $0x18] sm:$0xff]
      %v256 = vld [vmem:[%s4] sm:$0x1]
      %v258 = vlaneseq
      %v259 = vshrl.u32 %v258, 7
      %v260 = vsub.s32 0, %v259
      %v261 = vrot.slane %v256, %v260
      %v264 = vsel %vm221, %v251, 0
      %266 = vmatprep.subr.mxu0 0.0
      %267 = vmatpush1.msra.mxu0 0.0
      %268 = vmatprep.subr.mxu0 0.0
      %269 = vmatpush1.msra.mxu0 0.0
      %270 = vmatprep.subr.mxu0 0.0
      %271 = vmatpush1.msra.mxu0 0.0
      %272 = vmatprep.subr.mxu0 0.0
      %273 = vmatpush1.msra.mxu0 0.0
      %274 = vmatprep.subr.mxu0 0.0
      %275 = vmatpush1.msra.mxu0 0.0
      %276 = vmatprep.subr.mxu0 0.0
      %277 = vmatpush1.msra.mxu0 0.0
      %278 = vmatprep.subr.mxu0 0.0
      %279 = vmatpush1.msra.mxu0 0.0
      %280 = vmatprep.subr.mxu0 0.0
      %281 = vmatpush1.msra.mxu0 0.0
      %282 = vmatprep.subr.mxu0 0.0
      %283 = vmatpush1.msra.mxu0 0.0
      %284 = vmatprep.subr.mxu0 0.0
      %285 = vmatpush1.msra.mxu0 0.0
      %286 = vmatprep.subr.mxu0 0.0
      %287 = vmatpush1.msra.mxu0 0.0
      %288 = vmatprep.subr.mxu0 0.0
      %289 = vmatpush1.msra.mxu0 0.0
      %290 = vmatprep.subr.mxu0 0.0
      %291 = vmatpush1.msra.mxu0 %v255
      %292 = vmatprep.subr.mxu0 0.0
      %293 = vmatpush1.msra.mxu0 %v254
      %294 = vmatprep.subr.mxu0 0.0
      %295 = vmatpush1.msra.mxu0 %v253
      %296 = vmatprep.subr.mxu0 0.0
      %297 = vmatpush1.msra.mxu0 %v252
      %298 = vmatprep.subr.mxu0 0.0
      %299 = vmatpush2.msra.mxu0 0.0
      %300 = vmatprep.subr.mxu0 0.0
      %301 = vmatpush2.msra.mxu0 0.0
      %302 = vmatprep.subr.mxu0 0.0
      %303 = vmatpush2.msra.mxu0 0.0
      %304 = vmatprep.subr.mxu0 0.0
      %305 = vmatpush2.msra.mxu0 0.0
      %306 = vmatprep.subr.mxu0 0.0
      %307 = vmatpush2.msra.mxu0 0.0
      %308 = vmatprep.subr.mxu0 0.0
      %309 = vmatpush2.msra.mxu0 0.0
      %310 = vmatprep.subr.mxu0 0.0
      %311 = vmatpush2.msra.mxu0 0.0
      %312 = vmatprep.subr.mxu0 0.0
      %313 = vmatpush2.msra.mxu0 0.0
      %314 = vmatprep.subr.mxu0 0.0
      %315 = vmatpush2.msra.mxu0 0.0
      %316 = vmatprep.subr.mxu0 0.0
      %317 = vmatpush2.msra.mxu0 0.0
      %318 = vmatprep.subr.mxu0 0.0
      %319 = vmatpush2.msra.mxu0 0.0
      %320 = vmatprep.subr.mxu0 0.0
      %321 = vmatpush2.msra.mxu0 0.0
      %322 = vmatprep.subr.mxu0 0.0
      %323 = vmatpush2.msra.mxu0 0.0
      %324 = vmatprep.subr.mxu0 0.0
      %325 = vmatpush2.msra.mxu0 0.0
      %326 = vmatprep.subr.mxu0 0.0
      %327 = vmatpush2.msra.mxu0 0.0
      %328 = vmatprep.subr.mxu0 0.0
      %329 = vmatpush2.msra.mxu0 0.0
      %330 = vmatprep.mubr.f32.mxu0 0.0
      %331 = vmatmul.mubr.f32.gmra.mxu0 %v264
      %v332 = vpop.f32.mrf.mxu0
      %v333 = vadd.f32 %v261, %v332
      %v334 = vpop.f32.mrf.mxu0
      %335 = vdwg.mxu0
      %vm336 = vcmask 31744
      %337 = vst.msk [vmem:[%s219] sm:$0xff] %vm336, %v333
      %p338 = scmp.lt.s32.totalorder %s16, 1
      %s339 = scalar_select %p338, %s16, 1
      %s340 = smul.addr %s339, 8
      %s341 = scalar_lea.vmem %s5, %s340
      // Predicated region
      $region41: #{decoder_only_forward.5} parent=39 // pred_check
        %p342 = pneg %p144
      $region42: #{decoder_only_forward.5} parent=39 // pred_check_branch
        %344 = sbr.rel (%p342) target = $region44
      $region43: #{decoder_only_forward.5} parent=39 // pred_region
        _
      $region44: #{decoder_only_forward.5} parent=39 // pred_fallthru
        _
    $region40: #{decoder_only_forward.5} parent=5 // pred_fallthru
      _
    %p345 = scmp.le.s32.totalorder 2, %s11
    // Predicated region
    $region45: #{decoder_only_forward.5} parent=5 // pred_check
      %p346 = pneg %p345
    $region46: #{decoder_only_forward.5} parent=5 // pred_check_branch
      %348 = sbr.rel (%p346) target = $region48
    $region47: #{decoder_only_forward.5} parent=5 // pred_region
      %s349 = ssub.s32 %s11, 2
      // Predicated region
      $region49: #{decoder_only_forward.5} parent=47 // pred_check
        %p350 = pneg %p150
      $region50: #{decoder_only_forward.5} parent=47 // pred_check_branch
        %352 = sbr.rel (%p350) target = $region52
      $region51: #{decoder_only_forward.5} parent=47 // pred_region
        %p353 = scmp.lt.s32.totalorder %s17, 1
        %s354 = scalar_select %p353, %s17, 1
        %s355 = smul.addr %s354, 8
        %s356 = scalar_lea.vmem %s5, %s355
      $region52: #{decoder_only_forward.5} parent=47 // pred_fallthru
        _
    $region48: #{decoder_only_forward.5} parent=5 // pred_fallthru
      _
  $region6: #{decoder_only_forward.5} parent=0 // loop_footer
    %s15 = sadd.s32 1, %s11
  $region7: #{decoder_only_forward.5} parent=0 // loop_footer_branch
    %10 = sbr.rel target = $region3
  $region8: #{decoder_only_forward.5} parent=0 // loop_exit
    _

// kernel: decoder_only_forward.4
$region0: #{decoder_only_forward.4}
  #allocation0 [shape = 'u32[]', space=smem, size = 0x4, offset = 0x4, fixed_abs, tag = 'smem constant byte address 0x4 - core index']
  #allocation1 [shape = 'u32[144,128]{1,0:T(1,128)}', space=vmem, size = 0x12000, scoped, tag = 'internal scratch']
  %s0 = inlined_call_operand.vmem [shape: f32[2,8,32], index: 0, kind: input, shape index: {}]
  %s1 = inlined_call_operand.vmem [shape: f32[32,96], index: 1, kind: input, shape index: {}]
  %s2 = inlined_call_operand.vmem [shape: f32[1,96], index: 2, kind: input, shape index: {}]
  %s3 = inlined_call_operand.vmem [shape: f32[32,32], index: 3, kind: input, shape index: {}]
  %s4 = inlined_call_operand.vmem [shape: f32[1,32], index: 4, kind: input, shape index: {}]
  %s5 = inlined_call_operand.vmem [shape: f32[1,32], index: 5, kind: input, shape index: {}]
  %s6 = inlined_call_operand.vmem [shape: f32[1,32], index: 6, kind: input, shape index: {}]
  %s7 = inlined_call_operand.vmem [shape: f32[32,64], index: 7, kind: input, shape index: {}]
  %s8 = inlined_call_operand.vmem [shape: f32[1,64], index: 8, kind: input, shape index: {}]
  %s9 = inlined_call_operand.vmem [shape: f32[64,32], index: 9, kind: input, shape index: {}]
  %s10 = inlined_call_operand.vmem [shape: f32[1,32], index: 10, kind: input, shape index: {}]
  %s11 = inlined_call_operand.vmem [shape: f32[1,32], index: 11, kind: input, shape index: {}]
  %s12 = inlined_call_operand.vmem [shape: f32[1,32], index: 12, kind: input, shape index: {}]
  %s13 = inlined_call_operand.vmem [shape: f32[2,8,32], index: 13, kind: output, shape index: {0}]
  %s14 = inlined_call_operand.hbm [shape: f32[2,4,8,8], index: 14, kind: output, shape index: {1}]
  %15 = xla_tuple %s13, %s14
  %s16 = sld [smem:[#allocation0]]
  $region93: #{decoder_only_forward.4} parent=0
    _
  %s18 = ssub.s32 1, %s16
  %s19 = scalar_select 0, %s18, %s16
  $region1: #{decoder_only_forward.4} parent=0
    #allocation2 [shape = 'u8[32768]{0}', space=vmem, size = 0x8000, scoped, tag = 'output window, operand 1']
    #allocation3 [shape = 's32[2]{0}', space=sflag, size = 0x8, scoped, tag = 'scoped memory for decoder_only_forward.4']
    %20 = vsyncpa [#allocation3], 0
    %s21 = scalar_lea.sflag [#allocation3], 1
    %22 = vsyncpa %s21, 0
    loop: start=0, step=1, limit=4
    $region2: #{decoder_only_forward.4} parent=1 // loop_pre_header
      _
    $region3: #{decoder_only_forward.4} parent=1 // loop_header
      %s24 = sphi 0, %s28
      %p25 = scmp.ge.s32.totalorder %s24, 4
      %s34 = sphi 0, %s36
      %s37 = sphi 0, %s34
      %s38 = sphi 0, %s37
      %s54 = sphi 0, %s38
      %s58 = sphi 0, %s58
      %s60 = sphi 0, %s58
      %s61 = sphi 0, %s60
      %s75 = sphi 0, %s61
      %s79 = sphi 0, %s79
      %s81 = sphi 0, %s79
      %s82 = sphi 0, %s81
      %s96 = sphi 0, %s82
      %s100 = sphi 0, %s100
      %s102 = sphi 0, %s100
      %s103 = sphi 0, %s102
      %s117 = sphi 0, %s103
      %s121 = sphi 0, %s121
      %s123 = sphi 0, %s121
      %s124 = sphi 0, %s123
      %s138 = sphi 0, %s124
      %s142 = sphi 0, %s142
      %s144 = sphi 0, %s142
      %s145 = sphi 0, %s144
      %s159 = sphi 0, %s145
      %s163 = sphi 0, %s163
      %s165 = sphi 0, %s163
      %s166 = sphi 0, %s165
      %s180 = sphi 0, %s166
      %s184 = sphi 0, %s184
      %s186 = sphi 0, %s184
      %s187 = sphi 0, %s186
      %s201 = sphi 0, %s187
      %s205 = sphi 0, %s205
      %s207 = sphi 0, %s205
      %s208 = sphi 0, %s207
      %s222 = sphi 0, %s208
      %s226 = sphi 0, %s226
      %s228 = sphi 0, %s226
      %s229 = sphi 0, %s228
      %s243 = sphi 0, %s229
      %s247 = sphi 0, %s247
      %s249 = sphi 0, %s247
      %s250 = sphi 0, %s249
      %s264 = sphi 0, %s250
      %s268 = sphi 0, %s268
      %s270 = sphi 0, %s268
      %s271 = sphi 0, %s270
      %s285 = sphi 0, %s271
      %s289 = sphi 0, %s289
      %s291 = sphi 0, %s289
      %s292 = sphi 0, %s291
      %s306 = sphi 0, %s292
      %s312 = sphi 0, %s314
      %s315 = sphi 0, %s312
      %s316 = sphi 0, %s315
      %s332 = sphi 0, %s316
      %s338 = sphi 0, %s340
      %s341 = sphi 0, %s338
      %s342 = sphi 0, %s341
      %s358 = sphi 0, %s342
    $region4: #{decoder_only_forward.4} parent=1 // loop_header_branch
      %27 = sbr.rel (%p25) target = $region8
    $region5: #{decoder_only_forward.4} parent=1 // loop_body
      %s29 = ssub.s32 %s24, 1
      %s30 = ssub.s32 %s24, 2
      %s31 = sadd.s32 %s24, 1
      %s32 = ssub.s32 %s24, %s31
      %p33 = scmp.eq.s32.totalorder %s32, 0
      %s35 = sadd.s32 %s34, 1
      %s36 = scalar_select %p33, %s34, %s35
      %p39 = pneg %p33
      %p40 = scmp.eq.s32.totalorder %s24, 1
      %p41 = por %p39, %p40
      %p42 = scmp.ne.s32.totalorder %s34, %s37
      %p43 = scmp.eq.s32.totalorder %s24, 0
      %p44 = por %p42, %p43
      %p45 = scmp.ne.s32.totalorder %s34, %s37
      %p46 = scmp.eq.s32.totalorder %s29, 1
      %p47 = por %p45, %p46
      %p48 = scmp.ne.s32.totalorder %s37, %s38
      %p49 = scmp.eq.s32.totalorder %s29, 0
      %p50 = por %p48, %p49
      %p51 = scmp.ne.s32.totalorder %s37, %s38
      %p52 = scmp.eq.s32.totalorder %s30, 1
      %p53 = por %p51, %p52
      %p55 = scmp.ne.s32.totalorder %s38, %s54
      %p56 = scmp.eq.s32.totalorder %s30, 0
      %p57 = por %p55, %p56
      %s59 = sadd.s32 %s58, 1
      %p62 = scmp.eq.s32.totalorder %s24, 1
      %p63 = scmp.ne.s32.totalorder %s58, %s60
      %p64 = scmp.eq.s32.totalorder %s24, 0
      %p65 = por %p63, %p64
      %p66 = scmp.ne.s32.totalorder %s58, %s60
      %p67 = scmp.eq.s32.totalorder %s29, 1
      %p68 = por %p66, %p67
      %p69 = scmp.ne.s32.totalorder %s60, %s61
      %p70 = scmp.eq.s32.totalorder %s29, 0
      %p71 = por %p69, %p70
      %p72 = scmp.ne.s32.totalorder %s60, %s61
      %p73 = scmp.eq.s32.totalorder %s30, 1
      %p74 = por %p72, %p73
      %p76 = scmp.ne.s32.totalorder %s61, %s75
      %p77 = scmp.eq.s32.totalorder %s30, 0
      %p78 = por %p76, %p77
      %s80 = sadd.s32 %s79, 1
      %p83 = scmp.eq.s32.totalorder %s24, 1
      %p84 = scmp.ne.s32.totalorder %s79, %s81
      %p85 = scmp.eq.s32.totalorder %s24, 0
      %p86 = por %p84, %p85
      %p87 = scmp.ne.s32.totalorder %s79, %s81
      %p88 = scmp.eq.s32.totalorder %s29, 1
      %p89 = por %p87, %p88
      %p90 = scmp.ne.s32.totalorder %s81, %s82
      %p91 = scmp.eq.s32.totalorder %s29, 0
      %p92 = por %p90, %p91
      %p93 = scmp.ne.s32.totalorder %s81, %s82
      %p94 = scmp.eq.s32.totalorder %s30, 1
      %p95 = por %p93, %p94
      %p97 = scmp.ne.s32.totalorder %s82, %s96
      %p98 = scmp.eq.s32.totalorder %s30, 0
      %p99 = por %p97, %p98
      %s101 = sadd.s32 %s100, 1
      %p104 = scmp.eq.s32.totalorder %s24, 1
      %p105 = scmp.ne.s32.totalorder %s100, %s102
      %p106 = scmp.eq.s32.totalorder %s24, 0
      %p107 = por %p105, %p106
      %p108 = scmp.ne.s32.totalorder %s100, %s102
      %p109 = scmp.eq.s32.totalorder %s29, 1
      %p110 = por %p108, %p109
      %p111 = scmp.ne.s32.totalorder %s102, %s103
      %p112 = scmp.eq.s32.totalorder %s29, 0
      %p113 = por %p111, %p112
      %p114 = scmp.ne.s32.totalorder %s102, %s103
      %p115 = scmp.eq.s32.totalorder %s30, 1
      %p116 = por %p114, %p115
      %p118 = scmp.ne.s32.totalorder %s103, %s117
      %p119 = scmp.eq.s32.totalorder %s30, 0
      %p120 = por %p118, %p119
      %s122 = sadd.s32 %s121, 1
      %p125 = scmp.eq.s32.totalorder %s24, 1
      %p126 = scmp.ne.s32.totalorder %s121, %s123
      %p127 = scmp.eq.s32.totalorder %s24, 0
      %p128 = por %p126, %p127
      %p129 = scmp.ne.s32.totalorder %s121, %s123
      %p130 = scmp.eq.s32.totalorder %s29, 1
      %p131 = por %p129, %p130
      %p132 = scmp.ne.s32.totalorder %s123, %s124
      %p133 = scmp.eq.s32.totalorder %s29, 0
      %p134 = por %p132, %p133
      %p135 = scmp.ne.s32.totalorder %s123, %s124
      %p136 = scmp.eq.s32.totalorder %s30, 1
      %p137 = por %p135, %p136
      %p139 = scmp.ne.s32.totalorder %s124, %s138
      %p140 = scmp.eq.s32.totalorder %s30, 0
      %p141 = por %p139, %p140
      %s143 = sadd.s32 %s142, 1
      %p146 = scmp.eq.s32.totalorder %s24, 1
      %p147 = scmp.ne.s32.totalorder %s142, %s144
      %p148 = scmp.eq.s32.totalorder %s24, 0
      %p149 = por %p147, %p148
      %p150 = scmp.ne.s32.totalorder %s142, %s144
      %p151 = scmp.eq.s32.totalorder %s29, 1
      %p152 = por %p150, %p151
      %p153 = scmp.ne.s32.totalorder %s144, %s145
      %p154 = scmp.eq.s32.totalorder %s29, 0
      %p155 = por %p153, %p154
      %p156 = scmp.ne.s32.totalorder %s144, %s145
      %p157 = scmp.eq.s32.totalorder %s30, 1
      %p158 = por %p156, %p157
      %p160 = scmp.ne.s32.totalorder %s145, %s159
      %p161 = scmp.eq.s32.totalorder %s30, 0
      %p162 = por %p160, %p161
      %s164 = sadd.s32 %s163, 1
      %p167 = scmp.eq.s32.totalorder %s24, 1
      %p168 = scmp.ne.s32.totalorder %s163, %s165
      %p169 = scmp.eq.s32.totalorder %s24, 0
      %p170 = por %p168, %p169
      %p171 = scmp.ne.s32.totalorder %s163, %s165
      %p172 = scmp.eq.s32.totalorder %s29, 1
      %p173 = por %p171, %p172
      %p174 = scmp.ne.s32.totalorder %s165, %s166
      %p175 = scmp.eq.s32.totalorder %s29, 0
      %p176 = por %p174, %p175
      %p177 = scmp.ne.s32.totalorder %s165, %s166
      %p178 = scmp.eq.s32.totalorder %s30, 1
      %p179 = por %p177, %p178
      %p181 = scmp.ne.s32.totalorder %s166, %s180
      %p182 = scmp.eq.s32.totalorder %s30, 0
      %p183 = por %p181, %p182
      %s185 = sadd.s32 %s184, 1
      %p188 = scmp.eq.s32.totalorder %s24, 1
      %p189 = scmp.ne.s32.totalorder %s184, %s186
      %p190 = scmp.eq.s32.totalorder %s24, 0
      %p191 = por %p189, %p190
      %p192 = scmp.ne.s32.totalorder %s184, %s186
      %p193 = scmp.eq.s32.totalorder %s29, 1
      %p194 = por %p192, %p193
      %p195 = scmp.ne.s32.totalorder %s186, %s187
      %p196 = scmp.eq.s32.totalorder %s29, 0
      %p197 = por %p195, %p196
      %p198 = scmp.ne.s32.totalorder %s186, %s187
      %p199 = scmp.eq.s32.totalorder %s30, 1
      %p200 = por %p198, %p199
      %p202 = scmp.ne.s32.totalorder %s187, %s201
      %p203 = scmp.eq.s32.totalorder %s30, 0
      %p204 = por %p202, %p203
      %s206 = sadd.s32 %s205, 1
      %p209 = scmp.eq.s32.totalorder %s24, 1
      %p210 = scmp.ne.s32.totalorder %s205, %s207
      %p211 = scmp.eq.s32.totalorder %s24, 0
      %p212 = por %p210, %p211
      %p213 = scmp.ne.s32.totalorder %s205, %s207
      %p214 = scmp.eq.s32.totalorder %s29, 1
      %p215 = por %p213, %p214
      %p216 = scmp.ne.s32.totalorder %s207, %s208
      %p217 = scmp.eq.s32.totalorder %s29, 0
      %p218 = por %p216, %p217
      %p219 = scmp.ne.s32.totalorder %s207, %s208
      %p220 = scmp.eq.s32.totalorder %s30, 1
      %p221 = por %p219, %p220
      %p223 = scmp.ne.s32.totalorder %s208, %s222
      %p224 = scmp.eq.s32.totalorder %s30, 0
      %p225 = por %p223, %p224
      %s227 = sadd.s32 %s226, 1
      %p230 = scmp.eq.s32.totalorder %s24, 1
      %p231 = scmp.ne.s32.totalorder %s226, %s228
      %p232 = scmp.eq.s32.totalorder %s24, 0
      %p233 = por %p231, %p232
      %p234 = scmp.ne.s32.totalorder %s226, %s228
      %p235 = scmp.eq.s32.totalorder %s29, 1
      %p236 = por %p234, %p235
      %p237 = scmp.ne.s32.totalorder %s228, %s229
      %p238 = scmp.eq.s32.totalorder %s29, 0
      %p239 = por %p237, %p238
      %p240 = scmp.ne.s32.totalorder %s228, %s229
      %p241 = scmp.eq.s32.totalorder %s30, 1
      %p242 = por %p240, %p241
      %p244 = scmp.ne.s32.totalorder %s229, %s243
      %p245 = scmp.eq.s32.totalorder %s30, 0
      %p246 = por %p244, %p245
      %s248 = sadd.s32 %s247, 1
      %p251 = scmp.eq.s32.totalorder %s24, 1
      %p252 = scmp.ne.s32.totalorder %s247, %s249
      %p253 = scmp.eq.s32.totalorder %s24, 0
      %p254 = por %p252, %p253
      %p255 = scmp.ne.s32.totalorder %s247, %s249
      %p256 = scmp.eq.s32.totalorder %s29, 1
      %p257 = por %p255, %p256
      %p258 = scmp.ne.s32.totalorder %s249, %s250
      %p259 = scmp.eq.s32.totalorder %s29, 0
      %p260 = por %p258, %p259
      %p261 = scmp.ne.s32.totalorder %s249, %s250
      %p262 = scmp.eq.s32.totalorder %s30, 1
      %p263 = por %p261, %p262
      %p265 = scmp.ne.s32.totalorder %s250, %s264
      %p266 = scmp.eq.s32.totalorder %s30, 0
      %p267 = por %p265, %p266
      %s269 = sadd.s32 %s268, 1
      %p272 = scmp.eq.s32.totalorder %s24, 1
      %p273 = scmp.ne.s32.totalorder %s268, %s270
      %p274 = scmp.eq.s32.totalorder %s24, 0
      %p275 = por %p273, %p274
      %p276 = scmp.ne.s32.totalorder %s268, %s270
      %p277 = scmp.eq.s32.totalorder %s29, 1
      %p278 = por %p276, %p277
      %p279 = scmp.ne.s32.totalorder %s270, %s271
      %p280 = scmp.eq.s32.totalorder %s29, 0
      %p281 = por %p279, %p280
      %p282 = scmp.ne.s32.totalorder %s270, %s271
      %p283 = scmp.eq.s32.totalorder %s30, 1
      %p284 = por %p282, %p283
      %p286 = scmp.ne.s32.totalorder %s271, %s285
      %p287 = scmp.eq.s32.totalorder %s30, 0
      %p288 = por %p286, %p287
      %s290 = sadd.s32 %s289, 1
      %p293 = scmp.eq.s32.totalorder %s24, 1
      %p294 = scmp.ne.s32.totalorder %s289, %s291
      %p295 = scmp.eq.s32.totalorder %s24, 0
      %p296 = por %p294, %p295
      %p297 = scmp.ne.s32.totalorder %s289, %s291
      %p298 = scmp.eq.s32.totalorder %s29, 1
      %p299 = por %p297, %p298
      %p300 = scmp.ne.s32.totalorder %s291, %s292
      %p301 = scmp.eq.s32.totalorder %s29, 0
      %p302 = por %p300, %p301
      %p303 = scmp.ne.s32.totalorder %s291, %s292
      %p304 = scmp.eq.s32.totalorder %s30, 1
      %p305 = por %p303, %p304
      %p307 = scmp.ne.s32.totalorder %s292, %s306
      %p308 = scmp.eq.s32.totalorder %s30, 0
      %p309 = por %p307, %p308
      %s310 = ssub.s32 %s24, %s31
      %p311 = scmp.eq.s32.totalorder %s310, 0
      %s313 = sadd.s32 %s312, 1
      %s314 = scalar_select %p311, %s312, %s313
      %p317 = pneg %p311
      %p318 = scmp.eq.s32.totalorder %s24, 1
      %p319 = por %p317, %p318
      %p320 = scmp.ne.s32.totalorder %s312, %s315
      %p321 = scmp.eq.s32.totalorder %s24, 0
      %p322 = por %p320, %p321
      %p323 = scmp.ne.s32.totalorder %s312, %s315
      %p324 = scmp.eq.s32.totalorder %s29, 1
      %p325 = por %p323, %p324
      %p326 = scmp.ne.s32.totalorder %s315, %s316
      %p327 = scmp.eq.s32.totalorder %s29, 0
      %p328 = por %p326, %p327
      %p329 = scmp.ne.s32.totalorder %s315, %s316
      %p330 = scmp.eq.s32.totalorder %s30, 1
      %p331 = por %p329, %p330
      %p333 = scmp.ne.s32.totalorder %s316, %s332
      %p334 = scmp.eq.s32.totalorder %s30, 0
      %p335 = por %p333, %p334
      %s336 = ssub.s32 %s24, %s31
      %p337 = scmp.eq.s32.totalorder %s336, 0
      %s339 = sadd.s32 %s338, 1
      %s340 = scalar_select %p337, %s338, %s339
      %p343 = pneg %p337
      %p344 = scmp.eq.s32.totalorder %s24, 1
      %p345 = por %p343, %p344
      %p346 = scmp.ne.s32.totalorder %s338, %s341
      %p347 = scmp.eq.s32.totalorder %s24, 0
      %p348 = por %p346, %p347
      %p349 = scmp.ne.s32.totalorder %s338, %s341
      %p350 = scmp.eq.s32.totalorder %s29, 1
      %p351 = por %p349, %p350
      %p352 = scmp.ne.s32.totalorder %s341, %s342
      %p353 = scmp.eq.s32.totalorder %s29, 0
      %p354 = por %p352, %p353
      %p355 = scmp.ne.s32.totalorder %s341, %s342
      %p356 = scmp.eq.s32.totalorder %s30, 1
      %p357 = por %p355, %p356
      %p359 = scmp.ne.s32.totalorder %s342, %s358
      %p360 = scmp.eq.s32.totalorder %s30, 0
      %p361 = por %p359, %p360
      %p362 = scmp.le.s32.totalorder 1, %s24
      %p363 = scmp.lt.s32.totalorder %s24, 3
      %p364 = pnand %p362, %p363
      %p365 = pneg %p364
      // Predicated region
      $region9: #{decoder_only_forward.4} parent=5 // pred_check
        _
      $region10: #{decoder_only_forward.4} parent=5 // pred_check_branch
        %367 = sbr.rel (%p364) target = $region12
      $region11: #{decoder_only_forward.4} parent=5 // pred_region
        %s368 = ssub.s32 %s24, 1
        // Predicated region
        $region13: #{decoder_only_forward.4} parent=11 // pred_check
          %p369 = pneg %p71
        $region14: #{decoder_only_forward.4} parent=11 // pred_check_branch
          %371 = sbr.rel (%p369) target = $region16
        $region15: #{decoder_only_forward.4} parent=11 // pred_region
          _
        $region16: #{decoder_only_forward.4} parent=11 // pred_fallthru
          _
        // Predicated region
        $region17: #{decoder_only_forward.4} parent=11 // pred_check
          %p372 = pneg %p92
        $region18: #{decoder_only_forward.4} parent=11 // pred_check_branch
          %374 = sbr.rel (%p372) target = $region20
        $region19: #{decoder_only_forward.4} parent=11 // pred_region
          _
        $region20: #{decoder_only_forward.4} parent=11 // pred_fallthru
          _
        // Predicated region
        $region21: #{decoder_only_forward.4} parent=11 // pred_check
          %p375 = pneg %p113
        $region22: #{decoder_only_forward.4} parent=11 // pred_check_branch
          %377 = sbr.rel (%p375) target = $region24
        $region23: #{decoder_only_forward.4} parent=11 // pred_region
          _
        $region24: #{decoder_only_forward.4} parent=11 // pred_fallthru
          _
        // Predicated region
        $region25: #{decoder_only_forward.4} parent=11 // pred_check
          %p378 = pneg %p134
        $region26: #{decoder_only_forward.4} parent=11 // pred_check_branch
          %380 = sbr.rel (%p378) target = $region28
        $region27: #{decoder_only_forward.4} parent=11 // pred_region
          _
        $region28: #{decoder_only_forward.4} parent=11 // pred_fallthru
          _
        // Predicated region
        $region29: #{decoder_only_forward.4} parent=11 // pred_check
          %p381 = pneg %p155
        $region30: #{decoder_only_forward.4} parent=11 // pred_check_branch
          %383 = sbr.rel (%p381) target = $region32
        $region31: #{decoder_only_forward.4} parent=11 // pred_region
          _
        $region32: #{decoder_only_forward.4} parent=11 // pred_fallthru
          _
        // Predicated region
        $region33: #{decoder_only_forward.4} parent=11 // pred_check
          %p384 = pneg %p176
        $region34: #{decoder_only_forward.4} parent=11 // pred_check_branch
          %386 = sbr.rel (%p384) target = $region36
        $region35: #{decoder_only_forward.4} parent=11 // pred_region
          _
        $region36: #{decoder_only_forward.4} parent=11 // pred_fallthru
          _
        // Predicated region
        $region37: #{decoder_only_forward.4} parent=11 // pred_check
          %p387 = pneg %p197
        $region38: #{decoder_only_forward.4} parent=11 // pred_check_branch
          %389 = sbr.rel (%p387) target = $region40
        $region39: #{decoder_only_forward.4} parent=11 // pred_region
          _
        $region40: #{decoder_only_forward.4} parent=11 // pred_fallthru
          _
        // Predicated region
        $region41: #{decoder_only_forward.4} parent=11 // pred_check
          %p390 = pneg %p218
        $region42: #{decoder_only_forward.4} parent=11 // pred_check_branch
          %392 = sbr.rel (%p390) target = $region44
        $region43: #{decoder_only_forward.4} parent=11 // pred_region
          _
        $region44: #{decoder_only_forward.4} parent=11 // pred_fallthru
          _
        // Predicated region
        $region45: #{decoder_only_forward.4} parent=11 // pred_check
          %p393 = pneg %p239
        $region46: #{decoder_only_forward.4} parent=11 // pred_check_branch
          %395 = sbr.rel (%p393) target = $region48
        $region47: #{decoder_only_forward.4} parent=11 // pred_region
          _
        $region48: #{decoder_only_forward.4} parent=11 // pred_fallthru
          _
        // Predicated region
        $region49: #{decoder_only_forward.4} parent=11 // pred_check
          %p396 = pneg %p260
        $region50: #{decoder_only_forward.4} parent=11 // pred_check_branch
          %398 = sbr.rel (%p396) target = $region52
        $region51: #{decoder_only_forward.4} parent=11 // pred_region
          _
        $region52: #{decoder_only_forward.4} parent=11 // pred_fallthru
          _
        // Predicated region
        $region53: #{decoder_only_forward.4} parent=11 // pred_check
          %p399 = pneg %p281
        $region54: #{decoder_only_forward.4} parent=11 // pred_check_branch
          %401 = sbr.rel (%p399) target = $region56
        $region55: #{decoder_only_forward.4} parent=11 // pred_region
          _
        $region56: #{decoder_only_forward.4} parent=11 // pred_fallthru
          _
        // Predicated region
        $region57: #{decoder_only_forward.4} parent=11 // pred_check
          %p402 = pneg %p302
        $region58: #{decoder_only_forward.4} parent=11 // pred_check_branch
          %404 = sbr.rel (%p402) target = $region60
        $region59: #{decoder_only_forward.4} parent=11 // pred_region
          _
        $region60: #{decoder_only_forward.4} parent=11 // pred_fallthru
          _
      $region12: #{decoder_only_forward.4} parent=5 // pred_fallthru
        _
      %p405 = scmp.lt.s32.totalorder %s24, 2
      // Predicated region
      $region61: #{decoder_only_forward.4} parent=5 // pred_check
        %p406 = pneg %p405
      $region62: #{decoder_only_forward.4} parent=5 // pred_check_branch
        %408 = sbr.rel (%p406) target = $region64
      $region63: #{decoder_only_forward.4} parent=5 // pred_region
        // Predicated region
        $region65: #{decoder_only_forward.4} parent=63 // pred_check
          %p409 = pneg %p44
        $region66: #{decoder_only_forward.4} parent=63 // pred_check_branch
          %411 = sbr.rel (%p409) target = $region68
        $region67: #{decoder_only_forward.4} parent=63 // pred_region
          %p412 = scmp.lt.s32.totalorder %s24, 1
          %s413 = scalar_select %p412, %s24, 1
          %s414 = smul.addr %s413, 8
          %s415 = scalar_lea.vmem %s0, %s414
        $region68: #{decoder_only_forward.4} parent=63 // pred_fallthru
          _
      $region64: #{decoder_only_forward.4} parent=5 // pred_fallthru
        _
      %p416 = scmp.le.s32.totalorder 1, %s24
      %p417 = scmp.lt.s32.totalorder %s24, 3
      %p418 = pnand %p416, %p417
      %p419 = pneg %p418
      // Predicated region
      $region69: #{decoder_only_forward.4} parent=5 // pred_check
        _
      $region70: #{decoder_only_forward.4} parent=5 // pred_check_branch
        %421 = sbr.rel (%p418) target = $region72
      $region71: #{decoder_only_forward.4} parent=5 // pred_region
        %s422 = ssub.s32 %s24, 1
        %p423 = scmp.lt.s32.totalorder %s29, 1
        %s424 = scalar_select %p423, %s29, 1
        %s425 = smul.addr %s424, 8
        %s426 = scalar_lea.vmem %s0, %s425
        %p427 = pneg %p50
        %p428 = pneg %p47
        %p429 = pneg %p71
        %p430 = pneg %p68
        %p431 = pneg %p92
        %p432 = pneg %p89
        %p433 = pneg %p113
        %p434 = pneg %p110
        %p435 = pneg %p134
        %p436 = pneg %p131
        %p437 = pneg %p155
        %p438 = pneg %p152
        %p439 = pneg %p176
        %p440 = pneg %p173
        %p441 = pneg %p197
        %p442 = pneg %p194
        %p443 = pneg %p218
        %p444 = pneg %p215
        %p445 = pneg %p239
        %p446 = pneg %p236
        %p447 = pneg %p260
        %p448 = pneg %p257
        %p449 = pneg %p281
        %p450 = pneg %p278
        %p451 = pneg %p302
        %p452 = pneg %p299
        %p453 = pneg %p328
        %p454 = pneg %p325
        %p455 = scmp.lt.s32.totalorder %s29, 1
        %s456 = scalar_select %p455, %s29, 1
        %s457 = smul.addr %s456, 8
        %s458 = scalar_lea.vmem %s13, %s457
        %p459 = pneg %p354
        %p460 = pneg %p351
        %s461 = sand.u32 %s341, 1
        %s462 = scalar_lea.sflag [#allocation3], %s461
        %s463 = sand.u32 %s341, 1
        %s464 = smul.addr %s463, 32
        %s465 = scalar_lea.vmem [#allocation2], %s464
        %p466 = scmp.lt.s32.totalorder %s29, 1
        %s467 = scalar_select %p466, %s29, 1
        %s468 = smul.addr %s467, 8
        %s469 = scalar_lea.vmem %s0, %s468
        %p470 = scmp.lt.s32.totalorder %s29, 1
        %s471 = scalar_select %p470, %s29, 1
        %s472 = smul.addr %s471, 8
        %s473 = scalar_lea.vmem %s13, %s472
        %v474 = vld [vmem:[%s469] sm:$0xff]
        %v475 = vld [vmem:[%s1] sm:$0xff]
        %v476 = vld [vmem:[%s1 + $0x8] sm:$0xff]
        %v477 = vld [vmem:[%s1 + $0x10] sm:$0xff]
        %v478 = vld [vmem:[%s1 + $0x18] sm:$0xff]
        %v479 = vld [vmem:[%s2] sm:$0x1]
        %v481 = vlaneseq
        %v482 = vshrl.u32 %v481, 7
        %v483 = vsub.s32 0, %v482
        %v484 = vrot.slane %v479, %v483
        %vm486 = vcmask 261120
        %v488 = vsel %vm486, %v474, 0
        %490 = vmatprep.subr.mxu0 0.0
        %491 = vmatpush1.msra.mxu0 0.0
        %492 = vmatprep.subr.mxu0 0.0
        %493 = vmatpush1.msra.mxu0 0.0
        %494 = vmatprep.subr.mxu0 0.0
        %495 = vmatpush1.msra.mxu0 0.0
        %496 = vmatprep.subr.mxu0 0.0
        %497 = vmatpush1.msra.mxu0 0.0
        %498 = vmatprep.subr.mxu0 0.0
        %499 = vmatpush1.msra.mxu0 0.0
        %500 = vmatprep.subr.mxu0 0.0
        %501 = vmatpush1.msra.mxu0 0.0
        %502 = vmatprep.subr.mxu0 0.0
        %503 = vmatpush1.msra.mxu0 0.0
        %504 = vmatprep.subr.mxu0 0.0
        %505 = vmatpush1.msra.mxu0 0.0
        %506 = vmatprep.subr.mxu0 0.0
        %507 = vmatpush1.msra.mxu0 0.0
        %508 = vmatprep.subr.mxu0 0.0
        %509 = vmatpush1.msra.mxu0 0.0
        %510 = vmatprep.subr.mxu0 0.0
        %511 = vmatpush1.msra.mxu0 0.0
        %512 = vmatprep.subr.mxu0 0.0
        %513 = vmatpush1.msra.mxu0 0.0
        %514 = vmatprep.subr.mxu0 0.0
        %515 = vmatpush1.msra.mxu0 %v478
        %516 = vmatprep.subr.mxu0 0.0
        %517 = vmatpush1.msra.mxu0 %v477
        %518 = vmatprep.subr.mxu0 0.0
        %519 = vmatpush1.msra.mxu0 %v476
        %520 = vmatprep.subr.mxu0 0.0
        %521 = vmatpush1.msra.mxu0 %v475
        %522 = vmatprep.subr.mxu0 0.0
        %523 = vmatpush2.msra.mxu0 0.0
        %524 = vmatprep.subr.mxu0 0.0
        %525 = vmatpush2.msra.mxu0 0.0
        %526 = vmatprep.subr.mxu0 0.0
        %527 = vmatpush2.msra.mxu0 0.0
        %528 = vmatprep.subr.mxu0 0.0
        %529 = vmatpush2.msra.mxu0 0.0
        %530 = vmatprep.subr.mxu0 0.0
        %531 = vmatpush2.msra.mxu0 0.0
        %532 = vmatprep.subr.mxu0 0.0
        %533 = vmatpush2.msra.mxu0 0.0
        %534 = vmatprep.subr.mxu0 0.0
        %535 = vmatpush2.msra.mxu0 0.0
        %536 = vmatprep.subr.mxu0 0.0
        %537 = vmatpush2.msra.mxu0 0.0
        %538 = vmatprep.subr.mxu0 0.0
        %539 = vmatpush2.msra.mxu0 0.0
        %540 = vmatprep.subr.mxu0 0.0
        %541 = vmatpush2.msra.mxu0 0.0
        %542 = vmatprep.subr.mxu0 0.0
        %543 = vmatpush2.msra.mxu0 0.0
        %544 = vmatprep.subr.mxu0 0.0
        %545 = vmatpush2.msra.mxu0 0.0
        %546 = vmatprep.subr.mxu0 0.0
        %547 = vmatpush2.msra.mxu0 0.0
        %548 = vmatprep.subr.mxu0 0.0
        %549 = vmatpush2.msra.mxu0 0.0
        %550 = vmatprep.subr.mxu0 0.0
        %551 = vmatpush2.msra.mxu0 0.0
        %552 = vmatprep.subr.mxu0 0.0
        %553 = vmatpush2.msra.mxu0 0.0
        %554 = vmatprep.mubr.f32.mxu0 0.0
        %555 = vmatmul.mubr.f32.gmra.mxu0 %v488
        %v556 = vpop.f32.mrf.mxu0
        %v557 = vadd.f32 %v484, %v556
        %v558 = vpop.f32.mrf.mxu0
        %559 = vdwg.mxu0
        %561 = vrot.lane.b32.xlu0 %v557, 96
        %v562 = vpop.permute.xlu0 %561
        %vm563 = vcmask 64512
        %v564 = vsel %vm563, %v557, 0
        %v566 = vsel %vm563, %v562, 0
        %568 = vmatprep.subr.mxu0 0.0
        %569 = vmatpush1.xpose.msra.mxu0 0.0
        %570 = vmatprep.subr.mxu0 0.0
        %571 = vmatpush1.xpose.msra.mxu0 0.0
        %572 = vmatprep.subr.mxu0 0.0
        %573 = vmatpush1.xpose.msra.mxu0 0.0
        %574 = vmatprep.subr.mxu0 0.0
        %575 = vmatpush1.xpose.msra.mxu0 0.0
        %576 = vmatprep.subr.mxu0 0.0
        %577 = vmatpush1.xpose.msra.mxu0 0.0
        %578 = vmatprep.subr.mxu0 0.0
        %579 = vmatpush1.xpose.msra.mxu0 0.0
        %580 = vmatprep.subr.mxu0 0.0
        %581 = vmatpush1.xpose.msra.mxu0 0.0
        %582 = vmatprep.subr.mxu0 0.0
        %583 = vmatpush1.xpose.msra.mxu0 0.0
        %584 = vmatprep.subr.mxu0 0.0
        %585 = vmatpush1.xpose.msra.mxu0 0.0
        %586 = vmatprep.subr.mxu0 0.0
        %587 = vmatpush1.xpose.msra.mxu0 0.0
        %588 = vmatprep.subr.mxu0 0.0
        %589 = vmatpush1.xpose.msra.mxu0 0.0
        %590 = vmatprep.subr.mxu0 0.0
        %591 = vmatpush1.xpose.msra.mxu0 0.0
        %592 = vmatprep.subr.mxu0 0.0
        %593 = vmatpush1.xpose.msra.mxu0 0.0
        %594 = vmatprep.subr.mxu0 0.0
        %595 = vmatpush1.xpose.msra.mxu0 0.0
        %596 = vmatprep.subr.mxu0 0.0
        %597 = vmatpush1.xpose.msra.mxu0 0.0
        %598 = vmatprep.subr.mxu0 0.0
        %599 = vmatpush1.xpose.msra.mxu0 %v566
        %600 = vmatprep.subr.mxu0 0.0
        %601 = vmatpush2.xpose.msra.mxu0 0.0
        %602 = vmatprep.subr.mxu0 0.0
        %603 = vmatpush2.xpose.msra.mxu0 0.0
        %604 = vmatprep.subr.mxu0 0.0
        %605 = vmatpush2.xpose.msra.mxu0 0.0
        %606 = vmatprep.subr.mxu0 0.0
        %607 = vmatpush2.xpose.msra.mxu0 0.0
        %608 = vmatprep.subr.mxu0 0.0
        %609 = vmatpush2.xpose.msra.mxu0 0.0
        %610 = vmatprep.subr.mxu0 0.0
        %611 = vmatpush2.xpose.msra.mxu0 0.0
        %612 = vmatprep.subr.mxu0 0.0
        %613 = vmatpush2.xpose.msra.mxu0 0.0
        %614 = vmatprep.subr.mxu0 0.0
        %615 = vmatpush2.xpose.msra.mxu0 0.0
        %616 = vmatprep.subr.mxu0 0.0
        %617 = vmatpush2.xpose.msra.mxu0 0.0
        %618 = vmatprep.subr.mxu0 0.0
        %619 = vmatpush2.xpose.msra.mxu0 0.0
        %620 = vmatprep.subr.mxu0 0.0
        %621 = vmatpush2.xpose.msra.mxu0 0.0
        %622 = vmatprep.subr.mxu0 0.0
        %623 = vmatpush2.xpose.msra.mxu0 0.0
        %624 = vmatprep.subr.mxu0 0.0
        %625 = vmatpush2.xpose.msra.mxu0 0.0
        %626 = vmatprep.subr.mxu0 0.0
        %627 = vmatpush2.xpose.msra.mxu0 0.0
        %628 = vmatprep.subr.mxu0 0.0
        %629 = vmatpush2.xpose.msra.mxu0 0.0
        %630 = vmatprep.subr.mxu0 0.0
        %631 = vmatpush2.xpose.msra.mxu0 0.0
        %632 = vmatprep.mubr.f32.mxu0 0.0
        %633 = vmatmul.mubr.f32.gmra.mxu0 %v564
        %v634 = vpop.f32.mrf.mxu0
        %v635 = vadd.f32 0.0, %v634
        %v636 = vpop.f32.mrf.mxu0
        %637 = vdwg.mxu0
        %v638 = vsel %vm563, %v635, -inf
        %639 = vmax.xlane.f32.xlu0 %v638
        %v640 = vpop.xlane.xlu0 %639
        %v641 = vsub.f32 %v635, %v640
        %v642 = vmul.f32 %v641, 1.442695
        %v643 = vpow.pop %v642
        %v644 = vsel %vm563, %v643, 0.0
        %645 = vadd.xlane.f32.xlu0 %v644
        %v646 = vpop.xlane.xlu0 %645
        %v647 = vrcp.pop %v646
        %v648 = vmul.f32 %v643, %v647
        %649 = vst.msk [vmem:[%s465] sm:$0xff] %vm563, %v648
        %650 = vrot.lane.b32.xlu0 %v557, 64
        %v651 = vpop.permute.xlu0 %650
        %v654 = vsel %vm563, %v648, 0
        %656 = vmatprep.subr.mxu0 0.0
        %657 = vmatpush1.msra.mxu0 0.0
        %658 = vmatprep.subr.mxu0 0.0
        %659 = vmatpush1.msra.mxu0 0.0
        %660 = vmatprep.subr.mxu0 0.0
        %661 = vmatpush1.msra.mxu0 0.0
        %662 = vmatprep.subr.mxu0 0.0
        %663 = vmatpush1.msra.mxu0 0.0
        %664 = vmatprep.subr.mxu0 0.0
        %665 = vmatpush1.msra.mxu0 0.0
        %666 = vmatprep.subr.mxu0 0.0
        %667 = vmatpush1.msra.mxu0 0.0
        %668 = vmatprep.subr.mxu0 0.0
        %669 = vmatpush1.msra.mxu0 0.0
        %670 = vmatprep.subr.mxu0 0.0
        %671 = vmatpush1.msra.mxu0 0.0
        %672 = vmatprep.subr.mxu0 0.0
        %673 = vmatpush1.msra.mxu0 0.0
        %674 = vmatprep.subr.mxu0 0.0
        %675 = vmatpush1.msra.mxu0 0.0
        %676 = vmatprep.subr.mxu0 0.0
        %677 = vmatpush1.msra.mxu0 0.0
        %678 = vmatprep.subr.mxu0 0.0
        %679 = vmatpush1.msra.mxu0 0.0
        %680 = vmatprep.subr.mxu0 0.0
        %681 = vmatpush1.msra.mxu0 0.0
        %682 = vmatprep.subr.mxu0 0.0
        %683 = vmatpush1.msra.mxu0 0.0
        %684 = vmatprep.subr.mxu0 0.0
        %685 = vmatpush1.msra.mxu0 0.0
        %686 = vmatprep.subr.mxu0 0.0
        %687 = vmatpush1.msra.mxu0 %v651
        %688 = vmatprep.subr.mxu0 0.0
        %689 = vmatpush2.msra.mxu0 0.0
        %690 = vmatprep.subr.mxu0 0.0
        %691 = vmatpush2.msra.mxu0 0.0
        %692 = vmatprep.subr.mxu0 0.0
        %693 = vmatpush2.msra.mxu0 0.0
        %694 = vmatprep.subr.mxu0 0.0
        %695 = vmatpush2.msra.mxu0 0.0
        %696 = vmatprep.subr.mxu0 0.0
        %697 = vmatpush2.msra.mxu0 0.0
        %698 = vmatprep.subr.mxu0 0.0
        %699 = vmatpush2.msra.mxu0 0.0
        %700 = vmatprep.subr.mxu0 0.0
        %701 = vmatpush2.msra.mxu0 0.0
        %702 = vmatprep.subr.mxu0 0.0
        %703 = vmatpush2.msra.mxu0 0.0
        %704 = vmatprep.subr.mxu0 0.0
        %705 = vmatpush2.msra.mxu0 0.0
        %706 = vmatprep.subr.mxu0 0.0
        %707 = vmatpush2.msra.mxu0 0.0
        %708 = vmatprep.subr.mxu0 0.0
        %709 = vmatpush2.msra.mxu0 0.0
        %710 = vmatprep.subr.mxu0 0.0
        %711 = vmatpush2.msra.mxu0 0.0
        %712 = vmatprep.subr.mxu0 0.0
        %713 = vmatpush2.msra.mxu0 0.0
        %714 = vmatprep.subr.mxu0 0.0
        %715 = vmatpush2.msra.mxu0 0.0
        %716 = vmatprep.subr.mxu0 0.0
        %717 = vmatpush2.msra.mxu0 0.0
        %718 = vmatprep.subr.mxu0 0.0
        %719 = vmatpush2.msra.mxu0 0.0
        %720 = vmatprep.mubr.f32.mxu0 0.0
        %721 = vmatmul.mubr.f32.gmra.mxu0 %v654
        %v722 = vpop.f32.mrf.mxu0
        %v723 = vadd.f32 0.0, %v722
        %v724 = vpop.f32.mrf.mxu0
        %725 = vdwg.mxu0
        %726 = vrot.lane.b32.xlu0 %v557, 120
        %v727 = vpop.permute.xlu0 %726
        %728 = vrot.lane.b32.xlu0 %v557, 88
        %v729 = vpop.permute.xlu0 %728
        %v730 = vsel %vm563, %v727, 0
        %v732 = vsel %vm563, %v729, 0
        %734 = vmatprep.subr.mxu0 0.0
        %735 = vmatpush1.xpose.msra.mxu0 0.0
        %736 = vmatprep.subr.mxu0 0.0
        %737 = vmatpush1.xpose.msra.mxu0 0.0
        %738 = vmatprep.subr.mxu0 0.0
        %739 = vmatpush1.xpose.msra.mxu0 0.0
        %740 = vmatprep.subr.mxu0 0.0
        %741 = vmatpush1.xpose.msra.mxu0 0.0
        %742 = vmatprep.subr.mxu0 0.0
        %743 = vmatpush1.xpose.msra.mxu0 0.0
        %744 = vmatprep.subr.mxu0 0.0
        %745 = vmatpush1.xpose.msra.mxu0 0.0
        %746 = vmatprep.subr.mxu0 0.0
        %747 = vmatpush1.xpose.msra.mxu0 0.0
        %748 = vmatprep.subr.mxu0 0.0
        %749 = vmatpush1.xpose.msra.mxu0 0.0
        %750 = vmatprep.subr.mxu0 0.0
        %751 = vmatpush1.xpose.msra.mxu0 0.0
        %752 = vmatprep.subr.mxu0 0.0
        %753 = vmatpush1.xpose.msra.mxu0 0.0
        %754 = vmatprep.subr.mxu0 0.0
        %755 = vmatpush1.xpose.msra.mxu0 0.0
        %756 = vmatprep.subr.mxu0 0.0
        %757 = vmatpush1.xpose.msra.mxu0 0.0
        %758 = vmatprep.subr.mxu0 0.0
        %759 = vmatpush1.xpose.msra.mxu0 0.0
        %760 = vmatprep.subr.mxu0 0.0
        %761 = vmatpush1.xpose.msra.mxu0 0.0
        %762 = vmatprep.subr.mxu0 0.0
        %763 = vmatpush1.xpose.msra.mxu0 0.0
        %764 = vmatprep.subr.mxu0 0.0
        %765 = vmatpush1.xpose.msra.mxu0 %v732
        %766 = vmatprep.subr.mxu0 0.0
        %767 = vmatpush2.xpose.msra.mxu0 0.0
        %768 = vmatprep.subr.mxu0 0.0
        %769 = vmatpush2.xpose.msra.mxu0 0.0
        %770 = vmatprep.subr.mxu0 0.0
        %771 = vmatpush2.xpose.msra.mxu0 0.0
        %772 = vmatprep.subr.mxu0 0.0
        %773 = vmatpush2.xpose.msra.mxu0 0.0
        %774 = vmatprep.subr.mxu0 0.0
        %775 = vmatpush2.xpose.msra.mxu0 0.0
        %776 = vmatprep.subr.mxu0 0.0
        %777 = vmatpush2.xpose.msra.mxu0 0.0
        %778 = vmatprep.subr.mxu0 0.0
        %779 = vmatpush2.xpose.msra.mxu0 0.0
        %780 = vmatprep.subr.mxu0 0.0
        %781 = vmatpush2.xpose.msra.mxu0 0.0
        %782 = vmatprep.subr.mxu0 0.0
        %783 = vmatpush2.xpose.msra.mxu0 0.0
        %784 = vmatprep.subr.mxu0 0.0
        %785 = vmatpush2.xpose.msra.mxu0 0.0
        %786 = vmatprep.subr.mxu0 0.0
        %787 = vmatpush2.xpose.msra.mxu0 0.0
        %788 = vmatprep.subr.mxu0 0.0
        %789 = vmatpush2.xpose.msra.mxu0 0.0
        %790 = vmatprep.subr.mxu0 0.0
        %791 = vmatpush2.xpose.msra.mxu0 0.0
        %792 = vmatprep.subr.mxu0 0.0
        %793 = vmatpush2.xpose.msra.mxu0 0.0
        %794 = vmatprep.subr.mxu0 0.0
        %795 = vmatpush2.xpose.msra.mxu0 0.0
        %796 = vmatprep.subr.mxu0 0.0
        %797 = vmatpush2.xpose.msra.mxu0 0.0
        %798 = vmatprep.mubr.f32.mxu0 0.0
        %799 = vmatmul.mubr.f32.gmra.mxu0 %v730
        %v800 = vpop.f32.mrf.mxu0
        %v801 = vadd.f32 0.0, %v800
        %v802 = vpop.f32.mrf.mxu0
        %803 = vdwg.mxu0
        %v804 = vsel %vm563, %v801, -inf
        %805 = vmax.xlane.f32.xlu0 %v804
        %v806 = vpop.xlane.xlu0 %805
        %v807 = vsub.f32 %v801, %v806
        %v808 = vmul.f32 %v807, 1.442695
        %v809 = vpow.pop %v808
        %v810 = vsel %vm563, %v809, 0.0
        %811 = vadd.xlane.f32.xlu0 %v810
        %v812 = vpop.xlane.xlu0 %811
        %v813 = vrcp.pop %v812
        %v814 = vmul.f32 %v809, %v813
        %s815 = scalar_lea.vmem %s465, 8 [#allocation2]
        %816 = vst.msk [vmem:[%s815] sm:$0xff] %vm563, %v814
        %817 = vrot.lane.b32.xlu0 %v557, 56
        %v818 = vpop.permute.xlu0 %817
        %v821 = vsel %vm563, %v814, 0
        %823 = vmatprep.subr.mxu0 0.0
        %824 = vmatpush1.msra.mxu0 0.0
        %825 = vmatprep.subr.mxu0 0.0
        %826 = vmatpush1.msra.mxu0 0.0
        %827 = vmatprep.subr.mxu0 0.0
        %828 = vmatpush1.msra.mxu0 0.0
        %829 = vmatprep.subr.mxu0 0.0
        %830 = vmatpush1.msra.mxu0 0.0
        %831 = vmatprep.subr.mxu0 0.0
        %832 = vmatpush1.msra.mxu0 0.0
        %833 = vmatprep.subr.mxu0 0.0
        %834 = vmatpush1.msra.mxu0 0.0
        %835 = vmatprep.subr.mxu0 0.0
        %836 = vmatpush1.msra.mxu0 0.0
        %837 = vmatprep.subr.mxu0 0.0
        %838 = vmatpush1.msra.mxu0 0.0
        %839 = vmatprep.subr.mxu0 0.0
        %840 = vmatpush1.msra.mxu0 0.0
        %841 = vmatprep.subr.mxu0 0.0
        %842 = vmatpush1.msra.mxu0 0.0
        %843 = vmatprep.subr.mxu0 0.0
        %844 = vmatpush1.msra.mxu0 0.0
        %845 = vmatprep.subr.mxu0 0.0
        %846 = vmatpush1.msra.mxu0 0.0
        %847 = vmatprep.subr.mxu0 0.0
        %848 = vmatpush1.msra.mxu0 0.0
        %849 = vmatprep.subr.mxu0 0.0
        %850 = vmatpush1.msra.mxu0 0.0
        %851 = vmatprep.subr.mxu0 0.0
        %852 = vmatpush1.msra.mxu0 0.0
        %853 = vmatprep.subr.mxu0 0.0
        %854 = vmatpush1.msra.mxu0 %v818
        %855 = vmatprep.subr.mxu0 0.0
        %856 = vmatpush2.msra.mxu0 0.0
        %857 = vmatprep.subr.mxu0 0.0
        %858 = vmatpush2.msra.mxu0 0.0
        %859 = vmatprep.subr.mxu0 0.0
        %860 = vmatpush2.msra.mxu0 0.0
        %861 = vmatprep.subr.mxu0 0.0
        %862 = vmatpush2.msra.mxu0 0.0
        %863 = vmatprep.subr.mxu0 0.0
        %864 = vmatpush2.msra.mxu0 0.0
        %865 = vmatprep.subr.mxu0 0.0
        %866 = vmatpush2.msra.mxu0 0.0
        %867 = vmatprep.subr.mxu0 0.0
        %868 = vmatpush2.msra.mxu0 0.0
        %869 = vmatprep.subr.mxu0 0.0
        %870 = vmatpush2.msra.mxu0 0.0
        %871 = vmatprep.subr.mxu0 0.0
        %872 = vmatpush2.msra.mxu0 0.0
        %873 = vmatprep.subr.mxu0 0.0
        %874 = vmatpush2.msra.mxu0 0.0
        %875 = vmatprep.subr.mxu0 0.0
        %876 = vmatpush2.msra.mxu0 0.0
        %877 = vmatprep.subr.mxu0 0.0
        %878 = vmatpush2.msra.mxu0 0.0
        %879 = vmatprep.subr.mxu0 0.0
        %880 = vmatpush2.msra.mxu0 0.0
        %881 = vmatprep.subr.mxu0 0.0
        %882 = vmatpush2.msra.mxu0 0.0
        %883 = vmatprep.subr.mxu0 0.0
        %884 = vmatpush2.msra.mxu0 0.0
        %885 = vmatprep.subr.mxu0 0.0
        %886 = vmatpush2.msra.mxu0 0.0
        %887 = vmatprep.mubr.f32.mxu0 0.0
        %888 = vmatmul.mubr.f32.gmra.mxu0 %v821
        %v889 = vpop.f32.mrf.mxu0
        %v890 = vadd.f32 0.0, %v889
        %v891 = vpop.f32.mrf.mxu0
        %892 = vdwg.mxu0
        %893 = vrot.lane.b32.xlu0 %v557, 112
        %v894 = vpop.permute.xlu0 %893
        %895 = vrot.lane.b32.xlu0 %v557, 80
        %v896 = vpop.permute.xlu0 %895
        %v897 = vsel %vm563, %v894, 0
        %v899 = vsel %vm563, %v896, 0
        %901 = vmatprep.subr.mxu0 0.0
        %902 = vmatpush1.xpose.msra.mxu0 0.0
        %903 = vmatprep.subr.mxu0 0.0
        %904 = vmatpush1.xpose.msra.mxu0 0.0
        %905 = vmatprep.subr.mxu0 0.0
        %906 = vmatpush1.xpose.msra.mxu0 0.0
        %907 = vmatprep.subr.mxu0 0.0
        %908 = vmatpush1.xpose.msra.mxu0 0.0
        %909 = vmatprep.subr.mxu0 0.0
        %910 = vmatpush1.xpose.msra.mxu0 0.0
        %911 = vmatprep.subr.mxu0 0.0
        %912 = vmatpush1.xpose.msra.mxu0 0.0
        %913 = vmatprep.subr.mxu0 0.0
        %914 = vmatpush1.xpose.msra.mxu0 0.0
        %915 = vmatprep.subr.mxu0 0.0
        %916 = vmatpush1.xpose.msra.mxu0 0.0
        %917 = vmatprep.subr.mxu0 0.0
        %918 = vmatpush1.xpose.msra.mxu0 0.0
        %919 = vmatprep.subr.mxu0 0.0
        %920 = vmatpush1.xpose.msra.mxu0 0.0
        %921 = vmatprep.subr.mxu0 0.0
        %922 = vmatpush1.xpose.msra.mxu0 0.0
        %923 = vmatprep.subr.mxu0 0.0
        %924 = vmatpush1.xpose.msra.mxu0 0.0
        %925 = vmatprep.subr.mxu0 0.0
        %926 = vmatpush1.xpose.msra.mxu0 0.0
        %927 = vmatprep.subr.mxu0 0.0
        %928 = vmatpush1.xpose.msra.mxu0 0.0
        %929 = vmatprep.subr.mxu0 0.0
        %930 = vmatpush1.xpose.msra.mxu0 0.0
        %931 = vmatprep.subr.mxu0 0.0
        %932 = vmatpush1.xpose.msra.mxu0 %v899
        %933 = vmatprep.subr.mxu0 0.0
        %934 = vmatpush2.xpose.msra.mxu0 0.0
        %935 = vmatprep.subr.mxu0 0.0
        %936 = vmatpush2.xpose.msra.mxu0 0.0
        %937 = vmatprep.subr.mxu0 0.0
        %938 = vmatpush2.xpose.msra.mxu0 0.0
        %939 = vmatprep.subr.mxu0 0.0
        %940 = vmatpush2.xpose.msra.mxu0 0.0
        %941 = vmatprep.subr.mxu0 0.0
        %942 = vmatpush2.xpose.msra.mxu0 0.0
        %943 = vmatprep.subr.mxu0 0.0
        %944 = vmatpush2.xpose.msra.mxu0 0.0
        %945 = vmatprep.subr.mxu0 0.0
        %946 = vmatpush2.xpose.msra.mxu0 0.0
        %947 = vmatprep.subr.mxu0 0.0
        %948 = vmatpush2.xpose.msra.mxu0 0.0
        %949 = vmatprep.subr.mxu0 0.0
        %950 = vmatpush2.xpose.msra.mxu0 0.0
        %951 = vmatprep.subr.mxu0 0.0
        %952 = vmatpush2.xpose.msra.mxu0 0.0
        %953 = vmatprep.subr.mxu0 0.0
        %954 = vmatpush2.xpose.msra.mxu0 0.0
        %955 = vmatprep.subr.mxu0 0.0
        %956 = vmatpush2.xpose.msra.mxu0 0.0
        %957 = vmatprep.subr.mxu0 0.0
        %958 = vmatpush2.xpose.msra.mxu0 0.0
        %959 = vmatprep.subr.mxu0 0.0
        %960 = vmatpush2.xpose.msra.mxu0 0.0
        %961 = vmatprep.subr.mxu0 0.0
        %962 = vmatpush2.xpose.msra.mxu0 0.0
        %963 = vmatprep.subr.mxu0 0.0
        %964 = vmatpush2.xpose.msra.mxu0 0.0
        %965 = vmatprep.mubr.f32.mxu0 0.0
        %966 = vmatmul.mubr.f32.gmra.mxu0 %v897
        %v967 = vpop.f32.mrf.mxu0
        %v968 = vadd.f32 0.0, %v967
        %v969 = vpop.f32.mrf.mxu0
        %970 = vdwg.mxu0
        %v971 = vsel %vm563, %v968, -inf
        %972 = vmax.xlane.f32.xlu0 %v971
        %v973 = vpop.xlane.xlu0 %972
        %v974 = vsub.f32 %v968, %v973
        %v975 = vmul.f32 %v974, 1.442695
        %v976 = vpow.pop %v975
        %v977 = vsel %vm563, %v976, 0.0
        %978 = vadd.xlane.f32.xlu0 %v977
        %v979 = vpop.xlane.xlu0 %978
        %v980 = vrcp.pop %v979
        %v981 = vmul.f32 %v976, %v980
        %s982 = scalar_lea.vmem %s465, 16 [#allocation2]
        %983 = vst.msk [vmem:[%s982] sm:$0xff] %vm563, %v981
        %984 = vrot.lane.b32.xlu0 %v557, 48
        %v985 = vpop.permute.xlu0 %984
        %v988 = vsel %vm563, %v981, 0
        %990 = vmatprep.subr.mxu0 0.0
        %991 = vmatpush1.msra.mxu0 0.0
        %992 = vmatprep.subr.mxu0 0.0
        %993 = vmatpush1.msra.mxu0 0.0
        %994 = vmatprep.subr.mxu0 0.0
        %995 = vmatpush1.msra.mxu0 0.0
        %996 = vmatprep.subr.mxu0 0.0
        %997 = vmatpush1.msra.mxu0 0.0
        %998 = vmatprep.subr.mxu0 0.0
        %999 = vmatpush1.msra.mxu0 0.0
        %1000 = vmatprep.subr.mxu0 0.0
        %1001 = vmatpush1.msra.mxu0 0.0
        %1002 = vmatprep.subr.mxu0 0.0
        %1003 = vmatpush1.msra.mxu0 0.0
        %1004 = vmatprep.subr.mxu0 0.0
        %1005 = vmatpush1.msra.mxu0 0.0
        %1006 = vmatprep.subr.mxu0 0.0
        %1007 = vmatpush1.msra.mxu0 0.0
        %1008 = vmatprep.subr.mxu0 0.0
        %1009 = vmatpush1.msra.mxu0 0.0
        %1010 = vmatprep.subr.mxu0 0.0
        %1011 = vmatpush1.msra.mxu0 0.0
        %1012 = vmatprep.subr.mxu0 0.0
        %1013 = vmatpush1.msra.mxu0 0.0
        %1014 = vmatprep.subr.mxu0 0.0
        %1015 = vmatpush1.msra.mxu0 0.0
        %1016 = vmatprep.subr.mxu0 0.0
        %1017 = vmatpush1.msra.mxu0 0.0
        %1018 = vmatprep.subr.mxu0 0.0
        %1019 = vmatpush1.msra.mxu0 0.0
        %1020 = vmatprep.subr.mxu0 0.0
        %1021 = vmatpush1.msra.mxu0 %v985
        %1022 = vmatprep.subr.mxu0 0.0
        %1023 = vmatpush2.msra.mxu0 0.0
        %1024 = vmatprep.subr.mxu0 0.0
        %1025 = vmatpush2.msra.mxu0 0.0
        %1026 = vmatprep.subr.mxu0 0.0
        %1027 = vmatpush2.msra.mxu0 0.0
        %1028 = vmatprep.subr.mxu0 0.0
        %1029 = vmatpush2.msra.mxu0 0.0
        %1030 = vmatprep.subr.mxu0 0.0
        %1031 = vmatpush2.msra.mxu0 0.0
        %1032 = vmatprep.subr.mxu0 0.0
        %1033 = vmatpush2.msra.mxu0 0.0
        %1034 = vmatprep.subr.mxu0 0.0
        %1035 = vmatpush2.msra.mxu0 0.0
        %1036 = vmatprep.subr.mxu0 0.0
        %1037 = vmatpush2.msra.mxu0 0.0
        %1038 = vmatprep.subr.mxu0 0.0
        %1039 = vmatpush2.msra.mxu0 0.0
        %1040 = vmatprep.subr.mxu0 0.0
        %1041 = vmatpush2.msra.mxu0 0.0
        %1042 = vmatprep.subr.mxu0 0.0
        %1043 = vmatpush2.msra.mxu0 0.0
        %1044 = vmatprep.subr.mxu0 0.0
        %1045 = vmatpush2.msra.mxu0 0.0
        %1046 = vmatprep.subr.mxu0 0.0
        %1047 = vmatpush2.msra.mxu0 0.0
        %1048 = vmatprep.subr.mxu0 0.0
        %1049 = vmatpush2.msra.mxu0 0.0
        %1050 = vmatprep.subr.mxu0 0.0
        %1051 = vmatpush2.msra.mxu0 0.0
        %1052 = vmatprep.subr.mxu0 0.0
        %1053 = vmatpush2.msra.mxu0 0.0
        %1054 = vmatprep.mubr.f32.mxu0 0.0
        %1055 = vmatmul.mubr.f32.gmra.mxu0 %v988
        %v1056 = vpop.f32.mrf.mxu0
        %v1057 = vadd.f32 0.0, %v1056
        %v1058 = vpop.f32.mrf.mxu0
        %1059 = vdwg.mxu0
        %1060 = vrot.lane.b32.xlu0 %v557, 104
        %v1061 = vpop.permute.xlu0 %1060
        %1062 = vrot.lane.b32.xlu0 %v557, 72
        %v1063 = vpop.permute.xlu0 %1062
        %v1064 = vsel %vm563, %v1061, 0
        %v1066 = vsel %vm563, %v1063, 0
        %1068 = vmatprep.subr.mxu0 0.0
        %1069 = vmatpush1.xpose.msra.mxu0 0.0
        %1070 = vmatprep.subr.mxu0 0.0
        %1071 = vmatpush1.xpose.msra.mxu0 0.0
        %1072 = vmatprep.subr.mxu0 0.0
        %1073 = vmatpush1.xpose.msra.mxu0 0.0
        %1074 = vmatprep.subr.mxu0 0.0
        %1075 = vmatpush1.xpose.msra.mxu0 0.0
        %1076 = vmatprep.subr.mxu0 0.0
        %1077 = vmatpush1.xpose.msra.mxu0 0.0
        %1078 = vmatprep.subr.mxu0 0.0
        %1079 = vmatpush1.xpose.msra.mxu0 0.0
        %1080 = vmatprep.subr.mxu0 0.0
        %1081 = vmatpush1.xpose.msra.mxu0 0.0
        %1082 = vmatprep.subr.mxu0 0.0
        %1083 = vmatpush1.xpose.msra.mxu0 0.0
        %1084 = vmatprep.subr.mxu0 0.0
        %1085 = vmatpush1.xpose.msra.mxu0 0.0
        %1086 = vmatprep.subr.mxu0 0.0
        %1087 = vmatpush1.xpose.msra.mxu0 0.0
        %1088 = vmatprep.subr.mxu0 0.0
        %1089 = vmatpush1.xpose.msra.mxu0 0.0
        %1090 = vmatprep.subr.mxu0 0.0
        %1091 = vmatpush1.xpose.msra.mxu0 0.0
        %1092 = vmatprep.subr.mxu0 0.0
        %1093 = vmatpush1.xpose.msra.mxu0 0.0
        %1094 = vmatprep.subr.mxu0 0.0
        %1095 = vmatpush1.xpose.msra.mxu0 0.0
        %1096 = vmatprep.subr.mxu0 0.0
        %1097 = vmatpush1.xpose.msra.mxu0 0.0
        %1098 = vmatprep.subr.mxu0 0.0
        %1099 = vmatpush1.xpose.msra.mxu0 %v1066
        %1100 = vmatprep.subr.mxu0 0.0
        %1101 = vmatpush2.xpose.msra.mxu0 0.0
        %1102 = vmatprep.subr.mxu0 0.0
        %1103 = vmatpush2.xpose.msra.mxu0 0.0
        %1104 = vmatprep.subr.mxu0 0.0
        %1105 = vmatpush2.xpose.msra.mxu0 0.0
        %1106 = vmatprep.subr.mxu0 0.0
        %1107 = vmatpush2.xpose.msra.mxu0 0.0
        %1108 = vmatprep.subr.mxu0 0.0
        %1109 = vmatpush2.xpose.msra.mxu0 0.0
        %1110 = vmatprep.subr.mxu0 0.0
        %1111 = vmatpush2.xpose.msra.mxu0 0.0
        %1112 = vmatprep.subr.mxu0 0.0
        %1113 = vmatpush2.xpose.msra.mxu0 0.0
        %1114 = vmatprep.subr.mxu0 0.0
        %1115 = vmatpush2.xpose.msra.mxu0 0.0
        %1116 = vmatprep.subr.mxu0 0.0
        %1117 = vmatpush2.xpose.msra.mxu0 0.0
        %1118 = vmatprep.subr.mxu0 0.0
        %1119 = vmatpush2.xpose.msra.mxu0 0.0
        %1120 = vmatprep.subr.mxu0 0.0
        %1121 = vmatpush2.xpose.msra.mxu0 0.0
        %1122 = vmatprep.subr.mxu0 0.0
        %1123 = vmatpush2.xpose.msra.mxu0 0.0
        %1124 = vmatprep.subr.mxu0 0.0
        %1125 = vmatpush2.xpose.msra.mxu0 0.0
        %1126 = vmatprep.subr.mxu0 0.0
        %1127 = vmatpush2.xpose.msra.mxu0 0.0
        %1128 = vmatprep.subr.mxu0 0.0
        %1129 = vmatpush2.xpose.msra.mxu0 0.0
        %1130 = vmatprep.subr.mxu0 0.0
        %1131 = vmatpush2.xpose.msra.mxu0 0.0
        %1132 = vmatprep.mubr.f32.mxu0 0.0
        %1133 = vmatmul.mubr.f32.gmra.mxu0 %v1064
        %v1134 = vpop.f32.mrf.mxu0
        %v1135 = vadd.f32 0.0, %v1134
        %v1136 = vpop.f32.mrf.mxu0
        %1137 = vdwg.mxu0
        %v1138 = vsel %vm563, %v1135, -inf
        %1139 = vmax.xlane.f32.xlu0 %v1138
        %v1140 = vpop.xlane.xlu0 %1139
        %v1141 = vsub.f32 %v1135, %v1140
        %v1142 = vmul.f32 %v1141, 1.442695
        %v1143 = vpow.pop %v1142
        %v1144 = vsel %vm563, %v1143, 0.0
        %1145 = vadd.xlane.f32.xlu0 %v1144
        %v1146 = vpop.xlane.xlu0 %1145
        %v1147 = vrcp.pop %v1146
        %v1148 = vmul.f32 %v1143, %v1147
        %s1149 = scalar_lea.vmem %s465, 24 [#allocation2]
        %1150 = vst.msk [vmem:[%s1149] sm:$0xff] %vm563, %v1148
        %1151 = vrot.lane.b32.xlu0 %v557, 40
        %v1152 = vpop.permute.xlu0 %1151
        %v1155 = vsel %vm563, %v1148, 0
        %1157 = vmatprep.subr.mxu0 0.0
        %1158 = vmatpush1.msra.mxu0 0.0
        %1159 = vmatprep.subr.mxu0 0.0
        %1160 = vmatpush1.msra.mxu0 0.0
        %1161 = vmatprep.subr.mxu0 0.0
        %1162 = vmatpush1.msra.mxu0 0.0
        %1163 = vmatprep.subr.mxu0 0.0
        %1164 = vmatpush1.msra.mxu0 0.0
        %1165 = vmatprep.subr.mxu0 0.0
        %1166 = vmatpush1.msra.mxu0 0.0
        %1167 = vmatprep.subr.mxu0 0.0
        %1168 = vmatpush1.msra.mxu0 0.0
        %1169 = vmatprep.subr.mxu0 0.0
        %1170 = vmatpush1.msra.mxu0 0.0
        %1171 = vmatprep.subr.mxu0 0.0
        %1172 = vmatpush1.msra.mxu0 0.0
        %1173 = vmatprep.subr.mxu0 0.0
        %1174 = vmatpush1.msra.mxu0 0.0
        %1175 = vmatprep.subr.mxu0 0.0
        %1176 = vmatpush1.msra.mxu0 0.0
        %1177 = vmatprep.subr.mxu0 0.0
        %1178 = vmatpush1.msra.mxu0 0.0
        %1179 = vmatprep.subr.mxu0 0.0
        %1180 = vmatpush1.msra.mxu0 0.0
        %1181 = vmatprep.subr.mxu0 0.0
        %1182 = vmatpush1.msra.mxu0 0.0
        %1183 = vmatprep.subr.mxu0 0.0
        %1184 = vmatpush1.msra.mxu0 0.0
        %1185 = vmatprep.subr.mxu0 0.0
        %1186 = vmatpush1.msra.mxu0 0.0
        %1187 = vmatprep.subr.mxu0 0.0
        %1188 = vmatpush1.msra.mxu0 %v1152
        %1189 = vmatprep.subr.mxu0 0.0
        %1190 = vmatpush2.msra.mxu0 0.0
        %1191 = vmatprep.subr.mxu0 0.0
        %1192 = vmatpush2.msra.mxu0 0.0
        %1193 = vmatprep.subr.mxu0 0.0
        %1194 = vmatpush2.msra.mxu0 0.0
        %1195 = vmatprep.subr.mxu0 0.0
        %1196 = vmatpush2.msra.mxu0 0.0
        %1197 = vmatprep.subr.mxu0 0.0
        %1198 = vmatpush2.msra.mxu0 0.0
        %1199 = vmatprep.subr.mxu0 0.0
        %1200 = vmatpush2.msra.mxu0 0.0
        %1201 = vmatprep.subr.mxu0 0.0
        %1202 = vmatpush2.msra.mxu0 0.0
        %1203 = vmatprep.subr.mxu0 0.0
        %1204 = vmatpush2.msra.mxu0 0.0
        %1205 = vmatprep.subr.mxu0 0.0
        %1206 = vmatpush2.msra.mxu0 0.0
        %1207 = vmatprep.subr.mxu0 0.0
        %1208 = vmatpush2.msra.mxu0 0.0
        %1209 = vmatprep.subr.mxu0 0.0
        %1210 = vmatpush2.msra.mxu0 0.0
        %1211 = vmatprep.subr.mxu0 0.0
        %1212 = vmatpush2.msra.mxu0 0.0
        %1213 = vmatprep.subr.mxu0 0.0
        %1214 = vmatpush2.msra.mxu0 0.0
        %1215 = vmatprep.subr.mxu0 0.0
        %1216 = vmatpush2.msra.mxu0 0.0
        %1217 = vmatprep.subr.mxu0 0.0
        %1218 = vmatpush2.msra.mxu0 0.0
        %1219 = vmatprep.subr.mxu0 0.0
        %1220 = vmatpush2.msra.mxu0 0.0
        %1221 = vmatprep.mubr.f32.mxu0 0.0
        %1222 = vmatmul.mubr.f32.gmra.mxu0 %v1155
        %v1223 = vpop.f32.mrf.mxu0
        %v1224 = vadd.f32 0.0, %v1223
        %v1225 = vpop.f32.mrf.mxu0
        %1226 = vdwg.mxu0
        %1228 = vrot.lane.b32.xlu0 %v890, 8
        %v1229 = vpop.permute.xlu0 %1228
        %1232 = vrot.lane.b32.xlu0 %v1057, 16
        %v1233 = vpop.permute.xlu0 %1232
        %1236 = vrot.lane.b32.xlu0 %v1224, 24
        %v1237 = vpop.permute.xlu0 %1236
        %v1239 = vsel %vm563, %v723, %v1229
        %vm1240 = vcmask 130048
        %v1241 = vsel %vm1240, %v1239, %v1233
        %vm1242 = vcmask 195584
        %v1243 = vsel %vm1242, %v1241, %v1237
        %v1244 = vld [vmem:[%s3] sm:$0xff]
        %v1245 = vld [vmem:[%s3 + $0x8] sm:$0xff]
        %v1246 = vld [vmem:[%s3 + $0x10] sm:$0xff]
        %v1247 = vld [vmem:[%s3 + $0x18] sm:$0xff]
        %v1248 = vld [vmem:[%s4] sm:$0x1]
        %v1250 = vlaneseq
        %v1251 = vshrl.u32 %v1250, 7
        %v1252 = vsub.s32 0, %v1251
        %v1253 = vrot.slane %v1248, %v1252
        %v1256 = vsel %vm486, %v1243, 0
        %1258 = vmatprep.subr.mxu0 0.0
        %1259 = vmatpush1.msra.mxu0 0.0
        %1260 = vmatprep.subr.mxu0 0.0
        %1261 = vmatpush1.msra.mxu0 0.0
        %1262 = vmatprep.subr.mxu0 0.0
        %1263 = vmatpush1.msra.mxu0 0.0
        %1264 = vmatprep.subr.mxu0 0.0
        %1265 = vmatpush1.msra.mxu0 0.0
        %1266 = vmatprep.subr.mxu0 0.0
        %1267 = vmatpush1.msra.mxu0 0.0
        %1268 = vmatprep.subr.mxu0 0.0
        %1269 = vmatpush1.msra.mxu0 0.0
        %1270 = vmatprep.subr.mxu0 0.0
        %1271 = vmatpush1.msra.mxu0 0.0
        %1272 = vmatprep.subr.mxu0 0.0
        %1273 = vmatpush1.msra.mxu0 0.0
        %1274 = vmatprep.subr.mxu0 0.0
        %1275 = vmatpush1.msra.mxu0 0.0
        %1276 = vmatprep.subr.mxu0 0.0
        %1277 = vmatpush1.msra.mxu0 0.0
        %1278 = vmatprep.subr.mxu0 0.0
        %1279 = vmatpush1.msra.mxu0 0.0
        %1280 = vmatprep.subr.mxu0 0.0
        %1281 = vmatpush1.msra.mxu0 0.0
        %1282 = vmatprep.subr.mxu0 0.0
        %1283 = vmatpush1.msra.mxu0 %v1247
        %1284 = vmatprep.subr.mxu0 0.0
        %1285 = vmatpush1.msra.mxu0 %v1246
        %1286 = vmatprep.subr.mxu0 0.0
        %1287 = vmatpush1.msra.mxu0 %v1245
        %1288 = vmatprep.subr.mxu0 0.0
        %1289 = vmatpush1.msra.mxu0 %v1244
        %1290 = vmatprep.subr.mxu0 0.0
        %1291 = vmatpush2.msra.mxu0 0.0
        %1292 = vmatprep.subr.mxu0 0.0
        %1293 = vmatpush2.msra.mxu0 0.0
        %1294 = vmatprep.subr.mxu0 0.0
        %1295 = vmatpush2.msra.mxu0 0.0
        %1296 = vmatprep.subr.mxu0 0.0
        %1297 = vmatpush2.msra.mxu0 0.0
        %1298 = vmatprep.subr.mxu0 0.0
        %1299 = vmatpush2.msra.mxu0 0.0
        %1300 = vmatprep.subr.mxu0 0.0
        %1301 = vmatpush2.msra.mxu0 0.0
        %1302 = vmatprep.subr.mxu0 0.0
        %1303 = vmatpush2.msra.mxu0 0.0
        %1304 = vmatprep.subr.mxu0 0.0
        %1305 = vmatpush2.msra.mxu0 0.0
        %1306 = vmatprep.subr.mxu0 0.0
        %1307 = vmatpush2.msra.mxu0 0.0
        %1308 = vmatprep.subr.mxu0 0.0
        %1309 = vmatpush2.msra.mxu0 0.0
        %1310 = vmatprep.subr.mxu0 0.0
        %1311 = vmatpush2.msra.mxu0 0.0
        %1312 = vmatprep.subr.mxu0 0.0
        %1313 = vmatpush2.msra.mxu0 0.0
        %1314 = vmatprep.subr.mxu0 0.0
        %1315 = vmatpush2.msra.mxu0 0.0
        %1316 = vmatprep.subr.mxu0 0.0
        %1317 = vmatpush2.msra.mxu0 0.0
        %1318 = vmatprep.subr.mxu0 0.0
        %1319 = vmatpush2.msra.mxu0 0.0
        %1320 = vmatprep.subr.mxu0 0.0
        %1321 = vmatpush2.msra.mxu0 0.0
        %1322 = vmatprep.mubr.f32.mxu0 0.0
        %1323 = vmatmul.mubr.f32.gmra.mxu0 %v1256
        %v1324 = vpop.f32.mrf.mxu0
        %v1325 = vadd.f32 %v1253, %v1324
        %v1326 = vpop.f32.mrf.mxu0
        %1327 = vdwg.mxu0
        %v1328 = vadd.f32 %v474, %v1325
        %v1329 = vsel %vm486, %v1328, 0.0
        %1330 = vadd.xlane.f32.xlu0 %v1329
        %v1331 = vpop.xlane.xlu0 %1330
        %v1332 = vrcp.pop 32.0
        %v1333 = vmul.f32 %v1331, %v1332
        %v1334 = vsub.f32 %v1328, %v1333
        %v1335 = vmul.f32 %v1334, %v1334
        %v1336 = vsel %vm486, %v1335, 0.0
        %1337 = vadd.xlane.f32.xlu0 %v1336
        %v1338 = vpop.xlane.xlu0 %1337
        %v1339 = vmul.f32 %v1338, %v1332
        %v1340 = vadd.f32 %v1339, 1e-05
        %v1341 = vrsqrt.pop %v1340
        %v1342 = vmul.f32 %v1334, %v1341
        %v1343 = vld [vmem:[%s5] sm:$0x1]
        %v1345 = vlaneseq
        %v1346 = vshrl.u32 %v1345, 7
        %v1347 = vsub.s32 0, %v1346
        %v1348 = vrot.slane %v1343, %v1347
        %v1350 = vmul.f32 %v1342, %v1348
        %v1351 = vld [vmem:[%s6] sm:$0x1]
        %v1353 = vlaneseq
        %v1354 = vshrl.u32 %v1353, 7
        %v1355 = vsub.s32 0, %v1354
        %v1356 = vrot.slane %v1351, %v1355
        %v1358 = vadd.f32 %v1350, %v1356
        %v1359 = vld [vmem:[%s7] sm:$0xff]
        %v1360 = vld [vmem:[%s7 + $0x8] sm:$0xff]
        %v1361 = vld [vmem:[%s7 + $0x10] sm:$0xff]
        %v1362 = vld [vmem:[%s7 + $0x18] sm:$0xff]
        %v1363 = vld [vmem:[%s8] sm:$0x1]
        %v1365 = vlaneseq
        %v1366 = vshrl.u32 %v1365, 7
        %v1367 = vsub.s32 0, %v1366
        %v1368 = vrot.slane %v1363, %v1367
        %v1371 = vsel %vm486, %v1358, 0
        %1373 = vmatprep.subr.mxu0 0.0
        %1374 = vmatpush1.msra.mxu0 0.0
        %1375 = vmatprep.subr.mxu0 0.0
        %1376 = vmatpush1.msra.mxu0 0.0
        %1377 = vmatprep.subr.mxu0 0.0
        %1378 = vmatpush1.msra.mxu0 0.0
        %1379 = vmatprep.subr.mxu0 0.0
        %1380 = vmatpush1.msra.mxu0 0.0
        %1381 = vmatprep.subr.mxu0 0.0
        %1382 = vmatpush1.msra.mxu0 0.0
        %1383 = vmatprep.subr.mxu0 0.0
        %1384 = vmatpush1.msra.mxu0 0.0
        %1385 = vmatprep.subr.mxu0 0.0
        %1386 = vmatpush1.msra.mxu0 0.0
        %1387 = vmatprep.subr.mxu0 0.0
        %1388 = vmatpush1.msra.mxu0 0.0
        %1389 = vmatprep.subr.mxu0 0.0
        %1390 = vmatpush1.msra.mxu0 0.0
        %1391 = vmatprep.subr.mxu0 0.0
        %1392 = vmatpush1.msra.mxu0 0.0
        %1393 = vmatprep.subr.mxu0 0.0
        %1394 = vmatpush1.msra.mxu0 0.0
        %1395 = vmatprep.subr.mxu0 0.0
        %1396 = vmatpush1.msra.mxu0 0.0
        %1397 = vmatprep.subr.mxu0 0.0
        %1398 = vmatpush1.msra.mxu0 %v1362
        %1399 = vmatprep.subr.mxu0 0.0
        %1400 = vmatpush1.msra.mxu0 %v1361
        %1401 = vmatprep.subr.mxu0 0.0
        %1402 = vmatpush1.msra.mxu0 %v1360
        %1403 = vmatprep.subr.mxu0 0.0
        %1404 = vmatpush1.msra.mxu0 %v1359
        %1405 = vmatprep.subr.mxu0 0.0
        %1406 = vmatpush2.msra.mxu0 0.0
        %1407 = vmatprep.subr.mxu0 0.0
        %1408 = vmatpush2.msra.mxu0 0.0
        %1409 = vmatprep.subr.mxu0 0.0
        %1410 = vmatpush2.msra.mxu0 0.0
        %1411 = vmatprep.subr.mxu0 0.0
        %1412 = vmatpush2.msra.mxu0 0.0
        %1413 = vmatprep.subr.mxu0 0.0
        %1414 = vmatpush2.msra.mxu0 0.0
        %1415 = vmatprep.subr.mxu0 0.0
        %1416 = vmatpush2.msra.mxu0 0.0
        %1417 = vmatprep.subr.mxu0 0.0
        %1418 = vmatpush2.msra.mxu0 0.0
        %1419 = vmatprep.subr.mxu0 0.0
        %1420 = vmatpush2.msra.mxu0 0.0
        %1421 = vmatprep.subr.mxu0 0.0
        %1422 = vmatpush2.msra.mxu0 0.0
        %1423 = vmatprep.subr.mxu0 0.0
        %1424 = vmatpush2.msra.mxu0 0.0
        %1425 = vmatprep.subr.mxu0 0.0
        %1426 = vmatpush2.msra.mxu0 0.0
        %1427 = vmatprep.subr.mxu0 0.0
        %1428 = vmatpush2.msra.mxu0 0.0
        %1429 = vmatprep.subr.mxu0 0.0
        %1430 = vmatpush2.msra.mxu0 0.0
        %1431 = vmatprep.subr.mxu0 0.0
        %1432 = vmatpush2.msra.mxu0 0.0
        %1433 = vmatprep.subr.mxu0 0.0
        %1434 = vmatpush2.msra.mxu0 0.0
        %1435 = vmatprep.subr.mxu0 0.0
        %1436 = vmatpush2.msra.mxu0 0.0
        %1437 = vmatprep.mubr.f32.mxu0 0.0
        %1438 = vmatmul.mubr.f32.gmra.mxu0 %v1371
        %v1439 = vpop.f32.mrf.mxu0
        %v1440 = vadd.f32 %v1368, %v1439
        %v1441 = vpop.f32.mrf.mxu0
        %1442 = vdwg.mxu0
        %v1443 = vmax.f32 %v1440, 0.0
        %v1444 = vld [vmem:[%s9] sm:$0xff]
        %v1445 = vld [vmem:[%s9 + $0x8] sm:$0xff]
        %v1446 = vld [vmem:[%s9 + $0x10] sm:$0xff]
        %v1447 = vld [vmem:[%s9 + $0x18] sm:$0xff]
        %v1448 = vld [vmem:[%s9 + $0x20] sm:$0xff]
        %v1449 = vld [vmem:[%s9 + $0x28] sm:$0xff]
        %v1450 = vld [vmem:[%s9 + $0x30] sm:$0xff]
        %v1451 = vld [vmem:[%s9 + $0x38] sm:$0xff]
        %v1452 = vld [vmem:[%s10] sm:$0x1]
        %v1454 = vlaneseq
        %v1455 = vshrl.u32 %v1454, 7
        %v1456 = vsub.s32 0, %v1455
        %v1457 = vrot.slane %v1452, %v1456
        %vm1459 = vcmask 523264
        %v1461 = vsel %vm1459, %v1443, 0
        %1463 = vmatprep.subr.mxu0 0.0
        %1464 = vmatpush1.msra.mxu0 0.0
        %1465 = vmatprep.subr.mxu0 0.0
        %1466 = vmatpush1.msra.mxu0 0.0
        %1467 = vmatprep.subr.mxu0 0.0
        %1468 = vmatpush1.msra.mxu0 0.0
        %1469 = vmatprep.subr.mxu0 0.0
        %1470 = vmatpush1.msra.mxu0 0.0
        %1471 = vmatprep.subr.mxu0 0.0
        %1472 = vmatpush1.msra.mxu0 0.0
        %1473 = vmatprep.subr.mxu0 0.0
        %1474 = vmatpush1.msra.mxu0 0.0
        %1475 = vmatprep.subr.mxu0 0.0
        %1476 = vmatpush1.msra.mxu0 0.0
        %1477 = vmatprep.subr.mxu0 0.0
        %1478 = vmatpush1.msra.mxu0 0.0
        %1479 = vmatprep.subr.mxu0 0.0
        %1480 = vmatpush1.msra.mxu0 %v1451
        %1481 = vmatprep.subr.mxu0 0.0
        %1482 = vmatpush1.msra.mxu0 %v1450
        %1483 = vmatprep.subr.mxu0 0.0
        %1484 = vmatpush1.msra.mxu0 %v1449
        %1485 = vmatprep.subr.mxu0 0.0
        %1486 = vmatpush1.msra.mxu0 %v1448
        %1487 = vmatprep.subr.mxu0 0.0
        %1488 = vmatpush1.msra.mxu0 %v1447
        %1489 = vmatprep.subr.mxu0 0.0
        %1490 = vmatpush1.msra.mxu0 %v1446
        %1491 = vmatprep.subr.mxu0 0.0
        %1492 = vmatpush1.msra.mxu0 %v1445
        %1493 = vmatprep.subr.mxu0 0.0
        %1494 = vmatpush1.msra.mxu0 %v1444
        %1495 = vmatprep.subr.mxu0 0.0
        %1496 = vmatpush2.msra.mxu0 0.0
        %1497 = vmatprep.subr.mxu0 0.0
        %1498 = vmatpush2.msra.mxu0 0.0
        %1499 = vmatprep.subr.mxu0 0.0
        %1500 = vmatpush2.msra.mxu0 0.0
        %1501 = vmatprep.subr.mxu0 0.0
        %1502 = vmatpush2.msra.mxu0 0.0
        %1503 = vmatprep.subr.mxu0 0.0
        %1504 = vmatpush2.msra.mxu0 0.0
        %1505 = vmatprep.subr.mxu0 0.0
        %1506 = vmatpush2.msra.mxu0 0.0
        %1507 = vmatprep.subr.mxu0 0.0
        %1508 = vmatpush2.msra.mxu0 0.0
        %1509 = vmatprep.subr.mxu0 0.0
        %1510 = vmatpush2.msra.mxu0 0.0
        %1511 = vmatprep.subr.mxu0 0.0
        %1512 = vmatpush2.msra.mxu0 0.0
        %1513 = vmatprep.subr.mxu0 0.0
        %1514 = vmatpush2.msra.mxu0 0.0
        %1515 = vmatprep.subr.mxu0 0.0
        %1516 = vmatpush2.msra.mxu0 0.0
        %1517 = vmatprep.subr.mxu0 0.0
        %1518 = vmatpush2.msra.mxu0 0.0
        %1519 = vmatprep.subr.mxu0 0.0
        %1520 = vmatpush2.msra.mxu0 0.0
        %1521 = vmatprep.subr.mxu0 0.0
        %1522 = vmatpush2.msra.mxu0 0.0
        %1523 = vmatprep.subr.mxu0 0.0
        %1524 = vmatpush2.msra.mxu0 0.0
        %1525 = vmatprep.subr.mxu0 0.0
        %1526 = vmatpush2.msra.mxu0 0.0
        %1527 = vmatprep.mubr.f32.mxu0 0.0
        %1528 = vmatmul.mubr.f32.gmra.mxu0 %v1461
        %v1529 = vpop.f32.mrf.mxu0
        %v1530 = vadd.f32 %v1457, %v1529
        %v1531 = vpop.f32.mrf.mxu0
        %1532 = vdwg.mxu0
        %v1533 = vadd.f32 %v1358, %v1530
        %v1534 = vsel %vm486, %v1533, 0.0
        %1535 = vadd.xlane.f32.xlu0 %v1534
        %v1536 = vpop.xlane.xlu0 %1535
        %v1537 = vmul.f32 %v1536, %v1332
        %v1538 = vsub.f32 %v1533, %v1537
        %v1539 = vmul.f32 %v1538, %v1538
        %v1540 = vsel %vm486, %v1539, 0.0
        %1541 = vadd.xlane.f32.xlu0 %v1540
        %v1542 = vpop.xlane.xlu0 %1541
        %v1543 = vmul.f32 %v1542, %v1332
        %v1544 = vadd.f32 %v1543, 1e-05
        %v1545 = vrsqrt.pop %v1544
        %v1546 = vmul.f32 %v1538, %v1545
        %v1547 = vld [vmem:[%s11] sm:$0x1]
        %v1549 = vlaneseq
        %v1550 = vshrl.u32 %v1549, 7
        %v1551 = vsub.s32 0, %v1550
        %v1552 = vrot.slane %v1547, %v1551
        %v1554 = vmul.f32 %v1546, %v1552
        %v1555 = vld [vmem:[%s12] sm:$0x1]
        %v1557 = vlaneseq
        %v1558 = vshrl.u32 %v1557, 7
        %v1559 = vsub.s32 0, %v1558
        %v1560 = vrot.slane %v1555, %v1559
        %v1562 = vadd.f32 %v1554, %v1560
        %1563 = vst.msk [vmem:[%s473] sm:$0xff] %vm486, %v1562
        %p1564 = scmp.lt.s32.totalorder %s29, 1
        %s1565 = scalar_select %p1564, %s29, 1
        %s1566 = smul.addr %s1565, 8
        %s1567 = scalar_lea.vmem %s13, %s1566
        %s1568 = sand.u32 %s341, 1
        %s1569 = scalar_lea.sflag [#allocation3], %s1568
        %s1570 = sand.u32 %s341, 1
        %s1571 = smul.addr %s1570, 32
        %s1572 = scalar_lea.vmem [#allocation2], %s1571
        // Predicated region
        $region73: #{decoder_only_forward.4} parent=71 // pred_check
          %p1573 = pneg %p325
        $region74: #{decoder_only_forward.4} parent=71 // pred_check_branch
          %1575 = sbr.rel (%p1573) target = $region76
        $region75: #{decoder_only_forward.4} parent=71 // pred_region
          _
        $region76: #{decoder_only_forward.4} parent=71 // pred_fallthru
          _
        // Predicated region
        $region77: #{decoder_only_forward.4} parent=71 // pred_check
          %p1576 = pneg %p351
        $region78: #{decoder_only_forward.4} parent=71 // pred_check_branch
          %1578 = sbr.rel (%p1576) target = $region80
        $region79: #{decoder_only_forward.4} parent=71 // pred_region
          %s1580 = ssub.s32 512, 512
          %1581 = vsyncadd %s1569, %s1580
          %s1582 = smul.addr %s29, 4
          %s1583 = smul.addr %s1582, 128
          %s1584 = scalar_lea.hbm %s14, %s1583
          %s1585 = sshll.u32 %s1572, 4
          %s1586 = int_to_ptr.vmem [resolvable:$true] %s1585
          %1591 = dma.vmem_to_hbm [thread:$0]  %s1586, 512, %s1584, %s1569, 128, 128, 8
        $region80: #{decoder_only_forward.4} parent=71 // pred_fallthru
          _
      $region72: #{decoder_only_forward.4} parent=5 // pred_fallthru
        _
      %p1592 = scmp.le.s32.totalorder 2, %s24
      // Predicated region
      $region81: #{decoder_only_forward.4} parent=5 // pred_check
        %p1593 = pneg %p1592
      $region82: #{decoder_only_forward.4} parent=5 // pred_check_branch
        %1595 = sbr.rel (%p1593) target = $region84
      $region83: #{decoder_only_forward.4} parent=5 // pred_region
        %s1596 = ssub.s32 %s24, 2
        // Predicated region
        $region85: #{decoder_only_forward.4} parent=83 // pred_check
          %p1597 = pneg %p331
        $region86: #{decoder_only_forward.4} parent=83 // pred_check_branch
          %1599 = sbr.rel (%p1597) target = $region88
        $region87: #{decoder_only_forward.4} parent=83 // pred_region
          %p1600 = scmp.lt.s32.totalorder %s30, 1
          %s1601 = scalar_select %p1600, %s30, 1
          %s1602 = smul.addr %s1601, 8
          %s1603 = scalar_lea.vmem %s13, %s1602
        $region88: #{decoder_only_forward.4} parent=83 // pred_fallthru
          _
        // Predicated region
        $region89: #{decoder_only_forward.4} parent=83 // pred_check
          %p1604 = pneg %p357
        $region90: #{decoder_only_forward.4} parent=83 // pred_check_branch
          %1606 = sbr.rel (%p1604) target = $region92
        $region91: #{decoder_only_forward.4} parent=83 // pred_region
          %s1607 = sand.u32 %s342, 1
          %s1608 = scalar_lea.sflag [#allocation3], %s1607
          %s1609 = sand.u32 %s342, 1
          %s1610 = smul.addr %s1609, 32
          %s1611 = scalar_lea.vmem [#allocation2], %s1610
          %1612 = dma.done %s1608, 512
        $region92: #{decoder_only_forward.4} parent=83 // pred_fallthru
          _
      $region84: #{decoder_only_forward.4} parent=5 // pred_fallthru
        _
    $region6: #{decoder_only_forward.4} parent=1 // loop_footer
      %s28 = sadd.s32 1, %s24
    $region7: #{decoder_only_forward.4} parent=1 // loop_footer_branch
      %23 = sbr.rel target = $region3
    $region8: #{decoder_only_forward.4} parent=1 // loop_exit
      _
    %1613 = vsyncpa [#allocation3], 1
    %s1614 = scalar_lea.sflag [#allocation3], 1
    %1615 = vsyncpa %s1614, 1

</llo_original>
